<compile_context>
chip_gen: v5e
topology: v5e:2x2
jax: 0.10.0
libtpu: 0.0.40
codegen_flags: <defaults>
</compile_context>

<pallas_src>
import functools

import jax
import jax.numpy as jnp
from jax.experimental import pallas as pl
from jax.experimental.pallas import tpu as pltpu

BN_EPS = 1e-5


def _round_up(x, m):
    return (x + m - 1) // m * m


def _conv3x3_bn_relu(xp, pad_ref, w_ref, g_ref, be_ref):
    """3x3 'SAME' conv (bias-free; cancelled by train-mode BN) as one im2col
    bf16 MXU matmul + one-pass batch-norm + ReLU.

    xp      : (N, Hh, Wh, C) bf16 value
    pad_ref : (N, Hh+2, Wh+2, C) bf16 VMEM scratch, halo already zeroed
    w_ref   : (9*C, Cout) bf16 flattened HWIO weights, rows ordered (dy, dx, c)
    g_ref, be_ref : (1, Cout) f32 BN gamma / beta
    returns : (M, Cout) f32, M = N*Hh*Wh
    """
    N, Hh, Wh, C = xp.shape
    M = N * Hh * Wh

    # Interior write only; the halo was zeroed once by the caller and is never
    # touched again, so it remains valid for both convolutions.
    pad_ref[:, 1:Hh + 1, 1:Wh + 1, :] = xp

    # im2col: 9 shifted windows concatenated on the lane dim (tap boundaries
    # are multiples of 8 lanes thanks to the channel padding) -> one MXU
    # matmul with K = 9*C instead of 9 small matmuls.
    # TODO(synk): at realistic channel counts, replace the full (M, 9C) slab
    # with K=128/256 tap-group matmuls (v5e/v6e) or 9 per-tap matmuls into the
    # MRB accumulator (v7x) to keep the working set inside VMEM.
    taps = []
    for dy in range(3):
        for dx in range(3):
            taps.append(pad_ref[:, dy:dy + Hh, dx:dx + Wh, :].reshape(M, C))
    col = jnp.concatenate(taps, axis=-1)                       # (M, 9*C) bf16

    # bf16 operands, f32 accumulation (native MXU dtype on every generation).
    y = jnp.dot(col, w_ref[...], preferred_element_type=jnp.float32)

    # Train-mode BatchNorm2d (biased variance, eps=1e-5).  yc is computed once
    # and reused for the variance and the normalize step.
    inv_m = 1.0 / M
    mean = jnp.sum(y, axis=0, keepdims=True) * inv_m
    yc = y - mean
    var = jnp.sum(yc * yc, axis=0, keepdims=True) * inv_m
    y = yc * (jax.lax.rsqrt(var + BN_EPS) * g_ref[...]) + be_ref[...]
    return jnp.maximum(y, 0.0)                                 # (M, Cout) f32


def down_kernel(x_ref, w1_ref, g1_ref, be1_ref, w2_ref, g2_ref, be2_ref,
                o_ref, pad, *, transpose_out):
    N = pad.shape[0]
    Hh = pad.shape[1] - 2
    Wh = pad.shape[2] - 2
    C = pad.shape[3]

    # Zero the halo of the SHARED padded scratch exactly once (4 thin strips).
    # Both convs reuse this one bf16 buffer; only the interior is rewritten.
    pad[:, 0:1, :, :] = jnp.zeros((N, 1, Wh + 2, C), pad.dtype)
    pad[:, Hh + 1:Hh + 2, :, :] = jnp.zeros((N, 1, Wh + 2, C), pad.dtype)
    pad[:, 1:Hh + 1, 0:1, :] = jnp.zeros((N, Hh, 1, C), pad.dtype)
    pad[:, 1:Hh + 1, Wh + 1:Wh + 2, :] = jnp.zeros((N, Hh, 1, C), pad.dtype)

    # --- 2x2 / stride-2 max pool (VPU).  The wrapper passed x pre-reshaped to
    #     (N*Hh, 2, Wh, 2*C) so the four pool taps are contiguous slices of
    #     the loaded block — no HBM-side tap stack, no strided reads.
    xv = x_ref[...]
    x00 = xv[:, 0, :, 0:C]
    x01 = xv[:, 0, :, C:2 * C]
    x10 = xv[:, 1, :, 0:C]
    x11 = xv[:, 1, :, C:2 * C]
    xp = jnp.maximum(jnp.maximum(x00, x01), jnp.maximum(x10, x11))
    xp = xp.reshape(N, Hh, Wh, C)                              # (N,Hh,Wh,C) bf16

    # --- conv1 + BN + ReLU, then conv2 + BN + ReLU (same scratch) ---
    h1 = _conv3x3_bn_relu(xp, pad, w1_ref, g1_ref, be1_ref)
    h2 = _conv3x3_bn_relu(h1.reshape(N, Hh, Wh, C).astype(pad.dtype), pad,
                          w2_ref, g2_ref, be2_ref)

    if transpose_out:
        # Cout < 128: lane-dense (Cout, M) store (spatial on the lane dim).
        o_ref[...] = jnp.transpose(h2)
    else:
        # Cout is a multiple of 128: (M, Cout) is already an unmasked store.
        o_ref[...] = h2


def down_forward(x_nchw, params):
    """Forward pass of `Down`.  Input/output are NCHW; kernel is channels-last."""
    w1, b1, g1, be1, w2, b2, g2, be2 = params
    del b1, b2  # conv bias cancels exactly against train-mode BN mean subtraction
    N, Cin, H, W = x_nchw.shape
    assert H % 2 == 0 and W % 2 == 0, "MaxPool2d(2) path assumes even H and W"
    Hh, Wh = H // 2, W // 2
    Cout = w1.shape[-1]
    M = N * Hh * Wh

    # One lane-friendly padded channel width shared by both convs, so a single
    # padded VMEM scratch serves conv1 and conv2.
    Cp = _round_up(max(Cin, Cout), 8)

    # NCHW -> NHWC, zero-pad channels, expose the 2x2 pool taps as contiguous
    # slices, cast to bf16 (halves input DMA bytes; native MXU dtype).
    # TODO(synk): the NCHW<->NHWC transposes around the kernel are extra HBM
    # passes; an NHWC end-to-end interface (or a channels-major
    # (Cout,9C)@(9C,M) formulation) would remove them.
    x = jnp.transpose(x_nchw, (0, 2, 3, 1))
    x = jnp.pad(x, ((0, 0), (0, 0), (0, 0), (0, Cp - Cin)))
    x = x.reshape(N * Hh, 2, Wh, 2 * Cp).astype(jnp.bfloat16)

    # Conv weights: zero-pad channels, flatten HWIO -> (9*Cp, Cp), cast bf16.
    def pad_w(w, ci, co):
        w = jnp.pad(w, ((0, 0), (0, 0), (0, Cp - ci), (0, Cp - co)))
        return w.reshape(9 * Cp, Cp).astype(jnp.bfloat16)

    def pad_vec(v):
        return jnp.pad(v, (0, Cp - Cout)).reshape(1, Cp).astype(jnp.float32)

    w1f = pad_w(w1, Cin, Cout)
    w2f = pad_w(w2, Cout, Cout)

    transpose_out = Cp < 128
    out_shape = (Cp, M) if transpose_out else (M, Cp)

    vmem = pl.BlockSpec(memory_space=pltpu.MemorySpace.VMEM)
    kernel = functools.partial(down_kernel, transpose_out=transpose_out)

    # TODO(synk): at realistic shapes (e.g. H=W>=256, C>=64) this needs an
    # M-tiled grid (BlockSpec auto-pipelining) with per-tile sum/sumsq BN
    # accumulators + a finalize sweep, "parallel" dimension_semantics for the
    # tile axis (megacore / v7x two-TC), tap-group matmuls instead of the full
    # im2col slab, and generation-specific tile / vmem_limit sizing (v7x has
    # only 64 MiB VMEM).  At this toy size one resident block is correct and
    # fastest.
    out = pl.pallas_call(
        kernel,
        out_shape=jax.ShapeDtypeStruct(out_shape, jnp.float32),
        in_specs=[vmem] * 7,
        out_specs=vmem,
        scratch_shapes=[
            pltpu.VMEM((N, Hh + 2, Wh + 2, Cp), jnp.bfloat16),  # shared pad buf
        ],
        compiler_params=pltpu.CompilerParams(
            vmem_limit_bytes=32 * 1024 * 1024),
    )(x, w1f, pad_vec(g1), pad_vec(be1), w2f, pad_vec(g2), pad_vec(be2))

    if transpose_out:
        out = out.reshape(Cp, N, Hh, Wh)[:Cout]
        return jnp.transpose(out, (1, 0, 2, 3))                # (N, Cout, Hh, Wh)
    out = out.reshape(N, Hh, Wh, Cp)[..., :Cout]
    return jnp.transpose(out, (0, 3, 1, 2))


def down_reference(x_nchw, params):
    """Pure-JAX f32 reference mirroring the PyTorch module (train-mode BN)."""
    w1, b1, g1, be1, w2, b2, g2, be2 = params
    x = jnp.transpose(x_nchw, (0, 2, 3, 1))
    xp = jax.lax.reduce_window(x, -jnp.inf, jax.lax.max,
                               (1, 2, 2, 1), (1, 2, 2, 1), 'VALID')

    def block(h, w, b, g, be):
        y = jax.lax.conv_general_dilated(
            h, w, (1, 1), 'SAME',
            dimension_numbers=('NHWC', 'HWIO', 'NHWC')) + b
        mean = jnp.mean(y, axis=(0, 1, 2), keepdims=True)
        var = jnp.mean((y - mean) ** 2, axis=(0, 1, 2), keepdims=True)
        y = (y - mean) * jax.lax.rsqrt(var + BN_EPS) * g + be
        return jnp.maximum(y, 0.0)

    h = block(xp, w1, b1, g1, be1)
    h = block(h, w2, b2, g2, be2)
    return jnp.transpose(h, (0, 3, 1, 2))


if __name__ == "__main__":
    N, Cin, H, W = 2, 4, 16, 16
    Cout = 8

    key = jax.random.PRNGKey(0)
    ks = jax.random.split(key, 9)
    # Conv weights stored directly in HWIO (== torch OIHW transposed (2,3,1,0)).
    w1 = jax.random.normal(ks[0], (3, 3, Cin, Cout), jnp.float32) * (2.0 / (Cin * 9)) ** 0.5
    b1 = 0.05 * jax.random.normal(ks[1], (Cout,), jnp.float32)
    g1 = 1.0 + 0.1 * jax.random.normal(ks[2], (Cout,), jnp.float32)
    be1 = 0.1 * jax.random.normal(ks[3], (Cout,), jnp.float32)
    w2 = jax.random.normal(ks[4], (3, 3, Cout, Cout), jnp.float32) * (2.0 / (Cout * 9)) ** 0.5
    b2 = 0.05 * jax.random.normal(ks[5], (Cout,), jnp.float32)
    g2 = 1.0 + 0.1 * jax.random.normal(ks[6], (Cout,), jnp.float32)
    be2 = 0.1 * jax.random.normal(ks[7], (Cout,), jnp.float32)
    params = (w1, b1, g1, be1, w2, b2, g2, be2)

    x = jax.random.normal(ks[8], (N, Cin, H, W), jnp.float32)

    out = jax.block_until_ready(down_forward(x, params))
    ref = jax.block_until_ready(down_reference(x, params))

    assert out.shape == (N, Cout, H // 2, W // 2), out.shape
    # bf16 MXU operands vs f32 reference -> loosened tolerance (review item).
    err = float(jnp.max(jnp.abs(out - ref)))
    assert jnp.allclose(out, ref, rtol=5e-2, atol=5e-2), err

    print("KERNEL_OK")
</pallas_src>

<mosaic_0001>
module attributes {stable_mosaic.version = 11 : i64} {
  func.func @down_kernel(%arg0: memref<16x2x8x16xbf16, #tpu.memory_space<vmem>>, %arg1: memref<72x8xbf16, #tpu.memory_space<vmem>>, %arg2: memref<1x8xf32, #tpu.memory_space<vmem>>, %arg3: memref<1x8xf32, #tpu.memory_space<vmem>>, %arg4: memref<72x8xbf16, #tpu.memory_space<vmem>>, %arg5: memref<1x8xf32, #tpu.memory_space<vmem>>, %arg6: memref<1x8xf32, #tpu.memory_space<vmem>>, %arg7: memref<8x128xf32, #tpu.memory_space<vmem>>, %arg8: memref<2x10x10x8xbf16, #tpu.memory_space<vmem>>) attributes {dimension_semantics = [], scalar_prefetch = 0 : i64, scratch_operands = 1 : i64, tpu.core_type = #tpu.core_type<tc>} {
    %cst = arith.constant 0.000000e+00 : bf16
    %0 = vector.broadcast %cst : bf16 to vector<2x1x10x8xbf16>
    %c0 = arith.constant 0 : index
    %c0_0 = arith.constant 0 : index
    %c0_1 = arith.constant 0 : index
    %c0_2 = arith.constant 0 : index
    %1 = vector.load %arg8[%c0, %c0_0, %c0_1, %c0_2] : memref<2x10x10x8xbf16, #tpu.memory_space<vmem>>, vector<2x1x10x8xbf16>
    tpu.vector_store %arg8[%c0, %c0_0, %c0_1, %c0_2], %0 {strides = array<i32>} : memref<2x10x10x8xbf16, #tpu.memory_space<vmem>>, vector<2x1x10x8xbf16>,
    %cst_3 = arith.constant 0.000000e+00 : bf16
    %2 = vector.broadcast %cst_3 : bf16 to vector<2x1x10x8xbf16>
    %c0_4 = arith.constant 0 : index
    %c9 = arith.constant 9 : index
    %c0_5 = arith.constant 0 : index
    %c0_6 = arith.constant 0 : index
    %3 = vector.load %arg8[%c0_4, %c9, %c0_5, %c0_6] : memref<2x10x10x8xbf16, #tpu.memory_space<vmem>>, vector<2x1x10x8xbf16>
    tpu.vector_store %arg8[%c0_4, %c9, %c0_5, %c0_6], %2 {strides = array<i32>} : memref<2x10x10x8xbf16, #tpu.memory_space<vmem>>, vector<2x1x10x8xbf16>,
    %cst_7 = arith.constant 0.000000e+00 : bf16
    %4 = vector.broadcast %cst_7 : bf16 to vector<2x8x1x8xbf16>
    %c0_8 = arith.constant 0 : index
    %c1 = arith.constant 1 : index
    %c0_9 = arith.constant 0 : index
    %c0_10 = arith.constant 0 : index
    %5 = vector.load %arg8[%c0_8, %c1, %c0_9, %c0_10] : memref<2x10x10x8xbf16, #tpu.memory_space<vmem>>, vector<2x8x1x8xbf16>
    tpu.vector_store %arg8[%c0_8, %c1, %c0_9, %c0_10], %4 {strides = array<i32>} : memref<2x10x10x8xbf16, #tpu.memory_space<vmem>>, vector<2x8x1x8xbf16>,
    %cst_11 = arith.constant 0.000000e+00 : bf16
    %6 = vector.broadcast %cst_11 : bf16 to vector<2x8x1x8xbf16>
    %c0_12 = arith.constant 0 : index
    %c1_13 = arith.constant 1 : index
    %c9_14 = arith.constant 9 : index
    %c0_15 = arith.constant 0 : index
    %7 = vector.load %arg8[%c0_12, %c1_13, %c9_14, %c0_15] : memref<2x10x10x8xbf16, #tpu.memory_space<vmem>>, vector<2x8x1x8xbf16>
    tpu.vector_store %arg8[%c0_12, %c1_13, %c9_14, %c0_15], %6 {strides = array<i32>} : memref<2x10x10x8xbf16, #tpu.memory_space<vmem>>, vector<2x8x1x8xbf16>,
    %c0_16 = arith.constant 0 : index
    %c0_17 = arith.constant 0 : index
    %c0_18 = arith.constant 0 : index
    %c0_19 = arith.constant 0 : index
    %8 = vector.load %arg0[%c0_16, %c0_17, %c0_18, %c0_19] : memref<16x2x8x16xbf16, #tpu.memory_space<vmem>>, vector<16x2x8x16xbf16>
    %9 = vector.extract_strided_slice %8 {offsets = [0, 0, 0, 0], sizes = [16, 1, 8, 8], strides = [1, 1, 1, 1]} : vector<16x2x8x16xbf16> to vector<16x1x8x8xbf16>
    %10 = vector.shape_cast %9 : vector<16x1x8x8xbf16> to vector<16x8x8xbf16>
    %11 = vector.extract_strided_slice %8 {offsets = [0, 0, 0, 8], sizes = [16, 1, 8, 8], strides = [1, 1, 1, 1]} : vector<16x2x8x16xbf16> to vector<16x1x8x8xbf16>
    %12 = vector.shape_cast %11 : vector<16x1x8x8xbf16> to vector<16x8x8xbf16>
    %13 = vector.extract_strided_slice %8 {offsets = [0, 1, 0, 0], sizes = [16, 1, 8, 8], strides = [1, 1, 1, 1]} : vector<16x2x8x16xbf16> to vector<16x1x8x8xbf16>
    %14 = vector.shape_cast %13 : vector<16x1x8x8xbf16> to vector<16x8x8xbf16>
    %15 = vector.extract_strided_slice %8 {offsets = [0, 1, 0, 8], sizes = [16, 1, 8, 8], strides = [1, 1, 1, 1]} : vector<16x2x8x16xbf16> to vector<16x1x8x8xbf16>
    %16 = vector.shape_cast %15 : vector<16x1x8x8xbf16> to vector<16x8x8xbf16>
    %17 = arith.maximumf %10, %12 : vector<16x8x8xbf16>
    %18 = arith.maximumf %14, %16 : vector<16x8x8xbf16>
    %19 = arith.maximumf %17, %18 : vector<16x8x8xbf16>
    %20 = vector.shape_cast %19 : vector<16x8x8xbf16> to vector<2x8x8x8xbf16>
    %c0_20 = arith.constant 0 : index
    %c1_21 = arith.constant 1 : index
    %c1_22 = arith.constant 1 : index
    %c0_23 = arith.constant 0 : index
    %21 = vector.load %arg8[%c0_20, %c1_21, %c1_22, %c0_23] : memref<2x10x10x8xbf16, #tpu.memory_space<vmem>>, vector<2x8x8x8xbf16>
    tpu.vector_store %arg8[%c0_20, %c1_21, %c1_22, %c0_23], %20 {strides = array<i32>} : memref<2x10x10x8xbf16, #tpu.memory_space<vmem>>, vector<2x8x8x8xbf16>,
    %c0_24 = arith.constant 0 : index
    %c0_25 = arith.constant 0 : index
    %c0_26 = arith.constant 0 : index
    %c0_27 = arith.constant 0 : index
    %22 = vector.load %arg8[%c0_24, %c0_25, %c0_26, %c0_27] : memref<2x10x10x8xbf16, #tpu.memory_space<vmem>>, vector<2x8x8x8xbf16>
    %23 = vector.shape_cast %22 : vector<2x8x8x8xbf16> to vector<128x8xbf16>
    %c0_28 = arith.constant 0 : index
    %c0_29 = arith.constant 0 : index
    %c1_30 = arith.constant 1 : index
    %c0_31 = arith.constant 0 : index
    %24 = vector.load %arg8[%c0_28, %c0_29, %c1_30, %c0_31] : memref<2x10x10x8xbf16, #tpu.memory_space<vmem>>, vector<2x8x8x8xbf16>
    %25 = vector.shape_cast %24 : vector<2x8x8x8xbf16> to vector<128x8xbf16>
    %c0_32 = arith.constant 0 : index
    %c0_33 = arith.constant 0 : index
    %c2 = arith.constant 2 : index
    %c0_34 = arith.constant 0 : index
    %26 = vector.load %arg8[%c0_32, %c0_33, %c2, %c0_34] : memref<2x10x10x8xbf16, #tpu.memory_space<vmem>>, vector<2x8x8x8xbf16>
    %27 = vector.shape_cast %26 : vector<2x8x8x8xbf16> to vector<128x8xbf16>
    %c0_35 = arith.constant 0 : index
    %c1_36 = arith.constant 1 : index
    %c0_37 = arith.constant 0 : index
    %c0_38 = arith.constant 0 : index
    %28 = vector.load %arg8[%c0_35, %c1_36, %c0_37, %c0_38] : memref<2x10x10x8xbf16, #tpu.memory_space<vmem>>, vector<2x8x8x8xbf16>
    %29 = vector.shape_cast %28 : vector<2x8x8x8xbf16> to vector<128x8xbf16>
    %c0_39 = arith.constant 0 : index
    %c1_40 = arith.constant 1 : index
    %c1_41 = arith.constant 1 : index
    %c0_42 = arith.constant 0 : index
    %30 = vector.load %arg8[%c0_39, %c1_40, %c1_41, %c0_42] : memref<2x10x10x8xbf16, #tpu.memory_space<vmem>>, vector<2x8x8x8xbf16>
    %31 = vector.shape_cast %30 : vector<2x8x8x8xbf16> to vector<128x8xbf16>
    %c0_43 = arith.constant 0 : index
    %c1_44 = arith.constant 1 : index
    %c2_45 = arith.constant 2 : index
    %c0_46 = arith.constant 0 : index
    %32 = vector.load %arg8[%c0_43, %c1_44, %c2_45, %c0_46] : memref<2x10x10x8xbf16, #tpu.memory_space<vmem>>, vector<2x8x8x8xbf16>
    %33 = vector.shape_cast %32 : vector<2x8x8x8xbf16> to vector<128x8xbf16>
    %c0_47 = arith.constant 0 : index
    %c2_48 = arith.constant 2 : index
    %c0_49 = arith.constant 0 : index
    %c0_50 = arith.constant 0 : index
    %34 = vector.load %arg8[%c0_47, %c2_48, %c0_49, %c0_50] : memref<2x10x10x8xbf16, #tpu.memory_space<vmem>>, vector<2x8x8x8xbf16>
    %35 = vector.shape_cast %34 : vector<2x8x8x8xbf16> to vector<128x8xbf16>
    %c0_51 = arith.constant 0 : index
    %c2_52 = arith.constant 2 : index
    %c1_53 = arith.constant 1 : index
    %c0_54 = arith.constant 0 : index
    %36 = vector.load %arg8[%c0_51, %c2_52, %c1_53, %c0_54] : memref<2x10x10x8xbf16, #tpu.memory_space<vmem>>, vector<2x8x8x8xbf16>
    %37 = vector.shape_cast %36 : vector<2x8x8x8xbf16> to vector<128x8xbf16>
    %c0_55 = arith.constant 0 : index
    %c2_56 = arith.constant 2 : index
    %c2_57 = arith.constant 2 : index
    %c0_58 = arith.constant 0 : index
    %38 = vector.load %arg8[%c0_55, %c2_56, %c2_57, %c0_58] : memref<2x10x10x8xbf16, #tpu.memory_space<vmem>>, vector<2x8x8x8xbf16>
    %39 = vector.shape_cast %38 : vector<2x8x8x8xbf16> to vector<128x8xbf16>
    %40 = tpu.concatenate %23, %25, %27, %29, %31, %33, %35, %37, %39 in 1 : vector<128x8xbf16>, vector<128x8xbf16>, vector<128x8xbf16>, vector<128x8xbf16>, vector<128x8xbf16>, vector<128x8xbf16>, vector<128x8xbf16>, vector<128x8xbf16>, vector<128x8xbf16> -> vector<128x72xbf16>
    %c0_59 = arith.constant 0 : index
    %c0_60 = arith.constant 0 : index
    %41 = vector.load %arg1[%c0_59, %c0_60] : memref<72x8xbf16, #tpu.memory_space<vmem>>, vector<72x8xbf16>
    %cst_61 = arith.constant dense<0.000000e+00> : vector<128x8xf32>
    %42 = tpu.matmul %40, %41, %cst_61 {dimension_numbers = #tpu.dot_dimension_numbers<[1], [0], [0], [1], [0, 0, 1, 1], [], []>} : vector<128x72xbf16>, vector<72x8xbf16>, vector<128x8xf32> -> vector<128x8xf32>
    %cst_62 = arith.constant dense<0.000000e+00> : vector<8xf32>
    %43 = vector.multi_reduction <add>, %42, %cst_62 [0] : vector<128x8xf32> to vector<8xf32>
    %44 = vector.shape_cast %43 : vector<8xf32> to vector<1x8xf32>
    %cst_63 = arith.constant 7.812500e-03 : f32
    %45 = vector.broadcast %cst_63 : f32 to vector<1x8xf32>
    %46 = arith.mulf %44, %45 : vector<1x8xf32>
    %47 = vector.broadcast %46 : vector<1x8xf32> to vector<128x8xf32>
    %48 = arith.subf %42, %47 : vector<128x8xf32>
    %49 = arith.mulf %48, %48 : vector<128x8xf32>
    %cst_64 = arith.constant dense<0.000000e+00> : vector<8xf32>
    %50 = vector.multi_reduction <add>, %49, %cst_64 [0] : vector<128x8xf32> to vector<8xf32>
    %51 = vector.shape_cast %50 : vector<8xf32> to vector<1x8xf32>
    %cst_65 = arith.constant 7.812500e-03 : f32
    %52 = vector.broadcast %cst_65 : f32 to vector<1x8xf32>
    %53 = arith.mulf %51, %52 : vector<1x8xf32>
    %cst_66 = arith.constant 9.99999974E-6 : f32
    %54 = vector.broadcast %cst_66 : f32 to vector<1x8xf32>
    %55 = arith.addf %53, %54 : vector<1x8xf32>
    %56 = math.rsqrt %55 : vector<1x8xf32>
    %c0_67 = arith.constant 0 : index
    %c0_68 = arith.constant 0 : index
    %57 = vector.load %arg2[%c0_67, %c0_68] : memref<1x8xf32, #tpu.memory_space<vmem>>, vector<1x8xf32>
    %58 = arith.mulf %56, %57 : vector<1x8xf32>
    %59 = vector.broadcast %58 : vector<1x8xf32> to vector<128x8xf32>
    %60 = arith.mulf %48, %59 : vector<128x8xf32>
    %c0_69 = arith.constant 0 : index
    %c0_70 = arith.constant 0 : index
    %61 = vector.load %arg3[%c0_69, %c0_70] : memref<1x8xf32, #tpu.memory_space<vmem>>, vector<1x8xf32>
    %62 = vector.broadcast %61 : vector<1x8xf32> to vector<128x8xf32>
    %63 = arith.addf %60, %62 : vector<128x8xf32>
    %cst_71 = arith.constant 0.000000e+00 : f32
    %64 = vector.broadcast %cst_71 : f32 to vector<128x8xf32>
    %65 = arith.maximumf %63, %64 : vector<128x8xf32>
    %66 = vector.shape_cast %65 : vector<128x8xf32> to vector<2x8x8x8xf32>
    %67 = arith.truncf %66 : vector<2x8x8x8xf32> to vector<2x8x8x8xbf16>
    %c0_72 = arith.constant 0 : index
    %c1_73 = arith.constant 1 : index
    %c1_74 = arith.constant 1 : index
    %c0_75 = arith.constant 0 : index
    %68 = vector.load %arg8[%c0_72, %c1_73, %c1_74, %c0_75] : memref<2x10x10x8xbf16, #tpu.memory_space<vmem>>, vector<2x8x8x8xbf16>
    tpu.vector_store %arg8[%c0_72, %c1_73, %c1_74, %c0_75], %67 {strides = array<i32>} : memref<2x10x10x8xbf16, #tpu.memory_space<vmem>>, vector<2x8x8x8xbf16>,
    %c0_76 = arith.constant 0 : index
    %c0_77 = arith.constant 0 : index
    %c0_78 = arith.constant 0 : index
    %c0_79 = arith.constant 0 : index
    %69 = vector.load %arg8[%c0_76, %c0_77, %c0_78, %c0_79] : memref<2x10x10x8xbf16, #tpu.memory_space<vmem>>, vector<2x8x8x8xbf16>
    %70 = vector.shape_cast %69 : vector<2x8x8x8xbf16> to vector<128x8xbf16>
    %c0_80 = arith.constant 0 : index
    %c0_81 = arith.constant 0 : index
    %c1_82 = arith.constant 1 : index
    %c0_83 = arith.constant 0 : index
    %71 = vector.load %arg8[%c0_80, %c0_81, %c1_82, %c0_83] : memref<2x10x10x8xbf16, #tpu.memory_space<vmem>>, vector<2x8x8x8xbf16>
    %72 = vector.shape_cast %71 : vector<2x8x8x8xbf16> to vector<128x8xbf16>
    %c0_84 = arith.constant 0 : index
    %c0_85 = arith.constant 0 : index
    %c2_86 = arith.constant 2 : index
    %c0_87 = arith.constant 0 : index
    %73 = vector.load %arg8[%c0_84, %c0_85, %c2_86, %c0_87] : memref<2x10x10x8xbf16, #tpu.memory_space<vmem>>, vector<2x8x8x8xbf16>
    %74 = vector.shape_cast %73 : vector<2x8x8x8xbf16> to vector<128x8xbf16>
    %c0_88 = arith.constant 0 : index
    %c1_89 = arith.constant 1 : index
    %c0_90 = arith.constant 0 : index
    %c0_91 = arith.constant 0 : index
    %75 = vector.load %arg8[%c0_88, %c1_89, %c0_90, %c0_91] : memref<2x10x10x8xbf16, #tpu.memory_space<vmem>>, vector<2x8x8x8xbf16>
    %76 = vector.shape_cast %75 : vector<2x8x8x8xbf16> to vector<128x8xbf16>
    %c0_92 = arith.constant 0 : index
    %c1_93 = arith.constant 1 : index
    %c1_94 = arith.constant 1 : index
    %c0_95 = arith.constant 0 : index
    %77 = vector.load %arg8[%c0_92, %c1_93, %c1_94, %c0_95] : memref<2x10x10x8xbf16, #tpu.memory_space<vmem>>, vector<2x8x8x8xbf16>
    %78 = vector.shape_cast %77 : vector<2x8x8x8xbf16> to vector<128x8xbf16>
    %c0_96 = arith.constant 0 : index
    %c1_97 = arith.constant 1 : index
    %c2_98 = arith.constant 2 : index
    %c0_99 = arith.constant 0 : index
    %79 = vector.load %arg8[%c0_96, %c1_97, %c2_98, %c0_99] : memref<2x10x10x8xbf16, #tpu.memory_space<vmem>>, vector<2x8x8x8xbf16>
    %80 = vector.shape_cast %79 : vector<2x8x8x8xbf16> to vector<128x8xbf16>
    %c0_100 = arith.constant 0 : index
    %c2_101 = arith.constant 2 : index
    %c0_102 = arith.constant 0 : index
    %c0_103 = arith.constant 0 : index
    %81 = vector.load %arg8[%c0_100, %c2_101, %c0_102, %c0_103] : memref<2x10x10x8xbf16, #tpu.memory_space<vmem>>, vector<2x8x8x8xbf16>
    %82 = vector.shape_cast %81 : vector<2x8x8x8xbf16> to vector<128x8xbf16>
    %c0_104 = arith.constant 0 : index
    %c2_105 = arith.constant 2 : index
    %c1_106 = arith.constant 1 : index
    %c0_107 = arith.constant 0 : index
    %83 = vector.load %arg8[%c0_104, %c2_105, %c1_106, %c0_107] : memref<2x10x10x8xbf16, #tpu.memory_space<vmem>>, vector<2x8x8x8xbf16>
    %84 = vector.shape_cast %83 : vector<2x8x8x8xbf16> to vector<128x8xbf16>
    %c0_108 = arith.constant 0 : index
    %c2_109 = arith.constant 2 : index
    %c2_110 = arith.constant 2 : index
    %c0_111 = arith.constant 0 : index
    %85 = vector.load %arg8[%c0_108, %c2_109, %c2_110, %c0_111] : memref<2x10x10x8xbf16, #tpu.memory_space<vmem>>, vector<2x8x8x8xbf16>
    %86 = vector.shape_cast %85 : vector<2x8x8x8xbf16> to vector<128x8xbf16>
    %87 = tpu.concatenate %70, %72, %74, %76, %78, %80, %82, %84, %86 in 1 : vector<128x8xbf16>, vector<128x8xbf16>, vector<128x8xbf16>, vector<128x8xbf16>, vector<128x8xbf16>, vector<128x8xbf16>, vector<128x8xbf16>, vector<128x8xbf16>, vector<128x8xbf16> -> vector<128x72xbf16>
    %c0_112 = arith.constant 0 : index
    %c0_113 = arith.constant 0 : index
    %88 = vector.load %arg4[%c0_112, %c0_113] : memref<72x8xbf16, #tpu.memory_space<vmem>>, vector<72x8xbf16>
    %cst_114 = arith.constant dense<0.000000e+00> : vector<128x8xf32>
    %89 = tpu.matmul %87, %88, %cst_114 {dimension_numbers = #tpu.dot_dimension_numbers<[1], [0], [0], [1], [0, 0, 1, 1], [], []>} : vector<128x72xbf16>, vector<72x8xbf16>, vector<128x8xf32> -> vector<128x8xf32>
    %cst_115 = arith.constant dense<0.000000e+00> : vector<8xf32>
    %90 = vector.multi_reduction <add>, %89, %cst_115 [0] : vector<128x8xf32> to vector<8xf32>
    %91 = vector.shape_cast %90 : vector<8xf32> to vector<1x8xf32>
    %cst_116 = arith.constant 7.812500e-03 : f32
    %92 = vector.broadcast %cst_116 : f32 to vector<1x8xf32>
    %93 = arith.mulf %91, %92 : vector<1x8xf32>
    %94 = vector.broadcast %93 : vector<1x8xf32> to vector<128x8xf32>
    %95 = arith.subf %89, %94 : vector<128x8xf32>
    %96 = arith.mulf %95, %95 : vector<128x8xf32>
    %cst_117 = arith.constant dense<0.000000e+00> : vector<8xf32>
    %97 = vector.multi_reduction <add>, %96, %cst_117 [0] : vector<128x8xf32> to vector<8xf32>
    %98 = vector.shape_cast %97 : vector<8xf32> to vector<1x8xf32>
    %cst_118 = arith.constant 7.812500e-03 : f32
    %99 = vector.broadcast %cst_118 : f32 to vector<1x8xf32>
    %100 = arith.mulf %98, %99 : vector<1x8xf32>
    %cst_119 = arith.constant 9.99999974E-6 : f32
    %101 = vector.broadcast %cst_119 : f32 to vector<1x8xf32>
    %102 = arith.addf %100, %101 : vector<1x8xf32>
    %103 = math.rsqrt %102 : vector<1x8xf32>
    %c0_120 = arith.constant 0 : index
    %c0_121 = arith.constant 0 : index
    %104 = vector.load %arg5[%c0_120, %c0_121] : memref<1x8xf32, #tpu.memory_space<vmem>>, vector<1x8xf32>
    %105 = arith.mulf %103, %104 : vector<1x8xf32>
    %106 = vector.broadcast %105 : vector<1x8xf32> to vector<128x8xf32>
    %107 = arith.mulf %95, %106 : vector<128x8xf32>
    %c0_122 = arith.constant 0 : index
    %c0_123 = arith.constant 0 : index
    %108 = vector.load %arg6[%c0_122, %c0_123] : memref<1x8xf32, #tpu.memory_space<vmem>>, vector<1x8xf32>
    %109 = vector.broadcast %108 : vector<1x8xf32> to vector<128x8xf32>
    %110 = arith.addf %107, %109 : vector<128x8xf32>
    %cst_124 = arith.constant 0.000000e+00 : f32
    %111 = vector.broadcast %cst_124 : f32 to vector<128x8xf32>
    %112 = arith.maximumf %110, %111 : vector<128x8xf32>
    %113 = tpu.transpose %112, [1, 0] : vector<128x8xf32> -> vector<8x128xf32>
    %c0_125 = arith.constant 0 : index
    %c0_126 = arith.constant 0 : index
    %114 = vector.load %arg7[%c0_125, %c0_126] : memref<8x128xf32, #tpu.memory_space<vmem>>, vector<8x128xf32>
    tpu.vector_store %arg7[%c0_125, %c0_126], %113 {strides = array<i32>} : memref<8x128xf32, #tpu.memory_space<vmem>>, vector<8x128xf32>,
    return
  }
}

</mosaic_0001>

<llo_original>
// kernel: tpu_custom_call.1
$region0: #{tpu_custom_call.1}
  #allocation0 [shape = 'u32[]', space=smem, size = 0x4, offset = 0x4, fixed_abs, tag = 'smem constant byte address 0x4 - core index']
  #allocation1 [shape = 'u32[72,128]{1,0:T(1,128)}', space=vmem, size = 0x9000, scoped, tag = 'internal scratch']
  #allocation2 [shape = 'bf16[2,10,10,8]{3,2,1,0:T(8,128)(2,1)}', space=vmem, size = 0x14000, scoped, tag = 'scratch operand']
  %s0 = inlined_call_operand.hbm [shape: bf16[16,2,8,16], index: 0, kind: input, shape index: {}]
  %s1 = inlined_call_operand.vmem [shape: bf16[72,8], index: 1, kind: input, shape index: {}]
  %s2 = inlined_call_operand.vmem [shape: f32[1,8], index: 2, kind: input, shape index: {}]
  %s3 = inlined_call_operand.vmem [shape: f32[1,8], index: 3, kind: input, shape index: {}]
  %s4 = inlined_call_operand.vmem [shape: bf16[72,8], index: 4, kind: input, shape index: {}]
  %s5 = inlined_call_operand.vmem [shape: f32[1,8], index: 5, kind: input, shape index: {}]
  %s6 = inlined_call_operand.vmem [shape: f32[1,8], index: 6, kind: input, shape index: {}]
  %s7 = inlined_call_operand.hbm [shape: f32[8,128], index: 7, kind: output, shape index: {}]
  %s8 = sld [smem:[#allocation0]]
  $region42: #{tpu_custom_call.1} parent=0
    _
  %s10 = ssub.s32 1, %s8
  %s11 = scalar_select 0, %s10, %s8
  $region1: #{tpu_custom_call.1} parent=0
    #allocation3 [shape = 'u8[65536]{0}', space=vmem, size = 0x10000, scoped, tag = 'input window, operand 0, single buffered']
    #allocation4 [shape = 's32[1]{0}', space=sflag, size = 0x4, scoped, tag = 'scoped memory for tpu_custom_call.1']
    #allocation5 [shape = 's32[1]{0}', space=sflag, size = 0x4, scoped, tag = 'scoped memory for tpu_custom_call.1']
    #allocation6 [shape = 'u8[4096]{0}', space=vmem, size = 0x1000, scoped, tag = 'output window, operand 0, single buffered']
    %12 = vsyncpa [#allocation4], 0
    %13 = vsyncpa [#allocation5], 0
    // Predicated region
    $region2: #{tpu_custom_call.1} parent=1 // pred_check
      _
    $region3: #{tpu_custom_call.1} parent=1 // pred_check_branch
      %15 = sbr.rel (0) target = $region5
    $region4: #{tpu_custom_call.1} parent=1 // pred_region
      %17 = vsyncadd [#allocation4], 0
      %s18 = sshll.u32 %s0, 4
      %s19 = int_to_ptr.hbm [resolvable:$true] %s18
      %s20 = sshll.u32 [#allocation3], 4
      %s21 = int_to_ptr.vmem [resolvable:$true] %s20
      %26 = dma.hbm_to_vmem [thread:$0]  %s19, 2048, %s21, [#allocation4], 64, 64, 4
    $region5: #{tpu_custom_call.1} parent=1 // pred_fallthru
      _
    // Predicated region
    $region6: #{tpu_custom_call.1} parent=1 // pred_check
      _
    $region7: #{tpu_custom_call.1} parent=1 // pred_check_branch
      %28 = sbr.rel (0) target = $region9
    $region8: #{tpu_custom_call.1} parent=1 // pred_region
      _
    $region9: #{tpu_custom_call.1} parent=1 // pred_fallthru
      _
    // Predicated region
    $region10: #{tpu_custom_call.1} parent=1 // pred_check
      _
    $region11: #{tpu_custom_call.1} parent=1 // pred_check_branch
      %30 = sbr.rel (0) target = $region13
    $region12: #{tpu_custom_call.1} parent=1 // pred_region
      _
    $region13: #{tpu_custom_call.1} parent=1 // pred_fallthru
      _
    // Predicated region
    $region14: #{tpu_custom_call.1} parent=1 // pred_check
      _
    $region15: #{tpu_custom_call.1} parent=1 // pred_check_branch
      %32 = sbr.rel (0) target = $region17
    $region16: #{tpu_custom_call.1} parent=1 // pred_region
      _
    $region17: #{tpu_custom_call.1} parent=1 // pred_fallthru
      _
    // Predicated region
    $region18: #{tpu_custom_call.1} parent=1 // pred_check
      _
    $region19: #{tpu_custom_call.1} parent=1 // pred_check_branch
      %34 = sbr.rel (0) target = $region21
    $region20: #{tpu_custom_call.1} parent=1 // pred_region
      _
    $region21: #{tpu_custom_call.1} parent=1 // pred_fallthru
      _
    // Predicated region
    $region22: #{tpu_custom_call.1} parent=1 // pred_check
      _
    $region23: #{tpu_custom_call.1} parent=1 // pred_check_branch
      %36 = sbr.rel (0) target = $region25
    $region24: #{tpu_custom_call.1} parent=1 // pred_region
      _
    $region25: #{tpu_custom_call.1} parent=1 // pred_fallthru
      _
    // Predicated region
    $region26: #{tpu_custom_call.1} parent=1 // pred_check
      _
    $region27: #{tpu_custom_call.1} parent=1 // pred_check_branch
      %38 = sbr.rel (0) target = $region29
    $region28: #{tpu_custom_call.1} parent=1 // pred_region
      _
    $region29: #{tpu_custom_call.1} parent=1 // pred_fallthru
      _
    // Predicated region
    $region30: #{tpu_custom_call.1} parent=1 // pred_check
      _
    $region31: #{tpu_custom_call.1} parent=1 // pred_check_branch
      %40 = sbr.rel (0) target = $region33
    $region32: #{tpu_custom_call.1} parent=1 // pred_region
      %42 = dma.done [#allocation4], 2048
    $region33: #{tpu_custom_call.1} parent=1 // pred_fallthru
      _
    %vm44 = vcmask 60416
    %45 = vst.msk [vmem:[#allocation2] sm:$0xf] %vm44, 0
    %vm46 = vcmask 57344
    %47 = vst.msk [vmem:[#allocation2 + $0x4] sm:$0x1] %vm46, 0
    %48 = vst.msk [vmem:[#allocation2 + $0x50] sm:$0xf] %vm44, 0
    %49 = vst.msk [vmem:[#allocation2 + $0x54] sm:$0x1] %vm46, 0
    %s50 = scalar_lea.vmem [#allocation2], 72
    %51 = vst.msk [vmem:[%s50] sm:$0xf] %vm44, 0
    %52 = vst.msk [vmem:[%s50 + $0x4] sm:$0x1] %vm46, 0
    %53 = vst.msk [vmem:[%s50 + $0x50] sm:$0xf] %vm44, 0
    %54 = vst.msk [vmem:[%s50 + $0x54] sm:$0x1] %vm46, 0
    %s55 = scalar_lea.vmem [#allocation2], 8
    %vm56 = vcmask 57344
    %vm57 = vsmask.f32 256
    %vm58 = vmand %vm56, %vm57
    %v59 = vld [vmem:[%s55] sm:$0x1]
    %v60 = vsel %vm58, 0, %v59
    %61 = vst [vmem:[%s55] sm:$0x1] %v60
    %v62 = vld [vmem:[%s55 + $0x8] sm:$0x1]
    %v63 = vsel %vm58, 0, %v62
    %64 = vst [vmem:[%s55 + $0x8] sm:$0x1] %v63
    %v65 = vld [vmem:[%s55 + $0x10] sm:$0x1]
    %v66 = vsel %vm58, 0, %v65
    %67 = vst [vmem:[%s55 + $0x10] sm:$0x1] %v66
    %v68 = vld [vmem:[%s55 + $0x18] sm:$0x1]
    %v69 = vsel %vm58, 0, %v68
    %70 = vst [vmem:[%s55 + $0x18] sm:$0x1] %v69
    %v71 = vld [vmem:[%s55 + $0x20] sm:$0x1]
    %v72 = vsel %vm58, 0, %v71
    %73 = vst [vmem:[%s55 + $0x20] sm:$0x1] %v72
    %v74 = vld [vmem:[%s55 + $0x28] sm:$0x1]
    %v75 = vsel %vm58, 0, %v74
    %76 = vst [vmem:[%s55 + $0x28] sm:$0x1] %v75
    %v77 = vld [vmem:[%s55 + $0x30] sm:$0x1]
    %v78 = vsel %vm58, 0, %v77
    %79 = vst [vmem:[%s55 + $0x30] sm:$0x1] %v78
    %v80 = vld [vmem:[%s55 + $0x38] sm:$0x1]
    %v81 = vsel %vm58, 0, %v80
    %82 = vst [vmem:[%s55 + $0x38] sm:$0x1] %v81
    %v83 = vld [vmem:[%s55 + $0x50] sm:$0x1]
    %v84 = vsel %vm58, 0, %v83
    %85 = vst [vmem:[%s55 + $0x50] sm:$0x1] %v84
    %v86 = vld [vmem:[%s55 + $0x58] sm:$0x1]
    %v87 = vsel %vm58, 0, %v86
    %88 = vst [vmem:[%s55 + $0x58] sm:$0x1] %v87
    %v89 = vld [vmem:[%s55 + $0x60] sm:$0x1]
    %v90 = vsel %vm58, 0, %v89
    %91 = vst [vmem:[%s55 + $0x60] sm:$0x1] %v90
    %v92 = vld [vmem:[%s55 + $0x68] sm:$0x1]
    %v93 = vsel %vm58, 0, %v92
    %94 = vst [vmem:[%s55 + $0x68] sm:$0x1] %v93
    %v95 = vld [vmem:[%s55 + $0x70] sm:$0x1]
    %v96 = vsel %vm58, 0, %v95
    %97 = vst [vmem:[%s55 + $0x70] sm:$0x1] %v96
    %v98 = vld [vmem:[%s55 + $0x78] sm:$0x1]
    %v99 = vsel %vm58, 0, %v98
    %100 = vst [vmem:[%s55 + $0x78] sm:$0x1] %v99
    %v101 = vld [vmem:[%s55 + $0x80] sm:$0x1]
    %v102 = vsel %vm58, 0, %v101
    %103 = vst [vmem:[%s55 + $0x80] sm:$0x1] %v102
    %v104 = vld [vmem:[%s55 + $0x88] sm:$0x1]
    %v105 = vsel %vm58, 0, %v104
    %106 = vst [vmem:[%s55 + $0x88] sm:$0x1] %v105
    %vm107 = vsmask.f32 7938
    %vm108 = vmand %vm56, %vm107
    %v109 = vld [vmem:[%s55 + $0x4] sm:$0x1]
    %v110 = vsel %vm108, 0, %v109
    %111 = vst [vmem:[%s55 + $0x4] sm:$0x1] %v110
    %v112 = vld [vmem:[%s55 + $0xc] sm:$0x1]
    %v113 = vsel %vm108, 0, %v112
    %114 = vst [vmem:[%s55 + $0xc] sm:$0x1] %v113
    %v115 = vld [vmem:[%s55 + $0x14] sm:$0x1]
    %v116 = vsel %vm108, 0, %v115
    %117 = vst [vmem:[%s55 + $0x14] sm:$0x1] %v116
    %v118 = vld [vmem:[%s55 + $0x1c] sm:$0x1]
    %v119 = vsel %vm108, 0, %v118
    %120 = vst [vmem:[%s55 + $0x1c] sm:$0x1] %v119
    %v121 = vld [vmem:[%s55 + $0x24] sm:$0x1]
    %v122 = vsel %vm108, 0, %v121
    %123 = vst [vmem:[%s55 + $0x24] sm:$0x1] %v122
    %v124 = vld [vmem:[%s55 + $0x2c] sm:$0x1]
    %v125 = vsel %vm108, 0, %v124
    %126 = vst [vmem:[%s55 + $0x2c] sm:$0x1] %v125
    %v127 = vld [vmem:[%s55 + $0x34] sm:$0x1]
    %v128 = vsel %vm108, 0, %v127
    %129 = vst [vmem:[%s55 + $0x34] sm:$0x1] %v128
    %v130 = vld [vmem:[%s55 + $0x3c] sm:$0x1]
    %v131 = vsel %vm108, 0, %v130
    %132 = vst [vmem:[%s55 + $0x3c] sm:$0x1] %v131
    %v133 = vld [vmem:[%s55 + $0x54] sm:$0x1]
    %v134 = vsel %vm108, 0, %v133
    %135 = vst [vmem:[%s55 + $0x54] sm:$0x1] %v134
    %v136 = vld [vmem:[%s55 + $0x5c] sm:$0x1]
    %v137 = vsel %vm108, 0, %v136
    %138 = vst [vmem:[%s55 + $0x5c] sm:$0x1] %v137
    %v139 = vld [vmem:[%s55 + $0x64] sm:$0x1]
    %v140 = vsel %vm108, 0, %v139
    %141 = vst [vmem:[%s55 + $0x64] sm:$0x1] %v140
    %v142 = vld [vmem:[%s55 + $0x6c] sm:$0x1]
    %v143 = vsel %vm108, 0, %v142
    %144 = vst [vmem:[%s55 + $0x6c] sm:$0x1] %v143
    %v145 = vld [vmem:[%s55 + $0x74] sm:$0x1]
    %v146 = vsel %vm108, 0, %v145
    %147 = vst [vmem:[%s55 + $0x74] sm:$0x1] %v146
    %v148 = vld [vmem:[%s55 + $0x7c] sm:$0x1]
    %v149 = vsel %vm108, 0, %v148
    %150 = vst [vmem:[%s55 + $0x7c] sm:$0x1] %v149
    %v151 = vld [vmem:[%s55 + $0x84] sm:$0x1]
    %v152 = vsel %vm108, 0, %v151
    %153 = vst [vmem:[%s55 + $0x84] sm:$0x1] %v152
    %v154 = vld [vmem:[%s55 + $0x8c] sm:$0x1]
    %v155 = vsel %vm108, 0, %v154
    %156 = vst [vmem:[%s55 + $0x8c] sm:$0x1] %v155
    %v157 = vld [vmem:[#allocation3] sm:$0xf]
    %v158 = vld [vmem:[#allocation3 + $0x4] sm:$0xf]
    %v159 = vld [vmem:[#allocation3 + $0x8] sm:$0xf]
    %v160 = vld [vmem:[#allocation3 + $0xc] sm:$0xf]
    %v161 = vld [vmem:[#allocation3 + $0x10] sm:$0xf]
    %v162 = vld [vmem:[#allocation3 + $0x14] sm:$0xf]
    %v163 = vld [vmem:[#allocation3 + $0x18] sm:$0xf]
    %v164 = vld [vmem:[#allocation3 + $0x1c] sm:$0xf]
    %v165 = vld [vmem:[#allocation3 + $0x20] sm:$0xf]
    %v166 = vld [vmem:[#allocation3 + $0x24] sm:$0xf]
    %v167 = vld [vmem:[#allocation3 + $0x28] sm:$0xf]
    %v168 = vld [vmem:[#allocation3 + $0x2c] sm:$0xf]
    %v169 = vld [vmem:[#allocation3 + $0x30] sm:$0xf]
    %v170 = vld [vmem:[#allocation3 + $0x34] sm:$0xf]
    %v171 = vld [vmem:[#allocation3 + $0x38] sm:$0xf]
    %v172 = vld [vmem:[#allocation3 + $0x3c] sm:$0xf]
    %v173 = vld [vmem:[#allocation3 + $0x40] sm:$0xf]
    %v174 = vld [vmem:[#allocation3 + $0x44] sm:$0xf]
    %v175 = vld [vmem:[#allocation3 + $0x48] sm:$0xf]
    %v176 = vld [vmem:[#allocation3 + $0x4c] sm:$0xf]
    %v177 = vld [vmem:[#allocation3 + $0x50] sm:$0xf]
    %v178 = vld [vmem:[#allocation3 + $0x54] sm:$0xf]
    %v179 = vld [vmem:[#allocation3 + $0x58] sm:$0xf]
    %v180 = vld [vmem:[#allocation3 + $0x5c] sm:$0xf]
    %v181 = vld [vmem:[#allocation3 + $0x60] sm:$0xf]
    %v182 = vld [vmem:[#allocation3 + $0x64] sm:$0xf]
    %v183 = vld [vmem:[#allocation3 + $0x68] sm:$0xf]
    %v184 = vld [vmem:[#allocation3 + $0x6c] sm:$0xf]
    %v185 = vld [vmem:[#allocation3 + $0x70] sm:$0xf]
    %v186 = vld [vmem:[#allocation3 + $0x74] sm:$0xf]
    %v187 = vld [vmem:[#allocation3 + $0x78] sm:$0xf]
    %v188 = vld [vmem:[#allocation3 + $0x7c] sm:$0xf]
    %v189 = vunpack.c.l.bf16 %v157
    %v190 = vunpack.c.l.bf16 %v159
    %v191 = vunpack.c.l.bf16 %v161
    %v192 = vunpack.c.l.bf16 %v163
    %v193 = vunpack.c.l.bf16 %v165
    %v194 = vunpack.c.l.bf16 %v167
    %v195 = vunpack.c.l.bf16 %v169
    %v196 = vunpack.c.l.bf16 %v171
    %v197 = vunpack.c.l.bf16 %v173
    %v198 = vunpack.c.l.bf16 %v175
    %v199 = vunpack.c.l.bf16 %v177
    %v200 = vunpack.c.l.bf16 %v179
    %v201 = vunpack.c.l.bf16 %v181
    %v202 = vunpack.c.l.bf16 %v183
    %v203 = vunpack.c.l.bf16 %v185
    %v204 = vunpack.c.l.bf16 %v187
    %221 = vrot.lane.b32.xlu0 %v189, 120
    %v222 = vpop.permute.xlu0 %221
    %223 = vrot.lane.b32.xlu0 %v190, 120
    %v224 = vpop.permute.xlu0 %223
    %225 = vrot.lane.b32.xlu0 %v191, 120
    %v226 = vpop.permute.xlu0 %225
    %227 = vrot.lane.b32.xlu0 %v192, 120
    %v228 = vpop.permute.xlu0 %227
    %229 = vrot.lane.b32.xlu0 %v193, 120
    %v230 = vpop.permute.xlu0 %229
    %231 = vrot.lane.b32.xlu0 %v194, 120
    %v232 = vpop.permute.xlu0 %231
    %233 = vrot.lane.b32.xlu0 %v195, 120
    %v234 = vpop.permute.xlu0 %233
    %235 = vrot.lane.b32.xlu0 %v196, 120
    %v236 = vpop.permute.xlu0 %235
    %237 = vrot.lane.b32.xlu0 %v197, 120
    %v238 = vpop.permute.xlu0 %237
    %239 = vrot.lane.b32.xlu0 %v198, 120
    %v240 = vpop.permute.xlu0 %239
    %241 = vrot.lane.b32.xlu0 %v199, 120
    %v242 = vpop.permute.xlu0 %241
    %243 = vrot.lane.b32.xlu0 %v200, 120
    %v244 = vpop.permute.xlu0 %243
    %245 = vrot.lane.b32.xlu0 %v201, 120
    %v246 = vpop.permute.xlu0 %245
    %247 = vrot.lane.b32.xlu0 %v202, 120
    %v248 = vpop.permute.xlu0 %247
    %249 = vrot.lane.b32.xlu0 %v203, 120
    %v250 = vpop.permute.xlu0 %249
    %251 = vrot.lane.b32.xlu0 %v204, 120
    %v252 = vpop.permute.xlu0 %251
    %v269 = vmax.f32 %v189, %v222
    %v270 = vmax.f32 %v190, %v224
    %v271 = vmax.f32 %v191, %v226
    %v272 = vmax.f32 %v192, %v228
    %v273 = vmax.f32 %v193, %v230
    %v274 = vmax.f32 %v194, %v232
    %v275 = vmax.f32 %v195, %v234
    %v276 = vmax.f32 %v196, %v236
    %v277 = vmax.f32 %v197, %v238
    %v278 = vmax.f32 %v198, %v240
    %v279 = vmax.f32 %v199, %v242
    %v280 = vmax.f32 %v200, %v244
    %v281 = vmax.f32 %v201, %v246
    %v282 = vmax.f32 %v202, %v248
    %v283 = vmax.f32 %v203, %v250
    %v284 = vmax.f32 %v204, %v252
    %v285 = vpack.c.bf16 %v269, %v269
    %v286 = vpack.c.bf16 %v270, %v270
    %v287 = vpack.c.bf16 %v271, %v271
    %v288 = vpack.c.bf16 %v272, %v272
    %v289 = vpack.c.bf16 %v273, %v273
    %v290 = vpack.c.bf16 %v274, %v274
    %v291 = vpack.c.bf16 %v275, %v275
    %v292 = vpack.c.bf16 %v276, %v276
    %v293 = vpack.c.bf16 %v277, %v277
    %v294 = vpack.c.bf16 %v278, %v278
    %v295 = vpack.c.bf16 %v279, %v279
    %v296 = vpack.c.bf16 %v280, %v280
    %v297 = vpack.c.bf16 %v281, %v281
    %v298 = vpack.c.bf16 %v282, %v282
    %v299 = vpack.c.bf16 %v283, %v283
    %v300 = vpack.c.bf16 %v284, %v284
    %v301 = vunpack.c.l.bf16 %v158
    %v302 = vunpack.c.l.bf16 %v160
    %v303 = vunpack.c.l.bf16 %v162
    %v304 = vunpack.c.l.bf16 %v164
    %v305 = vunpack.c.l.bf16 %v166
    %v306 = vunpack.c.l.bf16 %v168
    %v307 = vunpack.c.l.bf16 %v170
    %v308 = vunpack.c.l.bf16 %v172
    %v309 = vunpack.c.l.bf16 %v174
    %v310 = vunpack.c.l.bf16 %v176
    %v311 = vunpack.c.l.bf16 %v178
    %v312 = vunpack.c.l.bf16 %v180
    %v313 = vunpack.c.l.bf16 %v182
    %v314 = vunpack.c.l.bf16 %v184
    %v315 = vunpack.c.l.bf16 %v186
    %v316 = vunpack.c.l.bf16 %v188
    %333 = vrot.lane.b32.xlu0 %v301, 120
    %v334 = vpop.permute.xlu0 %333
    %335 = vrot.lane.b32.xlu0 %v302, 120
    %v336 = vpop.permute.xlu0 %335
    %337 = vrot.lane.b32.xlu0 %v303, 120
    %v338 = vpop.permute.xlu0 %337
    %339 = vrot.lane.b32.xlu0 %v304, 120
    %v340 = vpop.permute.xlu0 %339
    %341 = vrot.lane.b32.xlu0 %v305, 120
    %v342 = vpop.permute.xlu0 %341
    %343 = vrot.lane.b32.xlu0 %v306, 120
    %v344 = vpop.permute.xlu0 %343
    %345 = vrot.lane.b32.xlu0 %v307, 120
    %v346 = vpop.permute.xlu0 %345
    %347 = vrot.lane.b32.xlu0 %v308, 120
    %v348 = vpop.permute.xlu0 %347
    %349 = vrot.lane.b32.xlu0 %v309, 120
    %v350 = vpop.permute.xlu0 %349
    %351 = vrot.lane.b32.xlu0 %v310, 120
    %v352 = vpop.permute.xlu0 %351
    %353 = vrot.lane.b32.xlu0 %v311, 120
    %v354 = vpop.permute.xlu0 %353
    %355 = vrot.lane.b32.xlu0 %v312, 120
    %v356 = vpop.permute.xlu0 %355
    %357 = vrot.lane.b32.xlu0 %v313, 120
    %v358 = vpop.permute.xlu0 %357
    %359 = vrot.lane.b32.xlu0 %v314, 120
    %v360 = vpop.permute.xlu0 %359
    %361 = vrot.lane.b32.xlu0 %v315, 120
    %v362 = vpop.permute.xlu0 %361
    %363 = vrot.lane.b32.xlu0 %v316, 120
    %v364 = vpop.permute.xlu0 %363
    %v381 = vmax.f32 %v301, %v334
    %v382 = vmax.f32 %v302, %v336
    %v383 = vmax.f32 %v303, %v338
    %v384 = vmax.f32 %v304, %v340
    %v385 = vmax.f32 %v305, %v342
    %v386 = vmax.f32 %v306, %v344
    %v387 = vmax.f32 %v307, %v346
    %v388 = vmax.f32 %v308, %v348
    %v389 = vmax.f32 %v309, %v350
    %v390 = vmax.f32 %v310, %v352
    %v391 = vmax.f32 %v311, %v354
    %v392 = vmax.f32 %v312, %v356
    %v393 = vmax.f32 %v313, %v358
    %v394 = vmax.f32 %v314, %v360
    %v395 = vmax.f32 %v315, %v362
    %v396 = vmax.f32 %v316, %v364
    %v397 = vpack.c.bf16 %v381, %v381
    %v398 = vpack.c.bf16 %v382, %v382
    %v399 = vpack.c.bf16 %v383, %v383
    %v400 = vpack.c.bf16 %v384, %v384
    %v401 = vpack.c.bf16 %v385, %v385
    %v402 = vpack.c.bf16 %v386, %v386
    %v403 = vpack.c.bf16 %v387, %v387
    %v404 = vpack.c.bf16 %v388, %v388
    %v405 = vpack.c.bf16 %v389, %v389
    %v406 = vpack.c.bf16 %v390, %v390
    %v407 = vpack.c.bf16 %v391, %v391
    %v408 = vpack.c.bf16 %v392, %v392
    %v409 = vpack.c.bf16 %v393, %v393
    %v410 = vpack.c.bf16 %v394, %v394
    %v411 = vpack.c.bf16 %v395, %v395
    %v412 = vpack.c.bf16 %v396, %v396
    %v413 = vunpack.c.l.bf16 %v285
    %v414 = vunpack.c.l.bf16 %v286
    %v415 = vunpack.c.l.bf16 %v287
    %v416 = vunpack.c.l.bf16 %v288
    %v417 = vunpack.c.l.bf16 %v289
    %v418 = vunpack.c.l.bf16 %v290
    %v419 = vunpack.c.l.bf16 %v291
    %v420 = vunpack.c.l.bf16 %v292
    %v421 = vunpack.c.l.bf16 %v293
    %v422 = vunpack.c.l.bf16 %v294
    %v423 = vunpack.c.l.bf16 %v295
    %v424 = vunpack.c.l.bf16 %v296
    %v425 = vunpack.c.l.bf16 %v297
    %v426 = vunpack.c.l.bf16 %v298
    %v427 = vunpack.c.l.bf16 %v299
    %v428 = vunpack.c.l.bf16 %v300
    %v429 = vunpack.c.l.bf16 %v397
    %v430 = vunpack.c.l.bf16 %v398
    %v431 = vunpack.c.l.bf16 %v399
    %v432 = vunpack.c.l.bf16 %v400
    %v433 = vunpack.c.l.bf16 %v401
    %v434 = vunpack.c.l.bf16 %v402
    %v435 = vunpack.c.l.bf16 %v403
    %v436 = vunpack.c.l.bf16 %v404
    %v437 = vunpack.c.l.bf16 %v405
    %v438 = vunpack.c.l.bf16 %v406
    %v439 = vunpack.c.l.bf16 %v407
    %v440 = vunpack.c.l.bf16 %v408
    %v441 = vunpack.c.l.bf16 %v409
    %v442 = vunpack.c.l.bf16 %v410
    %v443 = vunpack.c.l.bf16 %v411
    %v444 = vunpack.c.l.bf16 %v412
    %v445 = vmax.f32 %v413, %v429
    %v446 = vmax.f32 %v414, %v430
    %v447 = vmax.f32 %v415, %v431
    %v448 = vmax.f32 %v416, %v432
    %v449 = vmax.f32 %v417, %v433
    %v450 = vmax.f32 %v418, %v434
    %v451 = vmax.f32 %v419, %v435
    %v452 = vmax.f32 %v420, %v436
    %v453 = vmax.f32 %v421, %v437
    %v454 = vmax.f32 %v422, %v438
    %v455 = vmax.f32 %v423, %v439
    %v456 = vmax.f32 %v424, %v440
    %v457 = vmax.f32 %v425, %v441
    %v458 = vmax.f32 %v426, %v442
    %v459 = vmax.f32 %v427, %v443
    %v460 = vmax.f32 %v428, %v444
    %v461 = vpack.c.bf16 %v445, %v445
    %v462 = vpack.c.bf16 %v446, %v446
    %v463 = vpack.c.bf16 %v447, %v447
    %v464 = vpack.c.bf16 %v448, %v448
    %v465 = vpack.c.bf16 %v449, %v449
    %v466 = vpack.c.bf16 %v450, %v450
    %v467 = vpack.c.bf16 %v451, %v451
    %v468 = vpack.c.bf16 %v452, %v452
    %v469 = vpack.c.bf16 %v453, %v453
    %v470 = vpack.c.bf16 %v454, %v454
    %v471 = vpack.c.bf16 %v455, %v455
    %v472 = vpack.c.bf16 %v456, %v456
    %v473 = vpack.c.bf16 %v457, %v457
    %v474 = vpack.c.bf16 %v458, %v458
    %v475 = vpack.c.bf16 %v459, %v459
    %v476 = vpack.c.bf16 %v460, %v460
    %v478 = vshrl.u32 %v461, 16
    %v480 = vrot.slane %v478, 7
    %v481 = vshll.u32 %v461, 16
    %v483 = vor.u32 %v480, %v481
    %v484 = vrot.slane %v480, 4
    %v486 = vshrl.u32 %v462, 16
    %v488 = vrot.slane %v486, 7
    %v489 = vshll.u32 %v462, 16
    %v491 = vor.u32 %v488, %v489
    %v492 = vrot.slane %v488, 4
    %v494 = vshrl.u32 %v463, 16
    %v496 = vrot.slane %v494, 7
    %v497 = vshll.u32 %v463, 16
    %v499 = vor.u32 %v496, %v497
    %v500 = vrot.slane %v496, 4
    %v502 = vshrl.u32 %v464, 16
    %v504 = vrot.slane %v502, 7
    %v505 = vshll.u32 %v464, 16
    %v507 = vor.u32 %v504, %v505
    %v508 = vrot.slane %v504, 4
    %v510 = vshrl.u32 %v465, 16
    %v512 = vrot.slane %v510, 7
    %v513 = vshll.u32 %v465, 16
    %v515 = vor.u32 %v512, %v513
    %v516 = vrot.slane %v512, 4
    %v518 = vshrl.u32 %v466, 16
    %v520 = vrot.slane %v518, 7
    %v521 = vshll.u32 %v466, 16
    %v523 = vor.u32 %v520, %v521
    %v524 = vrot.slane %v520, 4
    %v526 = vshrl.u32 %v467, 16
    %v528 = vrot.slane %v526, 7
    %v529 = vshll.u32 %v467, 16
    %v531 = vor.u32 %v528, %v529
    %v532 = vrot.slane %v528, 4
    %v534 = vshrl.u32 %v468, 16
    %v536 = vrot.slane %v534, 7
    %v537 = vshll.u32 %v468, 16
    %v539 = vor.u32 %v536, %v537
    %v540 = vrot.slane %v536, 4
    %v542 = vshrl.u32 %v469, 16
    %v544 = vrot.slane %v542, 7
    %v545 = vshll.u32 %v469, 16
    %v547 = vor.u32 %v544, %v545
    %v548 = vrot.slane %v544, 4
    %v550 = vshrl.u32 %v470, 16
    %v552 = vrot.slane %v550, 7
    %v553 = vshll.u32 %v470, 16
    %v555 = vor.u32 %v552, %v553
    %v556 = vrot.slane %v552, 4
    %v558 = vshrl.u32 %v471, 16
    %v560 = vrot.slane %v558, 7
    %v561 = vshll.u32 %v471, 16
    %v563 = vor.u32 %v560, %v561
    %v564 = vrot.slane %v560, 4
    %v566 = vshrl.u32 %v472, 16
    %v568 = vrot.slane %v566, 7
    %v569 = vshll.u32 %v472, 16
    %v571 = vor.u32 %v568, %v569
    %v572 = vrot.slane %v568, 4
    %v574 = vshrl.u32 %v473, 16
    %v576 = vrot.slane %v574, 7
    %v577 = vshll.u32 %v473, 16
    %v579 = vor.u32 %v576, %v577
    %v580 = vrot.slane %v576, 4
    %v582 = vshrl.u32 %v474, 16
    %v584 = vrot.slane %v582, 7
    %v585 = vshll.u32 %v474, 16
    %v587 = vor.u32 %v584, %v585
    %v588 = vrot.slane %v584, 4
    %v590 = vshrl.u32 %v475, 16
    %v592 = vrot.slane %v590, 7
    %v593 = vshll.u32 %v475, 16
    %v595 = vor.u32 %v592, %v593
    %v596 = vrot.slane %v592, 4
    %v598 = vshrl.u32 %v476, 16
    %v600 = vrot.slane %v598, 7
    %v601 = vshll.u32 %v476, 16
    %v603 = vor.u32 %v600, %v601
    %v604 = vrot.slane %v600, 4
    %vm637 = vcmask 60416
    %vm638 = vmand %vm637, %vm107
    %v639 = vld [vmem:[%s55] sm:$0xf]
    %v640 = vsel %vm638, %v483, %v639
    %641 = vst [vmem:[%s55] sm:$0xf] %v640
    %v642 = vld [vmem:[%s55 + $0x4] sm:$0x1]
    %v643 = vsel %vm58, %v484, %v642
    %644 = vst [vmem:[%s55 + $0x4] sm:$0x1] %v643
    %v645 = vld [vmem:[%s55 + $0x8] sm:$0xf]
    %v646 = vsel %vm638, %v491, %v645
    %647 = vst [vmem:[%s55 + $0x8] sm:$0xf] %v646
    %v648 = vld [vmem:[%s55 + $0xc] sm:$0x1]
    %v649 = vsel %vm58, %v492, %v648
    %650 = vst [vmem:[%s55 + $0xc] sm:$0x1] %v649
    %v651 = vld [vmem:[%s55 + $0x10] sm:$0xf]
    %v652 = vsel %vm638, %v499, %v651
    %653 = vst [vmem:[%s55 + $0x10] sm:$0xf] %v652
    %v654 = vld [vmem:[%s55 + $0x14] sm:$0x1]
    %v655 = vsel %vm58, %v500, %v654
    %656 = vst [vmem:[%s55 + $0x14] sm:$0x1] %v655
    %v657 = vld [vmem:[%s55 + $0x18] sm:$0xf]
    %v658 = vsel %vm638, %v507, %v657
    %659 = vst [vmem:[%s55 + $0x18] sm:$0xf] %v658
    %v660 = vld [vmem:[%s55 + $0x1c] sm:$0x1]
    %v661 = vsel %vm58, %v508, %v660
    %662 = vst [vmem:[%s55 + $0x1c] sm:$0x1] %v661
    %v663 = vld [vmem:[%s55 + $0x20] sm:$0xf]
    %v664 = vsel %vm638, %v515, %v663
    %665 = vst [vmem:[%s55 + $0x20] sm:$0xf] %v664
    %v666 = vld [vmem:[%s55 + $0x24] sm:$0x1]
    %v667 = vsel %vm58, %v516, %v666
    %668 = vst [vmem:[%s55 + $0x24] sm:$0x1] %v667
    %v669 = vld [vmem:[%s55 + $0x28] sm:$0xf]
    %v670 = vsel %vm638, %v523, %v669
    %671 = vst [vmem:[%s55 + $0x28] sm:$0xf] %v670
    %v672 = vld [vmem:[%s55 + $0x2c] sm:$0x1]
    %v673 = vsel %vm58, %v524, %v672
    %674 = vst [vmem:[%s55 + $0x2c] sm:$0x1] %v673
    %v675 = vld [vmem:[%s55 + $0x30] sm:$0xf]
    %v676 = vsel %vm638, %v531, %v675
    %677 = vst [vmem:[%s55 + $0x30] sm:$0xf] %v676
    %v678 = vld [vmem:[%s55 + $0x34] sm:$0x1]
    %v679 = vsel %vm58, %v532, %v678
    %680 = vst [vmem:[%s55 + $0x34] sm:$0x1] %v679
    %v681 = vld [vmem:[%s55 + $0x38] sm:$0xf]
    %v682 = vsel %vm638, %v539, %v681
    %683 = vst [vmem:[%s55 + $0x38] sm:$0xf] %v682
    %v684 = vld [vmem:[%s55 + $0x3c] sm:$0x1]
    %v685 = vsel %vm58, %v540, %v684
    %686 = vst [vmem:[%s55 + $0x3c] sm:$0x1] %v685
    %v687 = vld [vmem:[%s55 + $0x50] sm:$0xf]
    %v688 = vsel %vm638, %v547, %v687
    %689 = vst [vmem:[%s55 + $0x50] sm:$0xf] %v688
    %v690 = vld [vmem:[%s55 + $0x54] sm:$0x1]
    %v691 = vsel %vm58, %v548, %v690
    %692 = vst [vmem:[%s55 + $0x54] sm:$0x1] %v691
    %v693 = vld [vmem:[%s55 + $0x58] sm:$0xf]
    %v694 = vsel %vm638, %v555, %v693
    %695 = vst [vmem:[%s55 + $0x58] sm:$0xf] %v694
    %v696 = vld [vmem:[%s55 + $0x5c] sm:$0x1]
    %v697 = vsel %vm58, %v556, %v696
    %698 = vst [vmem:[%s55 + $0x5c] sm:$0x1] %v697
    %v699 = vld [vmem:[%s55 + $0x60] sm:$0xf]
    %v700 = vsel %vm638, %v563, %v699
    %701 = vst [vmem:[%s55 + $0x60] sm:$0xf] %v700
    %v702 = vld [vmem:[%s55 + $0x64] sm:$0x1]
    %v703 = vsel %vm58, %v564, %v702
    %704 = vst [vmem:[%s55 + $0x64] sm:$0x1] %v703
    %v705 = vld [vmem:[%s55 + $0x68] sm:$0xf]
    %v706 = vsel %vm638, %v571, %v705
    %707 = vst [vmem:[%s55 + $0x68] sm:$0xf] %v706
    %v708 = vld [vmem:[%s55 + $0x6c] sm:$0x1]
    %v709 = vsel %vm58, %v572, %v708
    %710 = vst [vmem:[%s55 + $0x6c] sm:$0x1] %v709
    %v711 = vld [vmem:[%s55 + $0x70] sm:$0xf]
    %v712 = vsel %vm638, %v579, %v711
    %713 = vst [vmem:[%s55 + $0x70] sm:$0xf] %v712
    %v714 = vld [vmem:[%s55 + $0x74] sm:$0x1]
    %v715 = vsel %vm58, %v580, %v714
    %716 = vst [vmem:[%s55 + $0x74] sm:$0x1] %v715
    %v717 = vld [vmem:[%s55 + $0x78] sm:$0xf]
    %v718 = vsel %vm638, %v587, %v717
    %719 = vst [vmem:[%s55 + $0x78] sm:$0xf] %v718
    %v720 = vld [vmem:[%s55 + $0x7c] sm:$0x1]
    %v721 = vsel %vm58, %v588, %v720
    %722 = vst [vmem:[%s55 + $0x7c] sm:$0x1] %v721
    %v723 = vld [vmem:[%s55 + $0x80] sm:$0xf]
    %v724 = vsel %vm638, %v595, %v723
    %725 = vst [vmem:[%s55 + $0x80] sm:$0xf] %v724
    %v726 = vld [vmem:[%s55 + $0x84] sm:$0x1]
    %v727 = vsel %vm58, %v596, %v726
    %728 = vst [vmem:[%s55 + $0x84] sm:$0x1] %v727
    %v729 = vld [vmem:[%s55 + $0x88] sm:$0xf]
    %v730 = vsel %vm638, %v603, %v729
    %731 = vst [vmem:[%s55 + $0x88] sm:$0xf] %v730
    %v732 = vld [vmem:[%s55 + $0x8c] sm:$0x1]
    %v733 = vsel %vm58, %v604, %v732
    %734 = vst [vmem:[%s55 + $0x8c] sm:$0x1] %v733
    %v735 = vld [vmem:[#allocation2] sm:$0xf]
    %v736 = vld [vmem:[#allocation2 + $0x8] sm:$0xf]
    %v737 = vld [vmem:[#allocation2 + $0x10] sm:$0xf]
    %v738 = vld [vmem:[#allocation2 + $0x18] sm:$0xf]
    %v739 = vld [vmem:[#allocation2 + $0x20] sm:$0xf]
    %v740 = vld [vmem:[#allocation2 + $0x28] sm:$0xf]
    %v741 = vld [vmem:[#allocation2 + $0x30] sm:$0xf]
    %v742 = vld [vmem:[#allocation2 + $0x38] sm:$0xf]
    %v743 = vld [vmem:[#allocation2 + $0x50] sm:$0xf]
    %v744 = vld [vmem:[#allocation2 + $0x58] sm:$0xf]
    %v745 = vld [vmem:[#allocation2 + $0x60] sm:$0xf]
    %v746 = vld [vmem:[#allocation2 + $0x68] sm:$0xf]
    %v747 = vld [vmem:[#allocation2 + $0x70] sm:$0xf]
    %v748 = vld [vmem:[#allocation2 + $0x78] sm:$0xf]
    %v749 = vld [vmem:[#allocation2 + $0x80] sm:$0xf]
    %v750 = vld [vmem:[#allocation2 + $0x88] sm:$0xf]
    %v751 = vld [vmem:[#allocation2 + $0x4] sm:$0x1]
    %v752 = vld [vmem:[#allocation2 + $0xc] sm:$0x1]
    %v753 = vld [vmem:[#allocation2 + $0x14] sm:$0x1]
    %v754 = vld [vmem:[#allocation2 + $0x1c] sm:$0x1]
    %v755 = vld [vmem:[#allocation2 + $0x24] sm:$0x1]
    %v756 = vld [vmem:[#allocation2 + $0x2c] sm:$0x1]
    %v757 = vld [vmem:[#allocation2 + $0x34] sm:$0x1]
    %v758 = vld [vmem:[#allocation2 + $0x3c] sm:$0x1]
    %v759 = vld [vmem:[#allocation2 + $0x54] sm:$0x1]
    %v760 = vld [vmem:[#allocation2 + $0x5c] sm:$0x1]
    %v761 = vld [vmem:[#allocation2 + $0x64] sm:$0x1]
    %v762 = vld [vmem:[#allocation2 + $0x6c] sm:$0x1]
    %v763 = vld [vmem:[#allocation2 + $0x74] sm:$0x1]
    %v764 = vld [vmem:[#allocation2 + $0x7c] sm:$0x1]
    %v765 = vld [vmem:[#allocation2 + $0x84] sm:$0x1]
    %v766 = vld [vmem:[#allocation2 + $0x8c] sm:$0x1]
    %vm767 = vsmask.f32 3328
    %vm768 = vsmask.f32 7440
    %vm769 = vmor %vm767, %vm768
    %v771 = vshrl.u32 %v735, 16
    %v773 = vrot.slane %v771, 4
    %v774 = vshll.u32 %v735, 16
    %v776 = vrot.slane %v774, 5
    %v777 = vor.u32 %v773, %v776
    %v778 = vrot.slane %v777, 4
    %v780 = vshll.u32 %v751, 16
    %v782 = vrot.slane %v780, 5
    %v783 = vsel %vm769, %v778, %v782
    %v785 = vshrl.u32 %v736, 16
    %v787 = vrot.slane %v785, 4
    %v788 = vshll.u32 %v736, 16
    %v790 = vrot.slane %v788, 5
    %v791 = vor.u32 %v787, %v790
    %v792 = vrot.slane %v791, 4
    %v794 = vshll.u32 %v752, 16
    %v796 = vrot.slane %v794, 5
    %v797 = vsel %vm769, %v792, %v796
    %v799 = vshrl.u32 %v737, 16
    %v801 = vrot.slane %v799, 4
    %v802 = vshll.u32 %v737, 16
    %v804 = vrot.slane %v802, 5
    %v805 = vor.u32 %v801, %v804
    %v806 = vrot.slane %v805, 4
    %v808 = vshll.u32 %v753, 16
    %v810 = vrot.slane %v808, 5
    %v811 = vsel %vm769, %v806, %v810
    %v813 = vshrl.u32 %v738, 16
    %v815 = vrot.slane %v813, 4
    %v816 = vshll.u32 %v738, 16
    %v818 = vrot.slane %v816, 5
    %v819 = vor.u32 %v815, %v818
    %v820 = vrot.slane %v819, 4
    %v822 = vshll.u32 %v754, 16
    %v824 = vrot.slane %v822, 5
    %v825 = vsel %vm769, %v820, %v824
    %v827 = vshrl.u32 %v739, 16
    %v829 = vrot.slane %v827, 4
    %v830 = vshll.u32 %v739, 16
    %v832 = vrot.slane %v830, 5
    %v833 = vor.u32 %v829, %v832
    %v834 = vrot.slane %v833, 4
    %v836 = vshll.u32 %v755, 16
    %v838 = vrot.slane %v836, 5
    %v839 = vsel %vm769, %v834, %v838
    %v841 = vshrl.u32 %v740, 16
    %v843 = vrot.slane %v841, 4
    %v844 = vshll.u32 %v740, 16
    %v846 = vrot.slane %v844, 5
    %v847 = vor.u32 %v843, %v846
    %v848 = vrot.slane %v847, 4
    %v850 = vshll.u32 %v756, 16
    %v852 = vrot.slane %v850, 5
    %v853 = vsel %vm769, %v848, %v852
    %v855 = vshrl.u32 %v741, 16
    %v857 = vrot.slane %v855, 4
    %v858 = vshll.u32 %v741, 16
    %v860 = vrot.slane %v858, 5
    %v861 = vor.u32 %v857, %v860
    %v862 = vrot.slane %v861, 4
    %v864 = vshll.u32 %v757, 16
    %v866 = vrot.slane %v864, 5
    %v867 = vsel %vm769, %v862, %v866
    %v869 = vshrl.u32 %v742, 16
    %v871 = vrot.slane %v869, 4
    %v872 = vshll.u32 %v742, 16
    %v874 = vrot.slane %v872, 5
    %v875 = vor.u32 %v871, %v874
    %v876 = vrot.slane %v875, 4
    %v878 = vshll.u32 %v758, 16
    %v880 = vrot.slane %v878, 5
    %v881 = vsel %vm769, %v876, %v880
    %v883 = vshrl.u32 %v743, 16
    %v885 = vrot.slane %v883, 4
    %v886 = vshll.u32 %v743, 16
    %v888 = vrot.slane %v886, 5
    %v889 = vor.u32 %v885, %v888
    %v890 = vrot.slane %v889, 4
    %v892 = vshll.u32 %v759, 16
    %v894 = vrot.slane %v892, 5
    %v895 = vsel %vm769, %v890, %v894
    %v897 = vshrl.u32 %v744, 16
    %v899 = vrot.slane %v897, 4
    %v900 = vshll.u32 %v744, 16
    %v902 = vrot.slane %v900, 5
    %v903 = vor.u32 %v899, %v902
    %v904 = vrot.slane %v903, 4
    %v906 = vshll.u32 %v760, 16
    %v908 = vrot.slane %v906, 5
    %v909 = vsel %vm769, %v904, %v908
    %v911 = vshrl.u32 %v745, 16
    %v913 = vrot.slane %v911, 4
    %v914 = vshll.u32 %v745, 16
    %v916 = vrot.slane %v914, 5
    %v917 = vor.u32 %v913, %v916
    %v918 = vrot.slane %v917, 4
    %v920 = vshll.u32 %v761, 16
    %v922 = vrot.slane %v920, 5
    %v923 = vsel %vm769, %v918, %v922
    %v925 = vshrl.u32 %v746, 16
    %v927 = vrot.slane %v925, 4
    %v928 = vshll.u32 %v746, 16
    %v930 = vrot.slane %v928, 5
    %v931 = vor.u32 %v927, %v930
    %v932 = vrot.slane %v931, 4
    %v934 = vshll.u32 %v762, 16
    %v936 = vrot.slane %v934, 5
    %v937 = vsel %vm769, %v932, %v936
    %v939 = vshrl.u32 %v747, 16
    %v941 = vrot.slane %v939, 4
    %v942 = vshll.u32 %v747, 16
    %v944 = vrot.slane %v942, 5
    %v945 = vor.u32 %v941, %v944
    %v946 = vrot.slane %v945, 4
    %v948 = vshll.u32 %v763, 16
    %v950 = vrot.slane %v948, 5
    %v951 = vsel %vm769, %v946, %v950
    %v953 = vshrl.u32 %v748, 16
    %v955 = vrot.slane %v953, 4
    %v956 = vshll.u32 %v748, 16
    %v958 = vrot.slane %v956, 5
    %v959 = vor.u32 %v955, %v958
    %v960 = vrot.slane %v959, 4
    %v962 = vshll.u32 %v764, 16
    %v964 = vrot.slane %v962, 5
    %v965 = vsel %vm769, %v960, %v964
    %v967 = vshrl.u32 %v749, 16
    %v969 = vrot.slane %v967, 4
    %v970 = vshll.u32 %v749, 16
    %v972 = vrot.slane %v970, 5
    %v973 = vor.u32 %v969, %v972
    %v974 = vrot.slane %v973, 4
    %v976 = vshll.u32 %v765, 16
    %v978 = vrot.slane %v976, 5
    %v979 = vsel %vm769, %v974, %v978
    %v981 = vshrl.u32 %v750, 16
    %v983 = vrot.slane %v981, 4
    %v984 = vshll.u32 %v750, 16
    %v986 = vrot.slane %v984, 5
    %v987 = vor.u32 %v983, %v986
    %v988 = vrot.slane %v987, 4
    %v990 = vshll.u32 %v766, 16
    %v992 = vrot.slane %v990, 5
    %v993 = vsel %vm769, %v988, %v992
    %v994 = vld [vmem:[#allocation2] sm:$0xe]
    %v995 = vld [vmem:[#allocation2 + $0x8] sm:$0xe]
    %v996 = vld [vmem:[#allocation2 + $0x10] sm:$0xe]
    %v997 = vld [vmem:[#allocation2 + $0x18] sm:$0xe]
    %v998 = vld [vmem:[#allocation2 + $0x20] sm:$0xe]
    %v999 = vld [vmem:[#allocation2 + $0x28] sm:$0xe]
    %v1000 = vld [vmem:[#allocation2 + $0x30] sm:$0xe]
    %v1001 = vld [vmem:[#allocation2 + $0x38] sm:$0xe]
    %v1002 = vld [vmem:[#allocation2 + $0x50] sm:$0xe]
    %v1003 = vld [vmem:[#allocation2 + $0x58] sm:$0xe]
    %v1004 = vld [vmem:[#allocation2 + $0x60] sm:$0xe]
    %v1005 = vld [vmem:[#allocation2 + $0x68] sm:$0xe]
    %v1006 = vld [vmem:[#allocation2 + $0x70] sm:$0xe]
    %v1007 = vld [vmem:[#allocation2 + $0x78] sm:$0xe]
    %v1008 = vld [vmem:[#allocation2 + $0x80] sm:$0xe]
    %v1009 = vld [vmem:[#allocation2 + $0x88] sm:$0xe]
    %vm1042 = vcmask 1042432
    %vm1043 = vcmask 1046532
    %vm1044 = vmor %vm1042, %vm1043
    %v1045 = vrot.slane %v994, 5
    %v1046 = vrot.slane %v1045, 4
    %v1047 = vrot.slane %v751, 5
    %v1048 = vsel %vm1044, %v1046, %v1047
    %v1049 = vrot.slane %v995, 5
    %v1050 = vrot.slane %v1049, 4
    %v1051 = vrot.slane %v752, 5
    %v1052 = vsel %vm1044, %v1050, %v1051
    %v1053 = vrot.slane %v996, 5
    %v1054 = vrot.slane %v1053, 4
    %v1055 = vrot.slane %v753, 5
    %v1056 = vsel %vm1044, %v1054, %v1055
    %v1057 = vrot.slane %v997, 5
    %v1058 = vrot.slane %v1057, 4
    %v1059 = vrot.slane %v754, 5
    %v1060 = vsel %vm1044, %v1058, %v1059
    %v1061 = vrot.slane %v998, 5
    %v1062 = vrot.slane %v1061, 4
    %v1063 = vrot.slane %v755, 5
    %v1064 = vsel %vm1044, %v1062, %v1063
    %v1065 = vrot.slane %v999, 5
    %v1066 = vrot.slane %v1065, 4
    %v1067 = vrot.slane %v756, 5
    %v1068 = vsel %vm1044, %v1066, %v1067
    %v1069 = vrot.slane %v1000, 5
    %v1070 = vrot.slane %v1069, 4
    %v1071 = vrot.slane %v757, 5
    %v1072 = vsel %vm1044, %v1070, %v1071
    %v1073 = vrot.slane %v1001, 5
    %v1074 = vrot.slane %v1073, 4
    %v1075 = vrot.slane %v758, 5
    %v1076 = vsel %vm1044, %v1074, %v1075
    %v1077 = vrot.slane %v1002, 5
    %v1078 = vrot.slane %v1077, 4
    %v1079 = vrot.slane %v759, 5
    %v1080 = vsel %vm1044, %v1078, %v1079
    %v1081 = vrot.slane %v1003, 5
    %v1082 = vrot.slane %v1081, 4
    %v1083 = vrot.slane %v760, 5
    %v1084 = vsel %vm1044, %v1082, %v1083
    %v1085 = vrot.slane %v1004, 5
    %v1086 = vrot.slane %v1085, 4
    %v1087 = vrot.slane %v761, 5
    %v1088 = vsel %vm1044, %v1086, %v1087
    %v1089 = vrot.slane %v1005, 5
    %v1090 = vrot.slane %v1089, 4
    %v1091 = vrot.slane %v762, 5
    %v1092 = vsel %vm1044, %v1090, %v1091
    %v1093 = vrot.slane %v1006, 5
    %v1094 = vrot.slane %v1093, 4
    %v1095 = vrot.slane %v763, 5
    %v1096 = vsel %vm1044, %v1094, %v1095
    %v1097 = vrot.slane %v1007, 5
    %v1098 = vrot.slane %v1097, 4
    %v1099 = vrot.slane %v764, 5
    %v1100 = vsel %vm1044, %v1098, %v1099
    %v1101 = vrot.slane %v1008, 5
    %v1102 = vrot.slane %v1101, 4
    %v1103 = vrot.slane %v765, 5
    %v1104 = vsel %vm1044, %v1102, %v1103
    %v1105 = vrot.slane %v1009, 5
    %v1106 = vrot.slane %v1105, 4
    %v1107 = vrot.slane %v766, 5
    %v1108 = vsel %vm1044, %v1106, %v1107
    %v1109 = vld [vmem:[%s55] sm:$0xf]
    %v1110 = vld [vmem:[%s55 + $0x8] sm:$0xf]
    %v1111 = vld [vmem:[%s55 + $0x10] sm:$0xf]
    %v1112 = vld [vmem:[%s55 + $0x18] sm:$0xf]
    %v1113 = vld [vmem:[%s55 + $0x20] sm:$0xf]
    %v1114 = vld [vmem:[%s55 + $0x28] sm:$0xf]
    %v1115 = vld [vmem:[%s55 + $0x30] sm:$0xf]
    %v1116 = vld [vmem:[%s55 + $0x38] sm:$0xf]
    %v1117 = vld [vmem:[%s55 + $0x50] sm:$0xf]
    %v1118 = vld [vmem:[%s55 + $0x58] sm:$0xf]
    %v1119 = vld [vmem:[%s55 + $0x60] sm:$0xf]
    %v1120 = vld [vmem:[%s55 + $0x68] sm:$0xf]
    %v1121 = vld [vmem:[%s55 + $0x70] sm:$0xf]
    %v1122 = vld [vmem:[%s55 + $0x78] sm:$0xf]
    %v1123 = vld [vmem:[%s55 + $0x80] sm:$0xf]
    %v1124 = vld [vmem:[%s55 + $0x88] sm:$0xf]
    %v1125 = vld [vmem:[%s55 + $0x4] sm:$0x1]
    %v1126 = vld [vmem:[%s55 + $0xc] sm:$0x1]
    %v1127 = vld [vmem:[%s55 + $0x14] sm:$0x1]
    %v1128 = vld [vmem:[%s55 + $0x1c] sm:$0x1]
    %v1129 = vld [vmem:[%s55 + $0x24] sm:$0x1]
    %v1130 = vld [vmem:[%s55 + $0x2c] sm:$0x1]
    %v1131 = vld [vmem:[%s55 + $0x34] sm:$0x1]
    %v1132 = vld [vmem:[%s55 + $0x3c] sm:$0x1]
    %v1133 = vld [vmem:[%s55 + $0x54] sm:$0x1]
    %v1134 = vld [vmem:[%s55 + $0x5c] sm:$0x1]
    %v1135 = vld [vmem:[%s55 + $0x64] sm:$0x1]
    %v1136 = vld [vmem:[%s55 + $0x6c] sm:$0x1]
    %v1137 = vld [vmem:[%s55 + $0x74] sm:$0x1]
    %v1138 = vld [vmem:[%s55 + $0x7c] sm:$0x1]
    %v1139 = vld [vmem:[%s55 + $0x84] sm:$0x1]
    %v1140 = vld [vmem:[%s55 + $0x8c] sm:$0x1]
    %v1142 = vshrl.u32 %v1109, 16
    %v1144 = vrot.slane %v1142, 4
    %v1145 = vshll.u32 %v1109, 16
    %v1147 = vrot.slane %v1145, 5
    %v1148 = vor.u32 %v1144, %v1147
    %v1149 = vrot.slane %v1148, 4
    %v1151 = vshll.u32 %v1125, 16
    %v1153 = vrot.slane %v1151, 5
    %v1154 = vsel %vm769, %v1149, %v1153
    %v1156 = vshrl.u32 %v1110, 16
    %v1158 = vrot.slane %v1156, 4
    %v1159 = vshll.u32 %v1110, 16
    %v1161 = vrot.slane %v1159, 5
    %v1162 = vor.u32 %v1158, %v1161
    %v1163 = vrot.slane %v1162, 4
    %v1165 = vshll.u32 %v1126, 16
    %v1167 = vrot.slane %v1165, 5
    %v1168 = vsel %vm769, %v1163, %v1167
    %v1170 = vshrl.u32 %v1111, 16
    %v1172 = vrot.slane %v1170, 4
    %v1173 = vshll.u32 %v1111, 16
    %v1175 = vrot.slane %v1173, 5
    %v1176 = vor.u32 %v1172, %v1175
    %v1177 = vrot.slane %v1176, 4
    %v1179 = vshll.u32 %v1127, 16
    %v1181 = vrot.slane %v1179, 5
    %v1182 = vsel %vm769, %v1177, %v1181
    %v1184 = vshrl.u32 %v1112, 16
    %v1186 = vrot.slane %v1184, 4
    %v1187 = vshll.u32 %v1112, 16
    %v1189 = vrot.slane %v1187, 5
    %v1190 = vor.u32 %v1186, %v1189
    %v1191 = vrot.slane %v1190, 4
    %v1193 = vshll.u32 %v1128, 16
    %v1195 = vrot.slane %v1193, 5
    %v1196 = vsel %vm769, %v1191, %v1195
    %v1198 = vshrl.u32 %v1113, 16
    %v1200 = vrot.slane %v1198, 4
    %v1201 = vshll.u32 %v1113, 16
    %v1203 = vrot.slane %v1201, 5
    %v1204 = vor.u32 %v1200, %v1203
    %v1205 = vrot.slane %v1204, 4
    %v1207 = vshll.u32 %v1129, 16
    %v1209 = vrot.slane %v1207, 5
    %v1210 = vsel %vm769, %v1205, %v1209
    %v1212 = vshrl.u32 %v1114, 16
    %v1214 = vrot.slane %v1212, 4
    %v1215 = vshll.u32 %v1114, 16
    %v1217 = vrot.slane %v1215, 5
    %v1218 = vor.u32 %v1214, %v1217
    %v1219 = vrot.slane %v1218, 4
    %v1221 = vshll.u32 %v1130, 16
    %v1223 = vrot.slane %v1221, 5
    %v1224 = vsel %vm769, %v1219, %v1223
    %v1226 = vshrl.u32 %v1115, 16
    %v1228 = vrot.slane %v1226, 4
    %v1229 = vshll.u32 %v1115, 16
    %v1231 = vrot.slane %v1229, 5
    %v1232 = vor.u32 %v1228, %v1231
    %v1233 = vrot.slane %v1232, 4
    %v1235 = vshll.u32 %v1131, 16
    %v1237 = vrot.slane %v1235, 5
    %v1238 = vsel %vm769, %v1233, %v1237
    %v1240 = vshrl.u32 %v1116, 16
    %v1242 = vrot.slane %v1240, 4
    %v1243 = vshll.u32 %v1116, 16
    %v1245 = vrot.slane %v1243, 5
    %v1246 = vor.u32 %v1242, %v1245
    %v1247 = vrot.slane %v1246, 4
    %v1249 = vshll.u32 %v1132, 16
    %v1251 = vrot.slane %v1249, 5
    %v1252 = vsel %vm769, %v1247, %v1251
    %v1254 = vshrl.u32 %v1117, 16
    %v1256 = vrot.slane %v1254, 4
    %v1257 = vshll.u32 %v1117, 16
    %v1259 = vrot.slane %v1257, 5
    %v1260 = vor.u32 %v1256, %v1259
    %v1261 = vrot.slane %v1260, 4
    %v1263 = vshll.u32 %v1133, 16
    %v1265 = vrot.slane %v1263, 5
    %v1266 = vsel %vm769, %v1261, %v1265
    %v1268 = vshrl.u32 %v1118, 16
    %v1270 = vrot.slane %v1268, 4
    %v1271 = vshll.u32 %v1118, 16
    %v1273 = vrot.slane %v1271, 5
    %v1274 = vor.u32 %v1270, %v1273
    %v1275 = vrot.slane %v1274, 4
    %v1277 = vshll.u32 %v1134, 16
    %v1279 = vrot.slane %v1277, 5
    %v1280 = vsel %vm769, %v1275, %v1279
    %v1282 = vshrl.u32 %v1119, 16
    %v1284 = vrot.slane %v1282, 4
    %v1285 = vshll.u32 %v1119, 16
    %v1287 = vrot.slane %v1285, 5
    %v1288 = vor.u32 %v1284, %v1287
    %v1289 = vrot.slane %v1288, 4
    %v1291 = vshll.u32 %v1135, 16
    %v1293 = vrot.slane %v1291, 5
    %v1294 = vsel %vm769, %v1289, %v1293
    %v1296 = vshrl.u32 %v1120, 16
    %v1298 = vrot.slane %v1296, 4
    %v1299 = vshll.u32 %v1120, 16
    %v1301 = vrot.slane %v1299, 5
    %v1302 = vor.u32 %v1298, %v1301
    %v1303 = vrot.slane %v1302, 4
    %v1305 = vshll.u32 %v1136, 16
    %v1307 = vrot.slane %v1305, 5
    %v1308 = vsel %vm769, %v1303, %v1307
    %v1310 = vshrl.u32 %v1121, 16
    %v1312 = vrot.slane %v1310, 4
    %v1313 = vshll.u32 %v1121, 16
    %v1315 = vrot.slane %v1313, 5
    %v1316 = vor.u32 %v1312, %v1315
    %v1317 = vrot.slane %v1316, 4
    %v1319 = vshll.u32 %v1137, 16
    %v1321 = vrot.slane %v1319, 5
    %v1322 = vsel %vm769, %v1317, %v1321
    %v1324 = vshrl.u32 %v1122, 16
    %v1326 = vrot.slane %v1324, 4
    %v1327 = vshll.u32 %v1122, 16
    %v1329 = vrot.slane %v1327, 5
    %v1330 = vor.u32 %v1326, %v1329
    %v1331 = vrot.slane %v1330, 4
    %v1333 = vshll.u32 %v1138, 16
    %v1335 = vrot.slane %v1333, 5
    %v1336 = vsel %vm769, %v1331, %v1335
    %v1338 = vshrl.u32 %v1123, 16
    %v1340 = vrot.slane %v1338, 4
    %v1341 = vshll.u32 %v1123, 16
    %v1343 = vrot.slane %v1341, 5
    %v1344 = vor.u32 %v1340, %v1343
    %v1345 = vrot.slane %v1344, 4
    %v1347 = vshll.u32 %v1139, 16
    %v1349 = vrot.slane %v1347, 5
    %v1350 = vsel %vm769, %v1345, %v1349
    %v1352 = vshrl.u32 %v1124, 16
    %v1354 = vrot.slane %v1352, 4
    %v1355 = vshll.u32 %v1124, 16
    %v1357 = vrot.slane %v1355, 5
    %v1358 = vor.u32 %v1354, %v1357
    %v1359 = vrot.slane %v1358, 4
    %v1361 = vshll.u32 %v1140, 16
    %v1363 = vrot.slane %v1361, 5
    %v1364 = vsel %vm769, %v1359, %v1363
    %v1365 = vld [vmem:[%s55] sm:$0xe]
    %v1366 = vld [vmem:[%s55 + $0x8] sm:$0xe]
    %v1367 = vld [vmem:[%s55 + $0x10] sm:$0xe]
    %v1368 = vld [vmem:[%s55 + $0x18] sm:$0xe]
    %v1369 = vld [vmem:[%s55 + $0x20] sm:$0xe]
    %v1370 = vld [vmem:[%s55 + $0x28] sm:$0xe]
    %v1371 = vld [vmem:[%s55 + $0x30] sm:$0xe]
    %v1372 = vld [vmem:[%s55 + $0x38] sm:$0xe]
    %v1373 = vld [vmem:[%s55 + $0x50] sm:$0xe]
    %v1374 = vld [vmem:[%s55 + $0x58] sm:$0xe]
    %v1375 = vld [vmem:[%s55 + $0x60] sm:$0xe]
    %v1376 = vld [vmem:[%s55 + $0x68] sm:$0xe]
    %v1377 = vld [vmem:[%s55 + $0x70] sm:$0xe]
    %v1378 = vld [vmem:[%s55 + $0x78] sm:$0xe]
    %v1379 = vld [vmem:[%s55 + $0x80] sm:$0xe]
    %v1380 = vld [vmem:[%s55 + $0x88] sm:$0xe]
    %v1413 = vrot.slane %v1365, 5
    %v1414 = vrot.slane %v1413, 4
    %v1415 = vrot.slane %v1125, 5
    %v1416 = vsel %vm1044, %v1414, %v1415
    %v1417 = vrot.slane %v1366, 5
    %v1418 = vrot.slane %v1417, 4
    %v1419 = vrot.slane %v1126, 5
    %v1420 = vsel %vm1044, %v1418, %v1419
    %v1421 = vrot.slane %v1367, 5
    %v1422 = vrot.slane %v1421, 4
    %v1423 = vrot.slane %v1127, 5
    %v1424 = vsel %vm1044, %v1422, %v1423
    %v1425 = vrot.slane %v1368, 5
    %v1426 = vrot.slane %v1425, 4
    %v1427 = vrot.slane %v1128, 5
    %v1428 = vsel %vm1044, %v1426, %v1427
    %v1429 = vrot.slane %v1369, 5
    %v1430 = vrot.slane %v1429, 4
    %v1431 = vrot.slane %v1129, 5
    %v1432 = vsel %vm1044, %v1430, %v1431
    %v1433 = vrot.slane %v1370, 5
    %v1434 = vrot.slane %v1433, 4
    %v1435 = vrot.slane %v1130, 5
    %v1436 = vsel %vm1044, %v1434, %v1435
    %v1437 = vrot.slane %v1371, 5
    %v1438 = vrot.slane %v1437, 4
    %v1439 = vrot.slane %v1131, 5
    %v1440 = vsel %vm1044, %v1438, %v1439
    %v1441 = vrot.slane %v1372, 5
    %v1442 = vrot.slane %v1441, 4
    %v1443 = vrot.slane %v1132, 5
    %v1444 = vsel %vm1044, %v1442, %v1443
    %v1445 = vrot.slane %v1373, 5
    %v1446 = vrot.slane %v1445, 4
    %v1447 = vrot.slane %v1133, 5
    %v1448 = vsel %vm1044, %v1446, %v1447
    %v1449 = vrot.slane %v1374, 5
    %v1450 = vrot.slane %v1449, 4
    %v1451 = vrot.slane %v1134, 5
    %v1452 = vsel %vm1044, %v1450, %v1451
    %v1453 = vrot.slane %v1375, 5
    %v1454 = vrot.slane %v1453, 4
    %v1455 = vrot.slane %v1135, 5
    %v1456 = vsel %vm1044, %v1454, %v1455
    %v1457 = vrot.slane %v1376, 5
    %v1458 = vrot.slane %v1457, 4
    %v1459 = vrot.slane %v1136, 5
    %v1460 = vsel %vm1044, %v1458, %v1459
    %v1461 = vrot.slane %v1377, 5
    %v1462 = vrot.slane %v1461, 4
    %v1463 = vrot.slane %v1137, 5
    %v1464 = vsel %vm1044, %v1462, %v1463
    %v1465 = vrot.slane %v1378, 5
    %v1466 = vrot.slane %v1465, 4
    %v1467 = vrot.slane %v1138, 5
    %v1468 = vsel %vm1044, %v1466, %v1467
    %v1469 = vrot.slane %v1379, 5
    %v1470 = vrot.slane %v1469, 4
    %v1471 = vrot.slane %v1139, 5
    %v1472 = vsel %vm1044, %v1470, %v1471
    %v1473 = vrot.slane %v1380, 5
    %v1474 = vrot.slane %v1473, 4
    %v1475 = vrot.slane %v1140, 5
    %v1476 = vsel %vm1044, %v1474, %v1475
    %s1477 = scalar_lea.vmem [#allocation2], 16
    %v1478 = vld [vmem:[%s1477] sm:$0xf]
    %v1479 = vld [vmem:[%s1477 + $0x8] sm:$0xf]
    %v1480 = vld [vmem:[%s1477 + $0x10] sm:$0xf]
    %v1481 = vld [vmem:[%s1477 + $0x18] sm:$0xf]
    %v1482 = vld [vmem:[%s1477 + $0x20] sm:$0xf]
    %v1483 = vld [vmem:[%s1477 + $0x28] sm:$0xf]
    %v1484 = vld [vmem:[%s1477 + $0x30] sm:$0xf]
    %v1485 = vld [vmem:[%s1477 + $0x38] sm:$0xf]
    %v1486 = vld [vmem:[%s1477 + $0x50] sm:$0xf]
    %v1487 = vld [vmem:[%s1477 + $0x58] sm:$0xf]
    %v1488 = vld [vmem:[%s1477 + $0x60] sm:$0xf]
    %v1489 = vld [vmem:[%s1477 + $0x68] sm:$0xf]
    %v1490 = vld [vmem:[%s1477 + $0x70] sm:$0xf]
    %v1491 = vld [vmem:[%s1477 + $0x78] sm:$0xf]
    %v1492 = vld [vmem:[%s1477 + $0x80] sm:$0xf]
    %v1493 = vld [vmem:[%s1477 + $0x88] sm:$0xf]
    %v1494 = vld [vmem:[%s1477 + $0x4] sm:$0x1]
    %v1495 = vld [vmem:[%s1477 + $0xc] sm:$0x1]
    %v1496 = vld [vmem:[%s1477 + $0x14] sm:$0x1]
    %v1497 = vld [vmem:[%s1477 + $0x1c] sm:$0x1]
    %v1498 = vld [vmem:[%s1477 + $0x24] sm:$0x1]
    %v1499 = vld [vmem:[%s1477 + $0x2c] sm:$0x1]
    %v1500 = vld [vmem:[%s1477 + $0x34] sm:$0x1]
    %v1501 = vld [vmem:[%s1477 + $0x3c] sm:$0x1]
    %v1502 = vld [vmem:[%s1477 + $0x54] sm:$0x1]
    %v1503 = vld [vmem:[%s1477 + $0x5c] sm:$0x1]
    %v1504 = vld [vmem:[%s1477 + $0x64] sm:$0x1]
    %v1505 = vld [vmem:[%s1477 + $0x6c] sm:$0x1]
    %v1506 = vld [vmem:[%s1477 + $0x74] sm:$0x1]
    %v1507 = vld [vmem:[%s1477 + $0x7c] sm:$0x1]
    %v1508 = vld [vmem:[%s1477 + $0x84] sm:$0x1]
    %v1509 = vld [vmem:[%s1477 + $0x8c] sm:$0x1]
    %v1511 = vshrl.u32 %v1478, 16
    %v1513 = vrot.slane %v1511, 4
    %v1514 = vshll.u32 %v1478, 16
    %v1516 = vrot.slane %v1514, 5
    %v1517 = vor.u32 %v1513, %v1516
    %v1518 = vrot.slane %v1517, 4
    %v1520 = vshll.u32 %v1494, 16
    %v1522 = vrot.slane %v1520, 5
    %v1523 = vsel %vm769, %v1518, %v1522
    %v1525 = vshrl.u32 %v1479, 16
    %v1527 = vrot.slane %v1525, 4
    %v1528 = vshll.u32 %v1479, 16
    %v1530 = vrot.slane %v1528, 5
    %v1531 = vor.u32 %v1527, %v1530
    %v1532 = vrot.slane %v1531, 4
    %v1534 = vshll.u32 %v1495, 16
    %v1536 = vrot.slane %v1534, 5
    %v1537 = vsel %vm769, %v1532, %v1536
    %v1539 = vshrl.u32 %v1480, 16
    %v1541 = vrot.slane %v1539, 4
    %v1542 = vshll.u32 %v1480, 16
    %v1544 = vrot.slane %v1542, 5
    %v1545 = vor.u32 %v1541, %v1544
    %v1546 = vrot.slane %v1545, 4
    %v1548 = vshll.u32 %v1496, 16
    %v1550 = vrot.slane %v1548, 5
    %v1551 = vsel %vm769, %v1546, %v1550
    %v1553 = vshrl.u32 %v1481, 16
    %v1555 = vrot.slane %v1553, 4
    %v1556 = vshll.u32 %v1481, 16
    %v1558 = vrot.slane %v1556, 5
    %v1559 = vor.u32 %v1555, %v1558
    %v1560 = vrot.slane %v1559, 4
    %v1562 = vshll.u32 %v1497, 16
    %v1564 = vrot.slane %v1562, 5
    %v1565 = vsel %vm769, %v1560, %v1564
    %v1567 = vshrl.u32 %v1482, 16
    %v1569 = vrot.slane %v1567, 4
    %v1570 = vshll.u32 %v1482, 16
    %v1572 = vrot.slane %v1570, 5
    %v1573 = vor.u32 %v1569, %v1572
    %v1574 = vrot.slane %v1573, 4
    %v1576 = vshll.u32 %v1498, 16
    %v1578 = vrot.slane %v1576, 5
    %v1579 = vsel %vm769, %v1574, %v1578
    %v1581 = vshrl.u32 %v1483, 16
    %v1583 = vrot.slane %v1581, 4
    %v1584 = vshll.u32 %v1483, 16
    %v1586 = vrot.slane %v1584, 5
    %v1587 = vor.u32 %v1583, %v1586
    %v1588 = vrot.slane %v1587, 4
    %v1590 = vshll.u32 %v1499, 16
    %v1592 = vrot.slane %v1590, 5
    %v1593 = vsel %vm769, %v1588, %v1592
    %v1595 = vshrl.u32 %v1484, 16
    %v1597 = vrot.slane %v1595, 4
    %v1598 = vshll.u32 %v1484, 16
    %v1600 = vrot.slane %v1598, 5
    %v1601 = vor.u32 %v1597, %v1600
    %v1602 = vrot.slane %v1601, 4
    %v1604 = vshll.u32 %v1500, 16
    %v1606 = vrot.slane %v1604, 5
    %v1607 = vsel %vm769, %v1602, %v1606
    %v1609 = vshrl.u32 %v1485, 16
    %v1611 = vrot.slane %v1609, 4
    %v1612 = vshll.u32 %v1485, 16
    %v1614 = vrot.slane %v1612, 5
    %v1615 = vor.u32 %v1611, %v1614
    %v1616 = vrot.slane %v1615, 4
    %v1618 = vshll.u32 %v1501, 16
    %v1620 = vrot.slane %v1618, 5
    %v1621 = vsel %vm769, %v1616, %v1620
    %v1623 = vshrl.u32 %v1486, 16
    %v1625 = vrot.slane %v1623, 4
    %v1626 = vshll.u32 %v1486, 16
    %v1628 = vrot.slane %v1626, 5
    %v1629 = vor.u32 %v1625, %v1628
    %v1630 = vrot.slane %v1629, 4
    %v1632 = vshll.u32 %v1502, 16
    %v1634 = vrot.slane %v1632, 5
    %v1635 = vsel %vm769, %v1630, %v1634
    %v1637 = vshrl.u32 %v1487, 16
    %v1639 = vrot.slane %v1637, 4
    %v1640 = vshll.u32 %v1487, 16
    %v1642 = vrot.slane %v1640, 5
    %v1643 = vor.u32 %v1639, %v1642
    %v1644 = vrot.slane %v1643, 4
    %v1646 = vshll.u32 %v1503, 16
    %v1648 = vrot.slane %v1646, 5
    %v1649 = vsel %vm769, %v1644, %v1648
    %v1651 = vshrl.u32 %v1488, 16
    %v1653 = vrot.slane %v1651, 4
    %v1654 = vshll.u32 %v1488, 16
    %v1656 = vrot.slane %v1654, 5
    %v1657 = vor.u32 %v1653, %v1656
    %v1658 = vrot.slane %v1657, 4
    %v1660 = vshll.u32 %v1504, 16
    %v1662 = vrot.slane %v1660, 5
    %v1663 = vsel %vm769, %v1658, %v1662
    %v1665 = vshrl.u32 %v1489, 16
    %v1667 = vrot.slane %v1665, 4
    %v1668 = vshll.u32 %v1489, 16
    %v1670 = vrot.slane %v1668, 5
    %v1671 = vor.u32 %v1667, %v1670
    %v1672 = vrot.slane %v1671, 4
    %v1674 = vshll.u32 %v1505, 16
    %v1676 = vrot.slane %v1674, 5
    %v1677 = vsel %vm769, %v1672, %v1676
    %v1679 = vshrl.u32 %v1490, 16
    %v1681 = vrot.slane %v1679, 4
    %v1682 = vshll.u32 %v1490, 16
    %v1684 = vrot.slane %v1682, 5
    %v1685 = vor.u32 %v1681, %v1684
    %v1686 = vrot.slane %v1685, 4
    %v1688 = vshll.u32 %v1506, 16
    %v1690 = vrot.slane %v1688, 5
    %v1691 = vsel %vm769, %v1686, %v1690
    %v1693 = vshrl.u32 %v1491, 16
    %v1695 = vrot.slane %v1693, 4
    %v1696 = vshll.u32 %v1491, 16
    %v1698 = vrot.slane %v1696, 5
    %v1699 = vor.u32 %v1695, %v1698
    %v1700 = vrot.slane %v1699, 4
    %v1702 = vshll.u32 %v1507, 16
    %v1704 = vrot.slane %v1702, 5
    %v1705 = vsel %vm769, %v1700, %v1704
    %v1707 = vshrl.u32 %v1492, 16
    %v1709 = vrot.slane %v1707, 4
    %v1710 = vshll.u32 %v1492, 16
    %v1712 = vrot.slane %v1710, 5
    %v1713 = vor.u32 %v1709, %v1712
    %v1714 = vrot.slane %v1713, 4
    %v1716 = vshll.u32 %v1508, 16
    %v1718 = vrot.slane %v1716, 5
    %v1719 = vsel %vm769, %v1714, %v1718
    %v1721 = vshrl.u32 %v1493, 16
    %v1723 = vrot.slane %v1721, 4
    %v1724 = vshll.u32 %v1493, 16
    %v1726 = vrot.slane %v1724, 5
    %v1727 = vor.u32 %v1723, %v1726
    %v1728 = vrot.slane %v1727, 4
    %v1730 = vshll.u32 %v1509, 16
    %v1732 = vrot.slane %v1730, 5
    %v1733 = vsel %vm769, %v1728, %v1732
    %v1734 = vld [vmem:[%s1477] sm:$0xe]
    %v1735 = vld [vmem:[%s1477 + $0x8] sm:$0xe]
    %v1736 = vld [vmem:[%s1477 + $0x10] sm:$0xe]
    %v1737 = vld [vmem:[%s1477 + $0x18] sm:$0xe]
    %v1738 = vld [vmem:[%s1477 + $0x20] sm:$0xe]
    %v1739 = vld [vmem:[%s1477 + $0x28] sm:$0xe]
    %v1740 = vld [vmem:[%s1477 + $0x30] sm:$0xe]
    %v1741 = vld [vmem:[%s1477 + $0x38] sm:$0xe]
    %v1742 = vld [vmem:[%s1477 + $0x50] sm:$0xe]
    %v1743 = vld [vmem:[%s1477 + $0x58] sm:$0xe]
    %v1744 = vld [vmem:[%s1477 + $0x60] sm:$0xe]
    %v1745 = vld [vmem:[%s1477 + $0x68] sm:$0xe]
    %v1746 = vld [vmem:[%s1477 + $0x70] sm:$0xe]
    %v1747 = vld [vmem:[%s1477 + $0x78] sm:$0xe]
    %v1748 = vld [vmem:[%s1477 + $0x80] sm:$0xe]
    %v1749 = vld [vmem:[%s1477 + $0x88] sm:$0xe]
    %v1782 = vrot.slane %v1734, 5
    %v1783 = vrot.slane %v1782, 4
    %v1784 = vrot.slane %v1494, 5
    %v1785 = vsel %vm1044, %v1783, %v1784
    %v1786 = vrot.slane %v1735, 5
    %v1787 = vrot.slane %v1786, 4
    %v1788 = vrot.slane %v1495, 5
    %v1789 = vsel %vm1044, %v1787, %v1788
    %v1790 = vrot.slane %v1736, 5
    %v1791 = vrot.slane %v1790, 4
    %v1792 = vrot.slane %v1496, 5
    %v1793 = vsel %vm1044, %v1791, %v1792
    %v1794 = vrot.slane %v1737, 5
    %v1795 = vrot.slane %v1794, 4
    %v1796 = vrot.slane %v1497, 5
    %v1797 = vsel %vm1044, %v1795, %v1796
    %v1798 = vrot.slane %v1738, 5
    %v1799 = vrot.slane %v1798, 4
    %v1800 = vrot.slane %v1498, 5
    %v1801 = vsel %vm1044, %v1799, %v1800
    %v1802 = vrot.slane %v1739, 5
    %v1803 = vrot.slane %v1802, 4
    %v1804 = vrot.slane %v1499, 5
    %v1805 = vsel %vm1044, %v1803, %v1804
    %v1806 = vrot.slane %v1740, 5
    %v1807 = vrot.slane %v1806, 4
    %v1808 = vrot.slane %v1500, 5
    %v1809 = vsel %vm1044, %v1807, %v1808
    %v1810 = vrot.slane %v1741, 5
    %v1811 = vrot.slane %v1810, 4
    %v1812 = vrot.slane %v1501, 5
    %v1813 = vsel %vm1044, %v1811, %v1812
    %v1814 = vrot.slane %v1742, 5
    %v1815 = vrot.slane %v1814, 4
    %v1816 = vrot.slane %v1502, 5
    %v1817 = vsel %vm1044, %v1815, %v1816
    %v1818 = vrot.slane %v1743, 5
    %v1819 = vrot.slane %v1818, 4
    %v1820 = vrot.slane %v1503, 5
    %v1821 = vsel %vm1044, %v1819, %v1820
    %v1822 = vrot.slane %v1744, 5
    %v1823 = vrot.slane %v1822, 4
    %v1824 = vrot.slane %v1504, 5
    %v1825 = vsel %vm1044, %v1823, %v1824
    %v1826 = vrot.slane %v1745, 5
    %v1827 = vrot.slane %v1826, 4
    %v1828 = vrot.slane %v1505, 5
    %v1829 = vsel %vm1044, %v1827, %v1828
    %v1830 = vrot.slane %v1746, 5
    %v1831 = vrot.slane %v1830, 4
    %v1832 = vrot.slane %v1506, 5
    %v1833 = vsel %vm1044, %v1831, %v1832
    %v1834 = vrot.slane %v1747, 5
    %v1835 = vrot.slane %v1834, 4
    %v1836 = vrot.slane %v1507, 5
    %v1837 = vsel %vm1044, %v1835, %v1836
    %v1838 = vrot.slane %v1748, 5
    %v1839 = vrot.slane %v1838, 4
    %v1840 = vrot.slane %v1508, 5
    %v1841 = vsel %vm1044, %v1839, %v1840
    %v1842 = vrot.slane %v1749, 5
    %v1843 = vrot.slane %v1842, 4
    %v1844 = vrot.slane %v1509, 5
    %v1845 = vsel %vm1044, %v1843, %v1844
    %v1862 = vunpack.c.l.b16 %v735
    %v1863 = vunpack.c.l.b16 %v736
    %v1864 = vunpack.c.l.b16 %v737
    %v1865 = vunpack.c.l.b16 %v738
    %v1866 = vunpack.c.l.b16 %v739
    %v1867 = vunpack.c.l.b16 %v740
    %v1868 = vunpack.c.l.b16 %v741
    %v1869 = vunpack.c.l.b16 %v742
    %v1870 = vunpack.c.l.b16 %v743
    %v1871 = vunpack.c.l.b16 %v744
    %v1872 = vunpack.c.l.b16 %v745
    %v1873 = vunpack.c.l.b16 %v746
    %v1874 = vunpack.c.l.b16 %v747
    %v1875 = vunpack.c.l.b16 %v748
    %v1876 = vunpack.c.l.b16 %v749
    %v1877 = vunpack.c.l.b16 %v750
    %v1878 = vpack.c.b16 %v1863, %v1862
    %v1879 = vpack.c.b16 %v1865, %v1864
    %v1880 = vpack.c.b16 %v1867, %v1866
    %v1881 = vpack.c.b16 %v1869, %v1868
    %v1882 = vpack.c.b16 %v1871, %v1870
    %v1883 = vpack.c.b16 %v1873, %v1872
    %v1884 = vpack.c.b16 %v1875, %v1874
    %v1885 = vpack.c.b16 %v1877, %v1876
    %v1886 = vunpack.c.l.b16 %v783
    %v1887 = vunpack.c.l.b16 %v797
    %v1888 = vunpack.c.l.b16 %v811
    %v1889 = vunpack.c.l.b16 %v825
    %v1890 = vunpack.c.l.b16 %v839
    %v1891 = vunpack.c.l.b16 %v853
    %v1892 = vunpack.c.l.b16 %v867
    %v1893 = vunpack.c.l.b16 %v881
    %v1894 = vunpack.c.l.b16 %v895
    %v1895 = vunpack.c.l.b16 %v909
    %v1896 = vunpack.c.l.b16 %v923
    %v1897 = vunpack.c.l.b16 %v937
    %v1898 = vunpack.c.l.b16 %v951
    %v1899 = vunpack.c.l.b16 %v965
    %v1900 = vunpack.c.l.b16 %v979
    %v1901 = vunpack.c.l.b16 %v993
    %v1902 = vpack.c.b16 %v1887, %v1886
    %v1903 = vpack.c.b16 %v1889, %v1888
    %v1904 = vpack.c.b16 %v1891, %v1890
    %v1905 = vpack.c.b16 %v1893, %v1892
    %v1906 = vpack.c.b16 %v1895, %v1894
    %v1907 = vpack.c.b16 %v1897, %v1896
    %v1908 = vpack.c.b16 %v1899, %v1898
    %v1909 = vpack.c.b16 %v1901, %v1900
    %1910 = vrot.lane.b32.xlu0 %v1902, 8
    %v1911 = vpop.permute.xlu0 %1910
    %1912 = vrot.lane.b32.xlu0 %v1903, 8
    %v1913 = vpop.permute.xlu0 %1912
    %1914 = vrot.lane.b32.xlu0 %v1904, 8
    %v1915 = vpop.permute.xlu0 %1914
    %1916 = vrot.lane.b32.xlu0 %v1905, 8
    %v1917 = vpop.permute.xlu0 %1916
    %1918 = vrot.lane.b32.xlu0 %v1906, 8
    %v1919 = vpop.permute.xlu0 %1918
    %1920 = vrot.lane.b32.xlu0 %v1907, 8
    %v1921 = vpop.permute.xlu0 %1920
    %1922 = vrot.lane.b32.xlu0 %v1908, 8
    %v1923 = vpop.permute.xlu0 %1922
    %1924 = vrot.lane.b32.xlu0 %v1909, 8
    %v1925 = vpop.permute.xlu0 %1924
    %v1926 = vunpack.c.l.b16 %v1048
    %v1927 = vunpack.c.l.b16 %v1052
    %v1928 = vunpack.c.l.b16 %v1056
    %v1929 = vunpack.c.l.b16 %v1060
    %v1930 = vunpack.c.l.b16 %v1064
    %v1931 = vunpack.c.l.b16 %v1068
    %v1932 = vunpack.c.l.b16 %v1072
    %v1933 = vunpack.c.l.b16 %v1076
    %v1934 = vunpack.c.l.b16 %v1080
    %v1935 = vunpack.c.l.b16 %v1084
    %v1936 = vunpack.c.l.b16 %v1088
    %v1937 = vunpack.c.l.b16 %v1092
    %v1938 = vunpack.c.l.b16 %v1096
    %v1939 = vunpack.c.l.b16 %v1100
    %v1940 = vunpack.c.l.b16 %v1104
    %v1941 = vunpack.c.l.b16 %v1108
    %v1942 = vpack.c.b16 %v1927, %v1926
    %v1943 = vpack.c.b16 %v1929, %v1928
    %v1944 = vpack.c.b16 %v1931, %v1930
    %v1945 = vpack.c.b16 %v1933, %v1932
    %v1946 = vpack.c.b16 %v1935, %v1934
    %v1947 = vpack.c.b16 %v1937, %v1936
    %v1948 = vpack.c.b16 %v1939, %v1938
    %v1949 = vpack.c.b16 %v1941, %v1940
    %1950 = vrot.lane.b32.xlu0 %v1942, 16
    %v1951 = vpop.permute.xlu0 %1950
    %1952 = vrot.lane.b32.xlu0 %v1943, 16
    %v1953 = vpop.permute.xlu0 %1952
    %1954 = vrot.lane.b32.xlu0 %v1944, 16
    %v1955 = vpop.permute.xlu0 %1954
    %1956 = vrot.lane.b32.xlu0 %v1945, 16
    %v1957 = vpop.permute.xlu0 %1956
    %1958 = vrot.lane.b32.xlu0 %v1946, 16
    %v1959 = vpop.permute.xlu0 %1958
    %1960 = vrot.lane.b32.xlu0 %v1947, 16
    %v1961 = vpop.permute.xlu0 %1960
    %1962 = vrot.lane.b32.xlu0 %v1948, 16
    %v1963 = vpop.permute.xlu0 %1962
    %1964 = vrot.lane.b32.xlu0 %v1949, 16
    %v1965 = vpop.permute.xlu0 %1964
    %v1982 = vunpack.c.l.b16 %v1109
    %v1983 = vunpack.c.l.b16 %v1110
    %v1984 = vunpack.c.l.b16 %v1111
    %v1985 = vunpack.c.l.b16 %v1112
    %v1986 = vunpack.c.l.b16 %v1113
    %v1987 = vunpack.c.l.b16 %v1114
    %v1988 = vunpack.c.l.b16 %v1115
    %v1989 = vunpack.c.l.b16 %v1116
    %v1990 = vunpack.c.l.b16 %v1117
    %v1991 = vunpack.c.l.b16 %v1118
    %v1992 = vunpack.c.l.b16 %v1119
    %v1993 = vunpack.c.l.b16 %v1120
    %v1994 = vunpack.c.l.b16 %v1121
    %v1995 = vunpack.c.l.b16 %v1122
    %v1996 = vunpack.c.l.b16 %v1123
    %v1997 = vunpack.c.l.b16 %v1124
    %v1998 = vpack.c.b16 %v1983, %v1982
    %v1999 = vpack.c.b16 %v1985, %v1984
    %v2000 = vpack.c.b16 %v1987, %v1986
    %v2001 = vpack.c.b16 %v1989, %v1988
    %v2002 = vpack.c.b16 %v1991, %v1990
    %v2003 = vpack.c.b16 %v1993, %v1992
    %v2004 = vpack.c.b16 %v1995, %v1994
    %v2005 = vpack.c.b16 %v1997, %v1996
    %2006 = vrot.lane.b32.xlu0 %v1998, 24
    %v2007 = vpop.permute.xlu0 %2006
    %2008 = vrot.lane.b32.xlu0 %v1999, 24
    %v2009 = vpop.permute.xlu0 %2008
    %2010 = vrot.lane.b32.xlu0 %v2000, 24
    %v2011 = vpop.permute.xlu0 %2010
    %2012 = vrot.lane.b32.xlu0 %v2001, 24
    %v2013 = vpop.permute.xlu0 %2012
    %2014 = vrot.lane.b32.xlu0 %v2002, 24
    %v2015 = vpop.permute.xlu0 %2014
    %2016 = vrot.lane.b32.xlu0 %v2003, 24
    %v2017 = vpop.permute.xlu0 %2016
    %2018 = vrot.lane.b32.xlu0 %v2004, 24
    %v2019 = vpop.permute.xlu0 %2018
    %2020 = vrot.lane.b32.xlu0 %v2005, 24
    %v2021 = vpop.permute.xlu0 %2020
    %v2022 = vunpack.c.l.b16 %v1154
    %v2023 = vunpack.c.l.b16 %v1168
    %v2024 = vunpack.c.l.b16 %v1182
    %v2025 = vunpack.c.l.b16 %v1196
    %v2026 = vunpack.c.l.b16 %v1210
    %v2027 = vunpack.c.l.b16 %v1224
    %v2028 = vunpack.c.l.b16 %v1238
    %v2029 = vunpack.c.l.b16 %v1252
    %v2030 = vunpack.c.l.b16 %v1266
    %v2031 = vunpack.c.l.b16 %v1280
    %v2032 = vunpack.c.l.b16 %v1294
    %v2033 = vunpack.c.l.b16 %v1308
    %v2034 = vunpack.c.l.b16 %v1322
    %v2035 = vunpack.c.l.b16 %v1336
    %v2036 = vunpack.c.l.b16 %v1350
    %v2037 = vunpack.c.l.b16 %v1364
    %v2038 = vpack.c.b16 %v2023, %v2022
    %v2039 = vpack.c.b16 %v2025, %v2024
    %v2040 = vpack.c.b16 %v2027, %v2026
    %v2041 = vpack.c.b16 %v2029, %v2028
    %v2042 = vpack.c.b16 %v2031, %v2030
    %v2043 = vpack.c.b16 %v2033, %v2032
    %v2044 = vpack.c.b16 %v2035, %v2034
    %v2045 = vpack.c.b16 %v2037, %v2036
    %2046 = vrot.lane.b32.xlu0 %v2038, 32
    %v2047 = vpop.permute.xlu0 %2046
    %2048 = vrot.lane.b32.xlu0 %v2039, 32
    %v2049 = vpop.permute.xlu0 %2048
    %2050 = vrot.lane.b32.xlu0 %v2040, 32
    %v2051 = vpop.permute.xlu0 %2050
    %2052 = vrot.lane.b32.xlu0 %v2041, 32
    %v2053 = vpop.permute.xlu0 %2052
    %2054 = vrot.lane.b32.xlu0 %v2042, 32
    %v2055 = vpop.permute.xlu0 %2054
    %2056 = vrot.lane.b32.xlu0 %v2043, 32
    %v2057 = vpop.permute.xlu0 %2056
    %2058 = vrot.lane.b32.xlu0 %v2044, 32
    %v2059 = vpop.permute.xlu0 %2058
    %2060 = vrot.lane.b32.xlu0 %v2045, 32
    %v2061 = vpop.permute.xlu0 %2060
    %v2062 = vunpack.c.l.b16 %v1416
    %v2063 = vunpack.c.l.b16 %v1420
    %v2064 = vunpack.c.l.b16 %v1424
    %v2065 = vunpack.c.l.b16 %v1428
    %v2066 = vunpack.c.l.b16 %v1432
    %v2067 = vunpack.c.l.b16 %v1436
    %v2068 = vunpack.c.l.b16 %v1440
    %v2069 = vunpack.c.l.b16 %v1444
    %v2070 = vunpack.c.l.b16 %v1448
    %v2071 = vunpack.c.l.b16 %v1452
    %v2072 = vunpack.c.l.b16 %v1456
    %v2073 = vunpack.c.l.b16 %v1460
    %v2074 = vunpack.c.l.b16 %v1464
    %v2075 = vunpack.c.l.b16 %v1468
    %v2076 = vunpack.c.l.b16 %v1472
    %v2077 = vunpack.c.l.b16 %v1476
    %v2078 = vpack.c.b16 %v2063, %v2062
    %v2079 = vpack.c.b16 %v2065, %v2064
    %v2080 = vpack.c.b16 %v2067, %v2066
    %v2081 = vpack.c.b16 %v2069, %v2068
    %v2082 = vpack.c.b16 %v2071, %v2070
    %v2083 = vpack.c.b16 %v2073, %v2072
    %v2084 = vpack.c.b16 %v2075, %v2074
    %v2085 = vpack.c.b16 %v2077, %v2076
    %2086 = vrot.lane.b32.xlu0 %v2078, 40
    %v2087 = vpop.permute.xlu0 %2086
    %2088 = vrot.lane.b32.xlu0 %v2079, 40
    %v2089 = vpop.permute.xlu0 %2088
    %2090 = vrot.lane.b32.xlu0 %v2080, 40
    %v2091 = vpop.permute.xlu0 %2090
    %2092 = vrot.lane.b32.xlu0 %v2081, 40
    %v2093 = vpop.permute.xlu0 %2092
    %2094 = vrot.lane.b32.xlu0 %v2082, 40
    %v2095 = vpop.permute.xlu0 %2094
    %2096 = vrot.lane.b32.xlu0 %v2083, 40
    %v2097 = vpop.permute.xlu0 %2096
    %2098 = vrot.lane.b32.xlu0 %v2084, 40
    %v2099 = vpop.permute.xlu0 %2098
    %2100 = vrot.lane.b32.xlu0 %v2085, 40
    %v2101 = vpop.permute.xlu0 %2100
    %v2118 = vunpack.c.l.b16 %v1478
    %v2119 = vunpack.c.l.b16 %v1479
    %v2120 = vunpack.c.l.b16 %v1480
    %v2121 = vunpack.c.l.b16 %v1481
    %v2122 = vunpack.c.l.b16 %v1482
    %v2123 = vunpack.c.l.b16 %v1483
    %v2124 = vunpack.c.l.b16 %v1484
    %v2125 = vunpack.c.l.b16 %v1485
    %v2126 = vunpack.c.l.b16 %v1486
    %v2127 = vunpack.c.l.b16 %v1487
    %v2128 = vunpack.c.l.b16 %v1488
    %v2129 = vunpack.c.l.b16 %v1489
    %v2130 = vunpack.c.l.b16 %v1490
    %v2131 = vunpack.c.l.b16 %v1491
    %v2132 = vunpack.c.l.b16 %v1492
    %v2133 = vunpack.c.l.b16 %v1493
    %v2134 = vpack.c.b16 %v2119, %v2118
    %v2135 = vpack.c.b16 %v2121, %v2120
    %v2136 = vpack.c.b16 %v2123, %v2122
    %v2137 = vpack.c.b16 %v2125, %v2124
    %v2138 = vpack.c.b16 %v2127, %v2126
    %v2139 = vpack.c.b16 %v2129, %v2128
    %v2140 = vpack.c.b16 %v2131, %v2130
    %v2141 = vpack.c.b16 %v2133, %v2132
    %2142 = vrot.lane.b32.xlu0 %v2134, 48
    %v2143 = vpop.permute.xlu0 %2142
    %2144 = vrot.lane.b32.xlu0 %v2135, 48
    %v2145 = vpop.permute.xlu0 %2144
    %2146 = vrot.lane.b32.xlu0 %v2136, 48
    %v2147 = vpop.permute.xlu0 %2146
    %2148 = vrot.lane.b32.xlu0 %v2137, 48
    %v2149 = vpop.permute.xlu0 %2148
    %2150 = vrot.lane.b32.xlu0 %v2138, 48
    %v2151 = vpop.permute.xlu0 %2150
    %2152 = vrot.lane.b32.xlu0 %v2139, 48
    %v2153 = vpop.permute.xlu0 %2152
    %2154 = vrot.lane.b32.xlu0 %v2140, 48
    %v2155 = vpop.permute.xlu0 %2154
    %2156 = vrot.lane.b32.xlu0 %v2141, 48
    %v2157 = vpop.permute.xlu0 %2156
    %v2158 = vunpack.c.l.b16 %v1523
    %v2159 = vunpack.c.l.b16 %v1537
    %v2160 = vunpack.c.l.b16 %v1551
    %v2161 = vunpack.c.l.b16 %v1565
    %v2162 = vunpack.c.l.b16 %v1579
    %v2163 = vunpack.c.l.b16 %v1593
    %v2164 = vunpack.c.l.b16 %v1607
    %v2165 = vunpack.c.l.b16 %v1621
    %v2166 = vunpack.c.l.b16 %v1635
    %v2167 = vunpack.c.l.b16 %v1649
    %v2168 = vunpack.c.l.b16 %v1663
    %v2169 = vunpack.c.l.b16 %v1677
    %v2170 = vunpack.c.l.b16 %v1691
    %v2171 = vunpack.c.l.b16 %v1705
    %v2172 = vunpack.c.l.b16 %v1719
    %v2173 = vunpack.c.l.b16 %v1733
    %v2174 = vpack.c.b16 %v2159, %v2158
    %v2175 = vpack.c.b16 %v2161, %v2160
    %v2176 = vpack.c.b16 %v2163, %v2162
    %v2177 = vpack.c.b16 %v2165, %v2164
    %v2178 = vpack.c.b16 %v2167, %v2166
    %v2179 = vpack.c.b16 %v2169, %v2168
    %v2180 = vpack.c.b16 %v2171, %v2170
    %v2181 = vpack.c.b16 %v2173, %v2172
    %2182 = vrot.lane.b32.xlu0 %v2174, 56
    %v2183 = vpop.permute.xlu0 %2182
    %2184 = vrot.lane.b32.xlu0 %v2175, 56
    %v2185 = vpop.permute.xlu0 %2184
    %2186 = vrot.lane.b32.xlu0 %v2176, 56
    %v2187 = vpop.permute.xlu0 %2186
    %2188 = vrot.lane.b32.xlu0 %v2177, 56
    %v2189 = vpop.permute.xlu0 %2188
    %2190 = vrot.lane.b32.xlu0 %v2178, 56
    %v2191 = vpop.permute.xlu0 %2190
    %2192 = vrot.lane.b32.xlu0 %v2179, 56
    %v2193 = vpop.permute.xlu0 %2192
    %2194 = vrot.lane.b32.xlu0 %v2180, 56
    %v2195 = vpop.permute.xlu0 %2194
    %2196 = vrot.lane.b32.xlu0 %v2181, 56
    %v2197 = vpop.permute.xlu0 %2196
    %v2198 = vunpack.c.l.b16 %v1785
    %v2199 = vunpack.c.l.b16 %v1789
    %v2200 = vunpack.c.l.b16 %v1793
    %v2201 = vunpack.c.l.b16 %v1797
    %v2202 = vunpack.c.l.b16 %v1801
    %v2203 = vunpack.c.l.b16 %v1805
    %v2204 = vunpack.c.l.b16 %v1809
    %v2205 = vunpack.c.l.b16 %v1813
    %v2206 = vunpack.c.l.b16 %v1817
    %v2207 = vunpack.c.l.b16 %v1821
    %v2208 = vunpack.c.l.b16 %v1825
    %v2209 = vunpack.c.l.b16 %v1829
    %v2210 = vunpack.c.l.b16 %v1833
    %v2211 = vunpack.c.l.b16 %v1837
    %v2212 = vunpack.c.l.b16 %v1841
    %v2213 = vunpack.c.l.b16 %v1845
    %v2214 = vpack.c.b16 %v2199, %v2198
    %v2215 = vpack.c.b16 %v2201, %v2200
    %v2216 = vpack.c.b16 %v2203, %v2202
    %v2217 = vpack.c.b16 %v2205, %v2204
    %v2218 = vpack.c.b16 %v2207, %v2206
    %v2219 = vpack.c.b16 %v2209, %v2208
    %v2220 = vpack.c.b16 %v2211, %v2210
    %v2221 = vpack.c.b16 %v2213, %v2212
    %2222 = vrot.lane.b32.xlu0 %v2214, 64
    %v2223 = vpop.permute.xlu0 %2222
    %2224 = vrot.lane.b32.xlu0 %v2215, 64
    %v2225 = vpop.permute.xlu0 %2224
    %2226 = vrot.lane.b32.xlu0 %v2216, 64
    %v2227 = vpop.permute.xlu0 %2226
    %2228 = vrot.lane.b32.xlu0 %v2217, 64
    %v2229 = vpop.permute.xlu0 %2228
    %2230 = vrot.lane.b32.xlu0 %v2218, 64
    %v2231 = vpop.permute.xlu0 %2230
    %2232 = vrot.lane.b32.xlu0 %v2219, 64
    %v2233 = vpop.permute.xlu0 %2232
    %2234 = vrot.lane.b32.xlu0 %v2220, 64
    %v2235 = vpop.permute.xlu0 %2234
    %2236 = vrot.lane.b32.xlu0 %v2221, 64
    %v2237 = vpop.permute.xlu0 %2236
    %vm2238 = vcmask 64512
    %v2241 = vsel %vm2238, %v1878, %v1911
    %v2244 = vsel %vm2238, %v1879, %v1913
    %v2247 = vsel %vm2238, %v1880, %v1915
    %v2250 = vsel %vm2238, %v1881, %v1917
    %v2253 = vsel %vm2238, %v1882, %v1919
    %v2256 = vsel %vm2238, %v1883, %v1921
    %v2259 = vsel %vm2238, %v1884, %v1923
    %v2262 = vsel %vm2238, %v1885, %v1925
    %vm2263 = vcmask 130048
    %v2265 = vsel %vm2263, %v2241, %v1951
    %v2267 = vsel %vm2263, %v2244, %v1953
    %v2269 = vsel %vm2263, %v2247, %v1955
    %v2271 = vsel %vm2263, %v2250, %v1957
    %v2273 = vsel %vm2263, %v2253, %v1959
    %v2275 = vsel %vm2263, %v2256, %v1961
    %v2277 = vsel %vm2263, %v2259, %v1963
    %v2279 = vsel %vm2263, %v2262, %v1965
    %vm2280 = vcmask 195584
    %v2282 = vsel %vm2280, %v2265, %v2007
    %v2284 = vsel %vm2280, %v2267, %v2009
    %v2286 = vsel %vm2280, %v2269, %v2011
    %v2288 = vsel %vm2280, %v2271, %v2013
    %v2290 = vsel %vm2280, %v2273, %v2015
    %v2292 = vsel %vm2280, %v2275, %v2017
    %v2294 = vsel %vm2280, %v2277, %v2019
    %v2296 = vsel %vm2280, %v2279, %v2021
    %vm2297 = vcmask 261120
    %v2299 = vsel %vm2297, %v2282, %v2047
    %v2301 = vsel %vm2297, %v2284, %v2049
    %v2303 = vsel %vm2297, %v2286, %v2051
    %v2305 = vsel %vm2297, %v2288, %v2053
    %v2307 = vsel %vm2297, %v2290, %v2055
    %v2309 = vsel %vm2297, %v2292, %v2057
    %v2311 = vsel %vm2297, %v2294, %v2059
    %v2313 = vsel %vm2297, %v2296, %v2061
    %vm2314 = vcmask 326656
    %v2316 = vsel %vm2314, %v2299, %v2087
    %v2318 = vsel %vm2314, %v2301, %v2089
    %v2320 = vsel %vm2314, %v2303, %v2091
    %v2322 = vsel %vm2314, %v2305, %v2093
    %v2324 = vsel %vm2314, %v2307, %v2095
    %v2326 = vsel %vm2314, %v2309, %v2097
    %v2328 = vsel %vm2314, %v2311, %v2099
    %v2330 = vsel %vm2314, %v2313, %v2101
    %vm2331 = vcmask 392192
    %v2333 = vsel %vm2331, %v2316, %v2143
    %v2335 = vsel %vm2331, %v2318, %v2145
    %v2337 = vsel %vm2331, %v2320, %v2147
    %v2339 = vsel %vm2331, %v2322, %v2149
    %v2341 = vsel %vm2331, %v2324, %v2151
    %v2343 = vsel %vm2331, %v2326, %v2153
    %v2345 = vsel %vm2331, %v2328, %v2155
    %v2347 = vsel %vm2331, %v2330, %v2157
    %vm2348 = vcmask 457728
    %v2350 = vsel %vm2348, %v2333, %v2183
    %v2352 = vsel %vm2348, %v2335, %v2185
    %v2354 = vsel %vm2348, %v2337, %v2187
    %v2356 = vsel %vm2348, %v2339, %v2189
    %v2358 = vsel %vm2348, %v2341, %v2191
    %v2360 = vsel %vm2348, %v2343, %v2193
    %v2362 = vsel %vm2348, %v2345, %v2195
    %v2364 = vsel %vm2348, %v2347, %v2197
    %vm2365 = vcmask 523264
    %v2367 = vsel %vm2365, %v2350, %v2223
    %v2369 = vsel %vm2365, %v2352, %v2225
    %v2371 = vsel %vm2365, %v2354, %v2227
    %v2373 = vsel %vm2365, %v2356, %v2229
    %v2375 = vsel %vm2365, %v2358, %v2231
    %v2377 = vsel %vm2365, %v2360, %v2233
    %v2379 = vsel %vm2365, %v2362, %v2235
    %v2381 = vsel %vm2365, %v2364, %v2237
    %v2382 = vld [vmem:[%s1] sm:$0xf]
    %v2383 = vld [vmem:[%s1 + $0x4] sm:$0xf]
    %v2384 = vld [vmem:[%s1 + $0x8] sm:$0xf]
    %v2385 = vld [vmem:[%s1 + $0xc] sm:$0xf]
    %v2386 = vld [vmem:[%s1 + $0x10] sm:$0xf]
    %v2387 = vld [vmem:[%s1 + $0x14] sm:$0xf]
    %v2388 = vld [vmem:[%s1 + $0x18] sm:$0xf]
    %v2389 = vld [vmem:[%s1 + $0x1c] sm:$0xf]
    %v2390 = vld [vmem:[%s1 + $0x20] sm:$0xf]
    %v2400 = vunpack.c.l.b16 %v2382
    %v2401 = vunpack.c.l.b16 %v2383
    %v2402 = vunpack.c.l.b16 %v2384
    %v2403 = vunpack.c.l.b16 %v2385
    %v2404 = vunpack.c.l.b16 %v2386
    %v2405 = vunpack.c.l.b16 %v2387
    %v2406 = vunpack.c.l.b16 %v2388
    %v2407 = vunpack.c.l.b16 %v2389
    %v2408 = vunpack.c.l.b16 %v2390
    %v2409 = vpack.c.b16 %v2401, %v2400
    %v2410 = vpack.c.b16 %v2403, %v2402
    %v2411 = vpack.c.b16 %v2405, %v2404
    %v2412 = vpack.c.b16 %v2407, %v2406
    %v2413 = vpack.c.b16 %v2408, %v2408
    %vm2418 = vcmask 588800
    %v2419 = vsel %vm2418, %v2367, 0
    %v2421 = vsel %vm2418, %v2369, 0
    %v2423 = vsel %vm2418, %v2371, 0
    %v2425 = vsel %vm2418, %v2373, 0
    %v2427 = vsel %vm2418, %v2375, 0
    %v2429 = vsel %vm2418, %v2377, 0
    %v2431 = vsel %vm2418, %v2379, 0
    %v2433 = vsel %vm2418, %v2381, 0
    %vm2435 = vcmask 1043456
    %v2437 = vsel %vm2435, %v2413, 0
    %2439 = vmatpush.bf16.msra.mxu0 0
    %2440 = vmatpush.bf16.msra.mxu0 0
    %2441 = vmatpush.bf16.msra.mxu0 0
    %2442 = vmatpush.bf16.msra.mxu0 %v2437
    %2443 = vmatpush.bf16.msra.mxu0 %v2412
    %2444 = vmatpush.bf16.msra.mxu0 %v2411
    %2445 = vmatpush.bf16.msra.mxu0 %v2410
    %2446 = vmatpush.bf16.msra.mxu0 %v2409
    %2447 = vmatmul.bf16.gmra.mxu0 %v2419
    %v2448 = vpop.f32.mrf.mxu0
    %v2449 = vadd.f32 0.0, %v2448
    %v2450 = vpop.f32.mrf.mxu0
    %v2451 = vadd.f32 0.0, %v2450
    %2452 = vmatmul.bf16.gmra.mxu0 %v2421
    %v2453 = vpop.f32.mrf.mxu0
    %v2454 = vadd.f32 0.0, %v2453
    %v2455 = vpop.f32.mrf.mxu0
    %v2456 = vadd.f32 0.0, %v2455
    %2457 = vmatmul.bf16.gmra.mxu0 %v2423
    %v2458 = vpop.f32.mrf.mxu0
    %v2459 = vadd.f32 0.0, %v2458
    %v2460 = vpop.f32.mrf.mxu0
    %v2461 = vadd.f32 0.0, %v2460
    %2462 = vmatmul.bf16.gmra.mxu0 %v2425
    %v2463 = vpop.f32.mrf.mxu0
    %v2464 = vadd.f32 0.0, %v2463
    %v2465 = vpop.f32.mrf.mxu0
    %v2466 = vadd.f32 0.0, %v2465
    %2467 = vmatmul.bf16.gmra.mxu0 %v2427
    %v2468 = vpop.f32.mrf.mxu0
    %v2469 = vadd.f32 0.0, %v2468
    %v2470 = vpop.f32.mrf.mxu0
    %v2471 = vadd.f32 0.0, %v2470
    %2472 = vmatmul.bf16.gmra.mxu0 %v2429
    %v2473 = vpop.f32.mrf.mxu0
    %v2474 = vadd.f32 0.0, %v2473
    %v2475 = vpop.f32.mrf.mxu0
    %v2476 = vadd.f32 0.0, %v2475
    %2477 = vmatmul.bf16.gmra.mxu0 %v2431
    %v2478 = vpop.f32.mrf.mxu0
    %v2479 = vadd.f32 0.0, %v2478
    %v2480 = vpop.f32.mrf.mxu0
    %v2481 = vadd.f32 0.0, %v2480
    %2482 = vmatmul.bf16.gmra.mxu0 %v2433
    %v2483 = vpop.f32.mrf.mxu0
    %v2484 = vadd.f32 0.0, %v2483
    %v2485 = vpop.f32.mrf.mxu0
    %v2486 = vadd.f32 0.0, %v2485
    %2487 = vdwg.mxu0
    %v2488 = vsel %vm2238, %v2449, 0.0
    %v2489 = vsel %vm2238, %v2451, 0.0
    %v2490 = vadd.f32 %v2488, %v2489
    %v2491 = vsel %vm2238, %v2454, 0.0
    %v2492 = vadd.f32 %v2490, %v2491
    %v2493 = vsel %vm2238, %v2456, 0.0
    %v2494 = vadd.f32 %v2492, %v2493
    %v2495 = vsel %vm2238, %v2459, 0.0
    %v2496 = vadd.f32 %v2494, %v2495
    %v2497 = vsel %vm2238, %v2461, 0.0
    %v2498 = vadd.f32 %v2496, %v2497
    %v2499 = vsel %vm2238, %v2464, 0.0
    %v2500 = vadd.f32 %v2498, %v2499
    %v2501 = vsel %vm2238, %v2466, 0.0
    %v2502 = vadd.f32 %v2500, %v2501
    %v2503 = vsel %vm2238, %v2469, 0.0
    %v2504 = vadd.f32 %v2502, %v2503
    %v2505 = vsel %vm2238, %v2471, 0.0
    %v2506 = vadd.f32 %v2504, %v2505
    %v2507 = vsel %vm2238, %v2474, 0.0
    %v2508 = vadd.f32 %v2506, %v2507
    %v2509 = vsel %vm2238, %v2476, 0.0
    %v2510 = vadd.f32 %v2508, %v2509
    %v2511 = vsel %vm2238, %v2479, 0.0
    %v2512 = vadd.f32 %v2510, %v2511
    %v2513 = vsel %vm2238, %v2481, 0.0
    %v2514 = vadd.f32 %v2512, %v2513
    %v2515 = vsel %vm2238, %v2484, 0.0
    %v2516 = vadd.f32 %v2514, %v2515
    %v2517 = vsel %vm2238, %v2486, 0.0
    %v2518 = vadd.f32 %v2516, %v2517
    %v2519 = vrot.slane %v2518, 4
    %v2520 = vadd.f32 %v2518, %v2519
    %v2521 = vrot.slane %v2520, 2
    %v2522 = vadd.f32 %v2520, %v2521
    %v2523 = vrot.slane %v2522, 1
    %v2524 = vadd.f32 %v2522, %v2523
    %v2525 = vmul.f32 %v2524, 0.0078125
    %v2526 = vsub.f32 %v2449, %v2525
    %v2527 = vsub.f32 %v2451, %v2525
    %v2528 = vsub.f32 %v2454, %v2525
    %v2529 = vsub.f32 %v2456, %v2525
    %v2530 = vsub.f32 %v2459, %v2525
    %v2531 = vsub.f32 %v2461, %v2525
    %v2532 = vsub.f32 %v2464, %v2525
    %v2533 = vsub.f32 %v2466, %v2525
    %v2534 = vsub.f32 %v2469, %v2525
    %v2535 = vsub.f32 %v2471, %v2525
    %v2536 = vsub.f32 %v2474, %v2525
    %v2537 = vsub.f32 %v2476, %v2525
    %v2538 = vsub.f32 %v2479, %v2525
    %v2539 = vsub.f32 %v2481, %v2525
    %v2540 = vsub.f32 %v2484, %v2525
    %v2541 = vsub.f32 %v2486, %v2525
    %v2542 = vmul.f32 %v2526, %v2526
    %v2543 = vmul.f32 %v2527, %v2527
    %v2544 = vmul.f32 %v2528, %v2528
    %v2545 = vmul.f32 %v2529, %v2529
    %v2546 = vmul.f32 %v2530, %v2530
    %v2547 = vmul.f32 %v2531, %v2531
    %v2548 = vmul.f32 %v2532, %v2532
    %v2549 = vmul.f32 %v2533, %v2533
    %v2550 = vmul.f32 %v2534, %v2534
    %v2551 = vmul.f32 %v2535, %v2535
    %v2552 = vmul.f32 %v2536, %v2536
    %v2553 = vmul.f32 %v2537, %v2537
    %v2554 = vmul.f32 %v2538, %v2538
    %v2555 = vmul.f32 %v2539, %v2539
    %v2556 = vmul.f32 %v2540, %v2540
    %v2557 = vmul.f32 %v2541, %v2541
    %v2558 = vsel %vm2238, %v2542, 0.0
    %v2559 = vsel %vm2238, %v2543, 0.0
    %v2560 = vadd.f32 %v2558, %v2559
    %v2561 = vsel %vm2238, %v2544, 0.0
    %v2562 = vadd.f32 %v2560, %v2561
    %v2563 = vsel %vm2238, %v2545, 0.0
    %v2564 = vadd.f32 %v2562, %v2563
    %v2565 = vsel %vm2238, %v2546, 0.0
    %v2566 = vadd.f32 %v2564, %v2565
    %v2567 = vsel %vm2238, %v2547, 0.0
    %v2568 = vadd.f32 %v2566, %v2567
    %v2569 = vsel %vm2238, %v2548, 0.0
    %v2570 = vadd.f32 %v2568, %v2569
    %v2571 = vsel %vm2238, %v2549, 0.0
    %v2572 = vadd.f32 %v2570, %v2571
    %v2573 = vsel %vm2238, %v2550, 0.0
    %v2574 = vadd.f32 %v2572, %v2573
    %v2575 = vsel %vm2238, %v2551, 0.0
    %v2576 = vadd.f32 %v2574, %v2575
    %v2577 = vsel %vm2238, %v2552, 0.0
    %v2578 = vadd.f32 %v2576, %v2577
    %v2579 = vsel %vm2238, %v2553, 0.0
    %v2580 = vadd.f32 %v2578, %v2579
    %v2581 = vsel %vm2238, %v2554, 0.0
    %v2582 = vadd.f32 %v2580, %v2581
    %v2583 = vsel %vm2238, %v2555, 0.0
    %v2584 = vadd.f32 %v2582, %v2583
    %v2585 = vsel %vm2238, %v2556, 0.0
    %v2586 = vadd.f32 %v2584, %v2585
    %v2587 = vsel %vm2238, %v2557, 0.0
    %v2588 = vadd.f32 %v2586, %v2587
    %v2589 = vrot.slane %v2588, 4
    %v2590 = vadd.f32 %v2588, %v2589
    %v2591 = vrot.slane %v2590, 2
    %v2592 = vadd.f32 %v2590, %v2591
    %v2593 = vrot.slane %v2592, 1
    %v2594 = vadd.f32 %v2592, %v2593
    %v2595 = vmul.f32 %v2594, 0.0078125
    %v2596 = vadd.f32 %v2595, 1e-05
    %v2597 = vrsqrt.pop %v2596
    %v2598 = vmul.f32 %v2597, %v2596
    %v2599 = vmul.f32 %v2598, %v2597
    %v2600 = vmul.f32 0.5, %v2599
    %v2601 = vsub.f32 1.5, %v2600
    %v2602 = vmul.f32 %v2597, %v2601
    %vm2603 = vweird.f32 %v2596
    %vm2604 = vweird.f32 %v2597
    %vm2605 = vmor %vm2603, %vm2604
    %v2606 = vsel %vm2605, %v2597, %v2602
    %v2607 = vld [vmem:[%s2] sm:$0x1]
    %v2608 = vmul.f32 %v2606, %v2607
    %v2609 = vperm.slane %v2608, 0
    %v2610 = vmul.f32 %v2526, %v2609
    %v2611 = vmul.f32 %v2527, %v2609
    %v2612 = vmul.f32 %v2528, %v2609
    %v2613 = vmul.f32 %v2529, %v2609
    %v2614 = vmul.f32 %v2530, %v2609
    %v2615 = vmul.f32 %v2531, %v2609
    %v2616 = vmul.f32 %v2532, %v2609
    %v2617 = vmul.f32 %v2533, %v2609
    %v2618 = vmul.f32 %v2534, %v2609
    %v2619 = vmul.f32 %v2535, %v2609
    %v2620 = vmul.f32 %v2536, %v2609
    %v2621 = vmul.f32 %v2537, %v2609
    %v2622 = vmul.f32 %v2538, %v2609
    %v2623 = vmul.f32 %v2539, %v2609
    %v2624 = vmul.f32 %v2540, %v2609
    %v2625 = vmul.f32 %v2541, %v2609
    %v2626 = vld [vmem:[%s3] sm:$0x1]
    %v2628 = vperm.slane %v2626, 0
    %v2630 = vadd.f32 %v2610, %v2628
    %v2631 = vadd.f32 %v2611, %v2628
    %v2632 = vadd.f32 %v2612, %v2628
    %v2633 = vadd.f32 %v2613, %v2628
    %v2634 = vadd.f32 %v2614, %v2628
    %v2635 = vadd.f32 %v2615, %v2628
    %v2636 = vadd.f32 %v2616, %v2628
    %v2637 = vadd.f32 %v2617, %v2628
    %v2638 = vadd.f32 %v2618, %v2628
    %v2639 = vadd.f32 %v2619, %v2628
    %v2640 = vadd.f32 %v2620, %v2628
    %v2641 = vadd.f32 %v2621, %v2628
    %v2642 = vadd.f32 %v2622, %v2628
    %v2643 = vadd.f32 %v2623, %v2628
    %v2644 = vadd.f32 %v2624, %v2628
    %v2645 = vadd.f32 %v2625, %v2628
    %v2646 = vmax.f32 %v2630, 0.0
    %v2647 = vmax.f32 %v2631, 0.0
    %v2648 = vmax.f32 %v2632, 0.0
    %v2649 = vmax.f32 %v2633, 0.0
    %v2650 = vmax.f32 %v2634, 0.0
    %v2651 = vmax.f32 %v2635, 0.0
    %v2652 = vmax.f32 %v2636, 0.0
    %v2653 = vmax.f32 %v2637, 0.0
    %v2654 = vmax.f32 %v2638, 0.0
    %v2655 = vmax.f32 %v2639, 0.0
    %v2656 = vmax.f32 %v2640, 0.0
    %v2657 = vmax.f32 %v2641, 0.0
    %v2658 = vmax.f32 %v2642, 0.0
    %v2659 = vmax.f32 %v2643, 0.0
    %v2660 = vmax.f32 %v2644, 0.0
    %v2661 = vmax.f32 %v2645, 0.0
    %v2662 = vpack.c.bf16 %v2646, %v2646
    %v2663 = vpack.c.bf16 %v2647, %v2647
    %v2664 = vpack.c.bf16 %v2648, %v2648
    %v2665 = vpack.c.bf16 %v2649, %v2649
    %v2666 = vpack.c.bf16 %v2650, %v2650
    %v2667 = vpack.c.bf16 %v2651, %v2651
    %v2668 = vpack.c.bf16 %v2652, %v2652
    %v2669 = vpack.c.bf16 %v2653, %v2653
    %v2670 = vpack.c.bf16 %v2654, %v2654
    %v2671 = vpack.c.bf16 %v2655, %v2655
    %v2672 = vpack.c.bf16 %v2656, %v2656
    %v2673 = vpack.c.bf16 %v2657, %v2657
    %v2674 = vpack.c.bf16 %v2658, %v2658
    %v2675 = vpack.c.bf16 %v2659, %v2659
    %v2676 = vpack.c.bf16 %v2660, %v2660
    %v2677 = vpack.c.bf16 %v2661, %v2661
    %v2679 = vshrl.u32 %v2662, 16
    %v2681 = vrot.slane %v2679, 7
    %v2682 = vshll.u32 %v2662, 16
    %v2684 = vor.u32 %v2681, %v2682
    %v2685 = vrot.slane %v2681, 4
    %v2687 = vshrl.u32 %v2663, 16
    %v2689 = vrot.slane %v2687, 7
    %v2690 = vshll.u32 %v2663, 16
    %v2692 = vor.u32 %v2689, %v2690
    %v2693 = vrot.slane %v2689, 4
    %v2695 = vshrl.u32 %v2664, 16
    %v2697 = vrot.slane %v2695, 7
    %v2698 = vshll.u32 %v2664, 16
    %v2700 = vor.u32 %v2697, %v2698
    %v2701 = vrot.slane %v2697, 4
    %v2703 = vshrl.u32 %v2665, 16
    %v2705 = vrot.slane %v2703, 7
    %v2706 = vshll.u32 %v2665, 16
    %v2708 = vor.u32 %v2705, %v2706
    %v2709 = vrot.slane %v2705, 4
    %v2711 = vshrl.u32 %v2666, 16
    %v2713 = vrot.slane %v2711, 7
    %v2714 = vshll.u32 %v2666, 16
    %v2716 = vor.u32 %v2713, %v2714
    %v2717 = vrot.slane %v2713, 4
    %v2719 = vshrl.u32 %v2667, 16
    %v2721 = vrot.slane %v2719, 7
    %v2722 = vshll.u32 %v2667, 16
    %v2724 = vor.u32 %v2721, %v2722
    %v2725 = vrot.slane %v2721, 4
    %v2727 = vshrl.u32 %v2668, 16
    %v2729 = vrot.slane %v2727, 7
    %v2730 = vshll.u32 %v2668, 16
    %v2732 = vor.u32 %v2729, %v2730
    %v2733 = vrot.slane %v2729, 4
    %v2735 = vshrl.u32 %v2669, 16
    %v2737 = vrot.slane %v2735, 7
    %v2738 = vshll.u32 %v2669, 16
    %v2740 = vor.u32 %v2737, %v2738
    %v2741 = vrot.slane %v2737, 4
    %v2743 = vshrl.u32 %v2670, 16
    %v2745 = vrot.slane %v2743, 7
    %v2746 = vshll.u32 %v2670, 16
    %v2748 = vor.u32 %v2745, %v2746
    %v2749 = vrot.slane %v2745, 4
    %v2751 = vshrl.u32 %v2671, 16
    %v2753 = vrot.slane %v2751, 7
    %v2754 = vshll.u32 %v2671, 16
    %v2756 = vor.u32 %v2753, %v2754
    %v2757 = vrot.slane %v2753, 4
    %v2759 = vshrl.u32 %v2672, 16
    %v2761 = vrot.slane %v2759, 7
    %v2762 = vshll.u32 %v2672, 16
    %v2764 = vor.u32 %v2761, %v2762
    %v2765 = vrot.slane %v2761, 4
    %v2767 = vshrl.u32 %v2673, 16
    %v2769 = vrot.slane %v2767, 7
    %v2770 = vshll.u32 %v2673, 16
    %v2772 = vor.u32 %v2769, %v2770
    %v2773 = vrot.slane %v2769, 4
    %v2775 = vshrl.u32 %v2674, 16
    %v2777 = vrot.slane %v2775, 7
    %v2778 = vshll.u32 %v2674, 16
    %v2780 = vor.u32 %v2777, %v2778
    %v2781 = vrot.slane %v2777, 4
    %v2783 = vshrl.u32 %v2675, 16
    %v2785 = vrot.slane %v2783, 7
    %v2786 = vshll.u32 %v2675, 16
    %v2788 = vor.u32 %v2785, %v2786
    %v2789 = vrot.slane %v2785, 4
    %v2791 = vshrl.u32 %v2676, 16
    %v2793 = vrot.slane %v2791, 7
    %v2794 = vshll.u32 %v2676, 16
    %v2796 = vor.u32 %v2793, %v2794
    %v2797 = vrot.slane %v2793, 4
    %v2799 = vshrl.u32 %v2677, 16
    %v2801 = vrot.slane %v2799, 7
    %v2802 = vshll.u32 %v2677, 16
    %v2804 = vor.u32 %v2801, %v2802
    %v2805 = vrot.slane %v2801, 4
    %v2838 = vsel %vm638, %v2684, %v1109
    %2839 = vst [vmem:[%s55] sm:$0xf] %v2838
    %v2840 = vld [vmem:[%s55 + $0x4] sm:$0x1]
    %v2841 = vsel %vm58, %v2685, %v2840
    %2842 = vst [vmem:[%s55 + $0x4] sm:$0x1] %v2841
    %v2843 = vld [vmem:[%s55 + $0x8] sm:$0xf]
    %v2844 = vsel %vm638, %v2692, %v2843
    %2845 = vst [vmem:[%s55 + $0x8] sm:$0xf] %v2844
    %v2846 = vld [vmem:[%s55 + $0xc] sm:$0x1]
    %v2847 = vsel %vm58, %v2693, %v2846
    %2848 = vst [vmem:[%s55 + $0xc] sm:$0x1] %v2847
    %v2849 = vld [vmem:[%s55 + $0x10] sm:$0xf]
    %v2850 = vsel %vm638, %v2700, %v2849
    %2851 = vst [vmem:[%s55 + $0x10] sm:$0xf] %v2850
    %v2852 = vld [vmem:[%s55 + $0x14] sm:$0x1]
    %v2853 = vsel %vm58, %v2701, %v2852
    %2854 = vst [vmem:[%s55 + $0x14] sm:$0x1] %v2853
    %v2855 = vld [vmem:[%s55 + $0x18] sm:$0xf]
    %v2856 = vsel %vm638, %v2708, %v2855
    %2857 = vst [vmem:[%s55 + $0x18] sm:$0xf] %v2856
    %v2858 = vld [vmem:[%s55 + $0x1c] sm:$0x1]
    %v2859 = vsel %vm58, %v2709, %v2858
    %2860 = vst [vmem:[%s55 + $0x1c] sm:$0x1] %v2859
    %v2861 = vld [vmem:[%s55 + $0x20] sm:$0xf]
    %v2862 = vsel %vm638, %v2716, %v2861
    %2863 = vst [vmem:[%s55 + $0x20] sm:$0xf] %v2862
    %v2864 = vld [vmem:[%s55 + $0x24] sm:$0x1]
    %v2865 = vsel %vm58, %v2717, %v2864
    %2866 = vst [vmem:[%s55 + $0x24] sm:$0x1] %v2865
    %v2867 = vld [vmem:[%s55 + $0x28] sm:$0xf]
    %v2868 = vsel %vm638, %v2724, %v2867
    %2869 = vst [vmem:[%s55 + $0x28] sm:$0xf] %v2868
    %v2870 = vld [vmem:[%s55 + $0x2c] sm:$0x1]
    %v2871 = vsel %vm58, %v2725, %v2870
    %2872 = vst [vmem:[%s55 + $0x2c] sm:$0x1] %v2871
    %v2873 = vld [vmem:[%s55 + $0x30] sm:$0xf]
    %v2874 = vsel %vm638, %v2732, %v2873
    %2875 = vst [vmem:[%s55 + $0x30] sm:$0xf] %v2874
    %v2876 = vld [vmem:[%s55 + $0x34] sm:$0x1]
    %v2877 = vsel %vm58, %v2733, %v2876
    %2878 = vst [vmem:[%s55 + $0x34] sm:$0x1] %v2877
    %v2879 = vld [vmem:[%s55 + $0x38] sm:$0xf]
    %v2880 = vsel %vm638, %v2740, %v2879
    %2881 = vst [vmem:[%s55 + $0x38] sm:$0xf] %v2880
    %v2882 = vld [vmem:[%s55 + $0x3c] sm:$0x1]
    %v2883 = vsel %vm58, %v2741, %v2882
    %2884 = vst [vmem:[%s55 + $0x3c] sm:$0x1] %v2883
    %v2885 = vld [vmem:[%s55 + $0x50] sm:$0xf]
    %v2886 = vsel %vm638, %v2748, %v2885
    %2887 = vst [vmem:[%s55 + $0x50] sm:$0xf] %v2886
    %v2888 = vld [vmem:[%s55 + $0x54] sm:$0x1]
    %v2889 = vsel %vm58, %v2749, %v2888
    %2890 = vst [vmem:[%s55 + $0x54] sm:$0x1] %v2889
    %v2891 = vld [vmem:[%s55 + $0x58] sm:$0xf]
    %v2892 = vsel %vm638, %v2756, %v2891
    %2893 = vst [vmem:[%s55 + $0x58] sm:$0xf] %v2892
    %v2894 = vld [vmem:[%s55 + $0x5c] sm:$0x1]
    %v2895 = vsel %vm58, %v2757, %v2894
    %2896 = vst [vmem:[%s55 + $0x5c] sm:$0x1] %v2895
    %v2897 = vld [vmem:[%s55 + $0x60] sm:$0xf]
    %v2898 = vsel %vm638, %v2764, %v2897
    %2899 = vst [vmem:[%s55 + $0x60] sm:$0xf] %v2898
    %v2900 = vld [vmem:[%s55 + $0x64] sm:$0x1]
    %v2901 = vsel %vm58, %v2765, %v2900
    %2902 = vst [vmem:[%s55 + $0x64] sm:$0x1] %v2901
    %v2903 = vld [vmem:[%s55 + $0x68] sm:$0xf]
    %v2904 = vsel %vm638, %v2772, %v2903
    %2905 = vst [vmem:[%s55 + $0x68] sm:$0xf] %v2904
    %v2906 = vld [vmem:[%s55 + $0x6c] sm:$0x1]
    %v2907 = vsel %vm58, %v2773, %v2906
    %2908 = vst [vmem:[%s55 + $0x6c] sm:$0x1] %v2907
    %v2909 = vld [vmem:[%s55 + $0x70] sm:$0xf]
    %v2910 = vsel %vm638, %v2780, %v2909
    %2911 = vst [vmem:[%s55 + $0x70] sm:$0xf] %v2910
    %v2912 = vld [vmem:[%s55 + $0x74] sm:$0x1]
    %v2913 = vsel %vm58, %v2781, %v2912
    %2914 = vst [vmem:[%s55 + $0x74] sm:$0x1] %v2913
    %v2915 = vld [vmem:[%s55 + $0x78] sm:$0xf]
    %v2916 = vsel %vm638, %v2788, %v2915
    %2917 = vst [vmem:[%s55 + $0x78] sm:$0xf] %v2916
    %v2918 = vld [vmem:[%s55 + $0x7c] sm:$0x1]
    %v2919 = vsel %vm58, %v2789, %v2918
    %2920 = vst [vmem:[%s55 + $0x7c] sm:$0x1] %v2919
    %v2921 = vld [vmem:[%s55 + $0x80] sm:$0xf]
    %v2922 = vsel %vm638, %v2796, %v2921
    %2923 = vst [vmem:[%s55 + $0x80] sm:$0xf] %v2922
    %v2924 = vld [vmem:[%s55 + $0x84] sm:$0x1]
    %v2925 = vsel %vm58, %v2797, %v2924
    %2926 = vst [vmem:[%s55 + $0x84] sm:$0x1] %v2925
    %v2927 = vld [vmem:[%s55 + $0x88] sm:$0xf]
    %v2928 = vsel %vm638, %v2804, %v2927
    %2929 = vst [vmem:[%s55 + $0x88] sm:$0xf] %v2928
    %v2930 = vld [vmem:[%s55 + $0x8c] sm:$0x1]
    %v2931 = vsel %vm58, %v2805, %v2930
    %2932 = vst [vmem:[%s55 + $0x8c] sm:$0x1] %v2931
    %v2933 = vld [vmem:[#allocation2] sm:$0xf]
    %v2934 = vld [vmem:[#allocation2 + $0x8] sm:$0xf]
    %v2935 = vld [vmem:[#allocation2 + $0x10] sm:$0xf]
    %v2936 = vld [vmem:[#allocation2 + $0x18] sm:$0xf]
    %v2937 = vld [vmem:[#allocation2 + $0x20] sm:$0xf]
    %v2938 = vld [vmem:[#allocation2 + $0x28] sm:$0xf]
    %v2939 = vld [vmem:[#allocation2 + $0x30] sm:$0xf]
    %v2940 = vld [vmem:[#allocation2 + $0x38] sm:$0xf]
    %v2941 = vld [vmem:[#allocation2 + $0x50] sm:$0xf]
    %v2942 = vld [vmem:[#allocation2 + $0x58] sm:$0xf]
    %v2943 = vld [vmem:[#allocation2 + $0x60] sm:$0xf]
    %v2944 = vld [vmem:[#allocation2 + $0x68] sm:$0xf]
    %v2945 = vld [vmem:[#allocation2 + $0x70] sm:$0xf]
    %v2946 = vld [vmem:[#allocation2 + $0x78] sm:$0xf]
    %v2947 = vld [vmem:[#allocation2 + $0x80] sm:$0xf]
    %v2948 = vld [vmem:[#allocation2 + $0x88] sm:$0xf]
    %v2949 = vld [vmem:[#allocation2 + $0x4] sm:$0x1]
    %v2950 = vld [vmem:[#allocation2 + $0xc] sm:$0x1]
    %v2951 = vld [vmem:[#allocation2 + $0x14] sm:$0x1]
    %v2952 = vld [vmem:[#allocation2 + $0x1c] sm:$0x1]
    %v2953 = vld [vmem:[#allocation2 + $0x24] sm:$0x1]
    %v2954 = vld [vmem:[#allocation2 + $0x2c] sm:$0x1]
    %v2955 = vld [vmem:[#allocation2 + $0x34] sm:$0x1]
    %v2956 = vld [vmem:[#allocation2 + $0x3c] sm:$0x1]
    %v2957 = vld [vmem:[#allocation2 + $0x54] sm:$0x1]
    %v2958 = vld [vmem:[#allocation2 + $0x5c] sm:$0x1]
    %v2959 = vld [vmem:[#allocation2 + $0x64] sm:$0x1]
    %v2960 = vld [vmem:[#allocation2 + $0x6c] sm:$0x1]
    %v2961 = vld [vmem:[#allocation2 + $0x74] sm:$0x1]
    %v2962 = vld [vmem:[#allocation2 + $0x7c] sm:$0x1]
    %v2963 = vld [vmem:[#allocation2 + $0x84] sm:$0x1]
    %v2964 = vld [vmem:[#allocation2 + $0x8c] sm:$0x1]
    %v2966 = vshrl.u32 %v2933, 16
    %v2968 = vrot.slane %v2966, 4
    %v2969 = vshll.u32 %v2933, 16
    %v2971 = vrot.slane %v2969, 5
    %v2972 = vor.u32 %v2968, %v2971
    %v2973 = vrot.slane %v2972, 4
    %v2975 = vshll.u32 %v2949, 16
    %v2977 = vrot.slane %v2975, 5
    %v2978 = vsel %vm769, %v2973, %v2977
    %v2980 = vshrl.u32 %v2934, 16
    %v2982 = vrot.slane %v2980, 4
    %v2983 = vshll.u32 %v2934, 16
    %v2985 = vrot.slane %v2983, 5
    %v2986 = vor.u32 %v2982, %v2985
    %v2987 = vrot.slane %v2986, 4
    %v2989 = vshll.u32 %v2950, 16
    %v2991 = vrot.slane %v2989, 5
    %v2992 = vsel %vm769, %v2987, %v2991
    %v2994 = vshrl.u32 %v2935, 16
    %v2996 = vrot.slane %v2994, 4
    %v2997 = vshll.u32 %v2935, 16
    %v2999 = vrot.slane %v2997, 5
    %v3000 = vor.u32 %v2996, %v2999
    %v3001 = vrot.slane %v3000, 4
    %v3003 = vshll.u32 %v2951, 16
    %v3005 = vrot.slane %v3003, 5
    %v3006 = vsel %vm769, %v3001, %v3005
    %v3008 = vshrl.u32 %v2936, 16
    %v3010 = vrot.slane %v3008, 4
    %v3011 = vshll.u32 %v2936, 16
    %v3013 = vrot.slane %v3011, 5
    %v3014 = vor.u32 %v3010, %v3013
    %v3015 = vrot.slane %v3014, 4
    %v3017 = vshll.u32 %v2952, 16
    %v3019 = vrot.slane %v3017, 5
    %v3020 = vsel %vm769, %v3015, %v3019
    %v3022 = vshrl.u32 %v2937, 16
    %v3024 = vrot.slane %v3022, 4
    %v3025 = vshll.u32 %v2937, 16
    %v3027 = vrot.slane %v3025, 5
    %v3028 = vor.u32 %v3024, %v3027
    %v3029 = vrot.slane %v3028, 4
    %v3031 = vshll.u32 %v2953, 16
    %v3033 = vrot.slane %v3031, 5
    %v3034 = vsel %vm769, %v3029, %v3033
    %v3036 = vshrl.u32 %v2938, 16
    %v3038 = vrot.slane %v3036, 4
    %v3039 = vshll.u32 %v2938, 16
    %v3041 = vrot.slane %v3039, 5
    %v3042 = vor.u32 %v3038, %v3041
    %v3043 = vrot.slane %v3042, 4
    %v3045 = vshll.u32 %v2954, 16
    %v3047 = vrot.slane %v3045, 5
    %v3048 = vsel %vm769, %v3043, %v3047
    %v3050 = vshrl.u32 %v2939, 16
    %v3052 = vrot.slane %v3050, 4
    %v3053 = vshll.u32 %v2939, 16
    %v3055 = vrot.slane %v3053, 5
    %v3056 = vor.u32 %v3052, %v3055
    %v3057 = vrot.slane %v3056, 4
    %v3059 = vshll.u32 %v2955, 16
    %v3061 = vrot.slane %v3059, 5
    %v3062 = vsel %vm769, %v3057, %v3061
    %v3064 = vshrl.u32 %v2940, 16
    %v3066 = vrot.slane %v3064, 4
    %v3067 = vshll.u32 %v2940, 16
    %v3069 = vrot.slane %v3067, 5
    %v3070 = vor.u32 %v3066, %v3069
    %v3071 = vrot.slane %v3070, 4
    %v3073 = vshll.u32 %v2956, 16
    %v3075 = vrot.slane %v3073, 5
    %v3076 = vsel %vm769, %v3071, %v3075
    %v3078 = vshrl.u32 %v2941, 16
    %v3080 = vrot.slane %v3078, 4
    %v3081 = vshll.u32 %v2941, 16
    %v3083 = vrot.slane %v3081, 5
    %v3084 = vor.u32 %v3080, %v3083
    %v3085 = vrot.slane %v3084, 4
    %v3087 = vshll.u32 %v2957, 16
    %v3089 = vrot.slane %v3087, 5
    %v3090 = vsel %vm769, %v3085, %v3089
    %v3092 = vshrl.u32 %v2942, 16
    %v3094 = vrot.slane %v3092, 4
    %v3095 = vshll.u32 %v2942, 16
    %v3097 = vrot.slane %v3095, 5
    %v3098 = vor.u32 %v3094, %v3097
    %v3099 = vrot.slane %v3098, 4
    %v3101 = vshll.u32 %v2958, 16
    %v3103 = vrot.slane %v3101, 5
    %v3104 = vsel %vm769, %v3099, %v3103
    %v3106 = vshrl.u32 %v2943, 16
    %v3108 = vrot.slane %v3106, 4
    %v3109 = vshll.u32 %v2943, 16
    %v3111 = vrot.slane %v3109, 5
    %v3112 = vor.u32 %v3108, %v3111
    %v3113 = vrot.slane %v3112, 4
    %v3115 = vshll.u32 %v2959, 16
    %v3117 = vrot.slane %v3115, 5
    %v3118 = vsel %vm769, %v3113, %v3117
    %v3120 = vshrl.u32 %v2944, 16
    %v3122 = vrot.slane %v3120, 4
    %v3123 = vshll.u32 %v2944, 16
    %v3125 = vrot.slane %v3123, 5
    %v3126 = vor.u32 %v3122, %v3125
    %v3127 = vrot.slane %v3126, 4
    %v3129 = vshll.u32 %v2960, 16
    %v3131 = vrot.slane %v3129, 5
    %v3132 = vsel %vm769, %v3127, %v3131
    %v3134 = vshrl.u32 %v2945, 16
    %v3136 = vrot.slane %v3134, 4
    %v3137 = vshll.u32 %v2945, 16
    %v3139 = vrot.slane %v3137, 5
    %v3140 = vor.u32 %v3136, %v3139
    %v3141 = vrot.slane %v3140, 4
    %v3143 = vshll.u32 %v2961, 16
    %v3145 = vrot.slane %v3143, 5
    %v3146 = vsel %vm769, %v3141, %v3145
    %v3148 = vshrl.u32 %v2946, 16
    %v3150 = vrot.slane %v3148, 4
    %v3151 = vshll.u32 %v2946, 16
    %v3153 = vrot.slane %v3151, 5
    %v3154 = vor.u32 %v3150, %v3153
    %v3155 = vrot.slane %v3154, 4
    %v3157 = vshll.u32 %v2962, 16
    %v3159 = vrot.slane %v3157, 5
    %v3160 = vsel %vm769, %v3155, %v3159
    %v3162 = vshrl.u32 %v2947, 16
    %v3164 = vrot.slane %v3162, 4
    %v3165 = vshll.u32 %v2947, 16
    %v3167 = vrot.slane %v3165, 5
    %v3168 = vor.u32 %v3164, %v3167
    %v3169 = vrot.slane %v3168, 4
    %v3171 = vshll.u32 %v2963, 16
    %v3173 = vrot.slane %v3171, 5
    %v3174 = vsel %vm769, %v3169, %v3173
    %v3176 = vshrl.u32 %v2948, 16
    %v3178 = vrot.slane %v3176, 4
    %v3179 = vshll.u32 %v2948, 16
    %v3181 = vrot.slane %v3179, 5
    %v3182 = vor.u32 %v3178, %v3181
    %v3183 = vrot.slane %v3182, 4
    %v3185 = vshll.u32 %v2964, 16
    %v3187 = vrot.slane %v3185, 5
    %v3188 = vsel %vm769, %v3183, %v3187
    %v3189 = vld [vmem:[#allocation2] sm:$0xe]
    %v3190 = vld [vmem:[#allocation2 + $0x8] sm:$0xe]
    %v3191 = vld [vmem:[#allocation2 + $0x10] sm:$0xe]
    %v3192 = vld [vmem:[#allocation2 + $0x18] sm:$0xe]
    %v3193 = vld [vmem:[#allocation2 + $0x20] sm:$0xe]
    %v3194 = vld [vmem:[#allocation2 + $0x28] sm:$0xe]
    %v3195 = vld [vmem:[#allocation2 + $0x30] sm:$0xe]
    %v3196 = vld [vmem:[#allocation2 + $0x38] sm:$0xe]
    %v3197 = vld [vmem:[#allocation2 + $0x50] sm:$0xe]
    %v3198 = vld [vmem:[#allocation2 + $0x58] sm:$0xe]
    %v3199 = vld [vmem:[#allocation2 + $0x60] sm:$0xe]
    %v3200 = vld [vmem:[#allocation2 + $0x68] sm:$0xe]
    %v3201 = vld [vmem:[#allocation2 + $0x70] sm:$0xe]
    %v3202 = vld [vmem:[#allocation2 + $0x78] sm:$0xe]
    %v3203 = vld [vmem:[#allocation2 + $0x80] sm:$0xe]
    %v3204 = vld [vmem:[#allocation2 + $0x88] sm:$0xe]
    %v3237 = vrot.slane %v3189, 5
    %v3238 = vrot.slane %v3237, 4
    %v3239 = vrot.slane %v2949, 5
    %v3240 = vsel %vm1044, %v3238, %v3239
    %v3241 = vrot.slane %v3190, 5
    %v3242 = vrot.slane %v3241, 4
    %v3243 = vrot.slane %v2950, 5
    %v3244 = vsel %vm1044, %v3242, %v3243
    %v3245 = vrot.slane %v3191, 5
    %v3246 = vrot.slane %v3245, 4
    %v3247 = vrot.slane %v2951, 5
    %v3248 = vsel %vm1044, %v3246, %v3247
    %v3249 = vrot.slane %v3192, 5
    %v3250 = vrot.slane %v3249, 4
    %v3251 = vrot.slane %v2952, 5
    %v3252 = vsel %vm1044, %v3250, %v3251
    %v3253 = vrot.slane %v3193, 5
    %v3254 = vrot.slane %v3253, 4
    %v3255 = vrot.slane %v2953, 5
    %v3256 = vsel %vm1044, %v3254, %v3255
    %v3257 = vrot.slane %v3194, 5
    %v3258 = vrot.slane %v3257, 4
    %v3259 = vrot.slane %v2954, 5
    %v3260 = vsel %vm1044, %v3258, %v3259
    %v3261 = vrot.slane %v3195, 5
    %v3262 = vrot.slane %v3261, 4
    %v3263 = vrot.slane %v2955, 5
    %v3264 = vsel %vm1044, %v3262, %v3263
    %v3265 = vrot.slane %v3196, 5
    %v3266 = vrot.slane %v3265, 4
    %v3267 = vrot.slane %v2956, 5
    %v3268 = vsel %vm1044, %v3266, %v3267
    %v3269 = vrot.slane %v3197, 5
    %v3270 = vrot.slane %v3269, 4
    %v3271 = vrot.slane %v2957, 5
    %v3272 = vsel %vm1044, %v3270, %v3271
    %v3273 = vrot.slane %v3198, 5
    %v3274 = vrot.slane %v3273, 4
    %v3275 = vrot.slane %v2958, 5
    %v3276 = vsel %vm1044, %v3274, %v3275
    %v3277 = vrot.slane %v3199, 5
    %v3278 = vrot.slane %v3277, 4
    %v3279 = vrot.slane %v2959, 5
    %v3280 = vsel %vm1044, %v3278, %v3279
    %v3281 = vrot.slane %v3200, 5
    %v3282 = vrot.slane %v3281, 4
    %v3283 = vrot.slane %v2960, 5
    %v3284 = vsel %vm1044, %v3282, %v3283
    %v3285 = vrot.slane %v3201, 5
    %v3286 = vrot.slane %v3285, 4
    %v3287 = vrot.slane %v2961, 5
    %v3288 = vsel %vm1044, %v3286, %v3287
    %v3289 = vrot.slane %v3202, 5
    %v3290 = vrot.slane %v3289, 4
    %v3291 = vrot.slane %v2962, 5
    %v3292 = vsel %vm1044, %v3290, %v3291
    %v3293 = vrot.slane %v3203, 5
    %v3294 = vrot.slane %v3293, 4
    %v3295 = vrot.slane %v2963, 5
    %v3296 = vsel %vm1044, %v3294, %v3295
    %v3297 = vrot.slane %v3204, 5
    %v3298 = vrot.slane %v3297, 4
    %v3299 = vrot.slane %v2964, 5
    %v3300 = vsel %vm1044, %v3298, %v3299
    %v3301 = vld [vmem:[%s55] sm:$0xf]
    %v3302 = vld [vmem:[%s55 + $0x8] sm:$0xf]
    %v3303 = vld [vmem:[%s55 + $0x10] sm:$0xf]
    %v3304 = vld [vmem:[%s55 + $0x18] sm:$0xf]
    %v3305 = vld [vmem:[%s55 + $0x20] sm:$0xf]
    %v3306 = vld [vmem:[%s55 + $0x28] sm:$0xf]
    %v3307 = vld [vmem:[%s55 + $0x30] sm:$0xf]
    %v3308 = vld [vmem:[%s55 + $0x38] sm:$0xf]
    %v3309 = vld [vmem:[%s55 + $0x50] sm:$0xf]
    %v3310 = vld [vmem:[%s55 + $0x58] sm:$0xf]
    %v3311 = vld [vmem:[%s55 + $0x60] sm:$0xf]
    %v3312 = vld [vmem:[%s55 + $0x68] sm:$0xf]
    %v3313 = vld [vmem:[%s55 + $0x70] sm:$0xf]
    %v3314 = vld [vmem:[%s55 + $0x78] sm:$0xf]
    %v3315 = vld [vmem:[%s55 + $0x80] sm:$0xf]
    %v3316 = vld [vmem:[%s55 + $0x88] sm:$0xf]
    %v3317 = vld [vmem:[%s55 + $0x4] sm:$0x1]
    %v3318 = vld [vmem:[%s55 + $0xc] sm:$0x1]
    %v3319 = vld [vmem:[%s55 + $0x14] sm:$0x1]
    %v3320 = vld [vmem:[%s55 + $0x1c] sm:$0x1]
    %v3321 = vld [vmem:[%s55 + $0x24] sm:$0x1]
    %v3322 = vld [vmem:[%s55 + $0x2c] sm:$0x1]
    %v3323 = vld [vmem:[%s55 + $0x34] sm:$0x1]
    %v3324 = vld [vmem:[%s55 + $0x3c] sm:$0x1]
    %v3325 = vld [vmem:[%s55 + $0x54] sm:$0x1]
    %v3326 = vld [vmem:[%s55 + $0x5c] sm:$0x1]
    %v3327 = vld [vmem:[%s55 + $0x64] sm:$0x1]
    %v3328 = vld [vmem:[%s55 + $0x6c] sm:$0x1]
    %v3329 = vld [vmem:[%s55 + $0x74] sm:$0x1]
    %v3330 = vld [vmem:[%s55 + $0x7c] sm:$0x1]
    %v3331 = vld [vmem:[%s55 + $0x84] sm:$0x1]
    %v3332 = vld [vmem:[%s55 + $0x8c] sm:$0x1]
    %v3334 = vshrl.u32 %v3301, 16
    %v3336 = vrot.slane %v3334, 4
    %v3337 = vshll.u32 %v3301, 16
    %v3339 = vrot.slane %v3337, 5
    %v3340 = vor.u32 %v3336, %v3339
    %v3341 = vrot.slane %v3340, 4
    %v3343 = vshll.u32 %v3317, 16
    %v3345 = vrot.slane %v3343, 5
    %v3346 = vsel %vm769, %v3341, %v3345
    %v3348 = vshrl.u32 %v3302, 16
    %v3350 = vrot.slane %v3348, 4
    %v3351 = vshll.u32 %v3302, 16
    %v3353 = vrot.slane %v3351, 5
    %v3354 = vor.u32 %v3350, %v3353
    %v3355 = vrot.slane %v3354, 4
    %v3357 = vshll.u32 %v3318, 16
    %v3359 = vrot.slane %v3357, 5
    %v3360 = vsel %vm769, %v3355, %v3359
    %v3362 = vshrl.u32 %v3303, 16
    %v3364 = vrot.slane %v3362, 4
    %v3365 = vshll.u32 %v3303, 16
    %v3367 = vrot.slane %v3365, 5
    %v3368 = vor.u32 %v3364, %v3367
    %v3369 = vrot.slane %v3368, 4
    %v3371 = vshll.u32 %v3319, 16
    %v3373 = vrot.slane %v3371, 5
    %v3374 = vsel %vm769, %v3369, %v3373
    %v3376 = vshrl.u32 %v3304, 16
    %v3378 = vrot.slane %v3376, 4
    %v3379 = vshll.u32 %v3304, 16
    %v3381 = vrot.slane %v3379, 5
    %v3382 = vor.u32 %v3378, %v3381
    %v3383 = vrot.slane %v3382, 4
    %v3385 = vshll.u32 %v3320, 16
    %v3387 = vrot.slane %v3385, 5
    %v3388 = vsel %vm769, %v3383, %v3387
    %v3390 = vshrl.u32 %v3305, 16
    %v3392 = vrot.slane %v3390, 4
    %v3393 = vshll.u32 %v3305, 16
    %v3395 = vrot.slane %v3393, 5
    %v3396 = vor.u32 %v3392, %v3395
    %v3397 = vrot.slane %v3396, 4
    %v3399 = vshll.u32 %v3321, 16
    %v3401 = vrot.slane %v3399, 5
    %v3402 = vsel %vm769, %v3397, %v3401
    %v3404 = vshrl.u32 %v3306, 16
    %v3406 = vrot.slane %v3404, 4
    %v3407 = vshll.u32 %v3306, 16
    %v3409 = vrot.slane %v3407, 5
    %v3410 = vor.u32 %v3406, %v3409
    %v3411 = vrot.slane %v3410, 4
    %v3413 = vshll.u32 %v3322, 16
    %v3415 = vrot.slane %v3413, 5
    %v3416 = vsel %vm769, %v3411, %v3415
    %v3418 = vshrl.u32 %v3307, 16
    %v3420 = vrot.slane %v3418, 4
    %v3421 = vshll.u32 %v3307, 16
    %v3423 = vrot.slane %v3421, 5
    %v3424 = vor.u32 %v3420, %v3423
    %v3425 = vrot.slane %v3424, 4
    %v3427 = vshll.u32 %v3323, 16
    %v3429 = vrot.slane %v3427, 5
    %v3430 = vsel %vm769, %v3425, %v3429
    %v3432 = vshrl.u32 %v3308, 16
    %v3434 = vrot.slane %v3432, 4
    %v3435 = vshll.u32 %v3308, 16
    %v3437 = vrot.slane %v3435, 5
    %v3438 = vor.u32 %v3434, %v3437
    %v3439 = vrot.slane %v3438, 4
    %v3441 = vshll.u32 %v3324, 16
    %v3443 = vrot.slane %v3441, 5
    %v3444 = vsel %vm769, %v3439, %v3443
    %v3446 = vshrl.u32 %v3309, 16
    %v3448 = vrot.slane %v3446, 4
    %v3449 = vshll.u32 %v3309, 16
    %v3451 = vrot.slane %v3449, 5
    %v3452 = vor.u32 %v3448, %v3451
    %v3453 = vrot.slane %v3452, 4
    %v3455 = vshll.u32 %v3325, 16
    %v3457 = vrot.slane %v3455, 5
    %v3458 = vsel %vm769, %v3453, %v3457
    %v3460 = vshrl.u32 %v3310, 16
    %v3462 = vrot.slane %v3460, 4
    %v3463 = vshll.u32 %v3310, 16
    %v3465 = vrot.slane %v3463, 5
    %v3466 = vor.u32 %v3462, %v3465
    %v3467 = vrot.slane %v3466, 4
    %v3469 = vshll.u32 %v3326, 16
    %v3471 = vrot.slane %v3469, 5
    %v3472 = vsel %vm769, %v3467, %v3471
    %v3474 = vshrl.u32 %v3311, 16
    %v3476 = vrot.slane %v3474, 4
    %v3477 = vshll.u32 %v3311, 16
    %v3479 = vrot.slane %v3477, 5
    %v3480 = vor.u32 %v3476, %v3479
    %v3481 = vrot.slane %v3480, 4
    %v3483 = vshll.u32 %v3327, 16
    %v3485 = vrot.slane %v3483, 5
    %v3486 = vsel %vm769, %v3481, %v3485
    %v3488 = vshrl.u32 %v3312, 16
    %v3490 = vrot.slane %v3488, 4
    %v3491 = vshll.u32 %v3312, 16
    %v3493 = vrot.slane %v3491, 5
    %v3494 = vor.u32 %v3490, %v3493
    %v3495 = vrot.slane %v3494, 4
    %v3497 = vshll.u32 %v3328, 16
    %v3499 = vrot.slane %v3497, 5
    %v3500 = vsel %vm769, %v3495, %v3499
    %v3502 = vshrl.u32 %v3313, 16
    %v3504 = vrot.slane %v3502, 4
    %v3505 = vshll.u32 %v3313, 16
    %v3507 = vrot.slane %v3505, 5
    %v3508 = vor.u32 %v3504, %v3507
    %v3509 = vrot.slane %v3508, 4
    %v3511 = vshll.u32 %v3329, 16
    %v3513 = vrot.slane %v3511, 5
    %v3514 = vsel %vm769, %v3509, %v3513
    %v3516 = vshrl.u32 %v3314, 16
    %v3518 = vrot.slane %v3516, 4
    %v3519 = vshll.u32 %v3314, 16
    %v3521 = vrot.slane %v3519, 5
    %v3522 = vor.u32 %v3518, %v3521
    %v3523 = vrot.slane %v3522, 4
    %v3525 = vshll.u32 %v3330, 16
    %v3527 = vrot.slane %v3525, 5
    %v3528 = vsel %vm769, %v3523, %v3527
    %v3530 = vshrl.u32 %v3315, 16
    %v3532 = vrot.slane %v3530, 4
    %v3533 = vshll.u32 %v3315, 16
    %v3535 = vrot.slane %v3533, 5
    %v3536 = vor.u32 %v3532, %v3535
    %v3537 = vrot.slane %v3536, 4
    %v3539 = vshll.u32 %v3331, 16
    %v3541 = vrot.slane %v3539, 5
    %v3542 = vsel %vm769, %v3537, %v3541
    %v3544 = vshrl.u32 %v3316, 16
    %v3546 = vrot.slane %v3544, 4
    %v3547 = vshll.u32 %v3316, 16
    %v3549 = vrot.slane %v3547, 5
    %v3550 = vor.u32 %v3546, %v3549
    %v3551 = vrot.slane %v3550, 4
    %v3553 = vshll.u32 %v3332, 16
    %v3555 = vrot.slane %v3553, 5
    %v3556 = vsel %vm769, %v3551, %v3555
    %v3557 = vld [vmem:[%s55] sm:$0xe]
    %v3558 = vld [vmem:[%s55 + $0x8] sm:$0xe]
    %v3559 = vld [vmem:[%s55 + $0x10] sm:$0xe]
    %v3560 = vld [vmem:[%s55 + $0x18] sm:$0xe]
    %v3561 = vld [vmem:[%s55 + $0x20] sm:$0xe]
    %v3562 = vld [vmem:[%s55 + $0x28] sm:$0xe]
    %v3563 = vld [vmem:[%s55 + $0x30] sm:$0xe]
    %v3564 = vld [vmem:[%s55 + $0x38] sm:$0xe]
    %v3565 = vld [vmem:[%s55 + $0x50] sm:$0xe]
    %v3566 = vld [vmem:[%s55 + $0x58] sm:$0xe]
    %v3567 = vld [vmem:[%s55 + $0x60] sm:$0xe]
    %v3568 = vld [vmem:[%s55 + $0x68] sm:$0xe]
    %v3569 = vld [vmem:[%s55 + $0x70] sm:$0xe]
    %v3570 = vld [vmem:[%s55 + $0x78] sm:$0xe]
    %v3571 = vld [vmem:[%s55 + $0x80] sm:$0xe]
    %v3572 = vld [vmem:[%s55 + $0x88] sm:$0xe]
    %v3605 = vrot.slane %v3557, 5
    %v3606 = vrot.slane %v3605, 4
    %v3607 = vrot.slane %v3317, 5
    %v3608 = vsel %vm1044, %v3606, %v3607
    %v3609 = vrot.slane %v3558, 5
    %v3610 = vrot.slane %v3609, 4
    %v3611 = vrot.slane %v3318, 5
    %v3612 = vsel %vm1044, %v3610, %v3611
    %v3613 = vrot.slane %v3559, 5
    %v3614 = vrot.slane %v3613, 4
    %v3615 = vrot.slane %v3319, 5
    %v3616 = vsel %vm1044, %v3614, %v3615
    %v3617 = vrot.slane %v3560, 5
    %v3618 = vrot.slane %v3617, 4
    %v3619 = vrot.slane %v3320, 5
    %v3620 = vsel %vm1044, %v3618, %v3619
    %v3621 = vrot.slane %v3561, 5
    %v3622 = vrot.slane %v3621, 4
    %v3623 = vrot.slane %v3321, 5
    %v3624 = vsel %vm1044, %v3622, %v3623
    %v3625 = vrot.slane %v3562, 5
    %v3626 = vrot.slane %v3625, 4
    %v3627 = vrot.slane %v3322, 5
    %v3628 = vsel %vm1044, %v3626, %v3627
    %v3629 = vrot.slane %v3563, 5
    %v3630 = vrot.slane %v3629, 4
    %v3631 = vrot.slane %v3323, 5
    %v3632 = vsel %vm1044, %v3630, %v3631
    %v3633 = vrot.slane %v3564, 5
    %v3634 = vrot.slane %v3633, 4
    %v3635 = vrot.slane %v3324, 5
    %v3636 = vsel %vm1044, %v3634, %v3635
    %v3637 = vrot.slane %v3565, 5
    %v3638 = vrot.slane %v3637, 4
    %v3639 = vrot.slane %v3325, 5
    %v3640 = vsel %vm1044, %v3638, %v3639
    %v3641 = vrot.slane %v3566, 5
    %v3642 = vrot.slane %v3641, 4
    %v3643 = vrot.slane %v3326, 5
    %v3644 = vsel %vm1044, %v3642, %v3643
    %v3645 = vrot.slane %v3567, 5
    %v3646 = vrot.slane %v3645, 4
    %v3647 = vrot.slane %v3327, 5
    %v3648 = vsel %vm1044, %v3646, %v3647
    %v3649 = vrot.slane %v3568, 5
    %v3650 = vrot.slane %v3649, 4
    %v3651 = vrot.slane %v3328, 5
    %v3652 = vsel %vm1044, %v3650, %v3651
    %v3653 = vrot.slane %v3569, 5
    %v3654 = vrot.slane %v3653, 4
    %v3655 = vrot.slane %v3329, 5
    %v3656 = vsel %vm1044, %v3654, %v3655
    %v3657 = vrot.slane %v3570, 5
    %v3658 = vrot.slane %v3657, 4
    %v3659 = vrot.slane %v3330, 5
    %v3660 = vsel %vm1044, %v3658, %v3659
    %v3661 = vrot.slane %v3571, 5
    %v3662 = vrot.slane %v3661, 4
    %v3663 = vrot.slane %v3331, 5
    %v3664 = vsel %vm1044, %v3662, %v3663
    %v3665 = vrot.slane %v3572, 5
    %v3666 = vrot.slane %v3665, 4
    %v3667 = vrot.slane %v3332, 5
    %v3668 = vsel %vm1044, %v3666, %v3667
    %v3669 = vld [vmem:[%s1477] sm:$0xf]
    %v3670 = vld [vmem:[%s1477 + $0x8] sm:$0xf]
    %v3671 = vld [vmem:[%s1477 + $0x10] sm:$0xf]
    %v3672 = vld [vmem:[%s1477 + $0x18] sm:$0xf]
    %v3673 = vld [vmem:[%s1477 + $0x20] sm:$0xf]
    %v3674 = vld [vmem:[%s1477 + $0x28] sm:$0xf]
    %v3675 = vld [vmem:[%s1477 + $0x30] sm:$0xf]
    %v3676 = vld [vmem:[%s1477 + $0x38] sm:$0xf]
    %v3677 = vld [vmem:[%s1477 + $0x50] sm:$0xf]
    %v3678 = vld [vmem:[%s1477 + $0x58] sm:$0xf]
    %v3679 = vld [vmem:[%s1477 + $0x60] sm:$0xf]
    %v3680 = vld [vmem:[%s1477 + $0x68] sm:$0xf]
    %v3681 = vld [vmem:[%s1477 + $0x70] sm:$0xf]
    %v3682 = vld [vmem:[%s1477 + $0x78] sm:$0xf]
    %v3683 = vld [vmem:[%s1477 + $0x80] sm:$0xf]
    %v3684 = vld [vmem:[%s1477 + $0x88] sm:$0xf]
    %v3685 = vld [vmem:[%s1477 + $0x4] sm:$0x1]
    %v3686 = vld [vmem:[%s1477 + $0xc] sm:$0x1]
    %v3687 = vld [vmem:[%s1477 + $0x14] sm:$0x1]
    %v3688 = vld [vmem:[%s1477 + $0x1c] sm:$0x1]
    %v3689 = vld [vmem:[%s1477 + $0x24] sm:$0x1]
    %v3690 = vld [vmem:[%s1477 + $0x2c] sm:$0x1]
    %v3691 = vld [vmem:[%s1477 + $0x34] sm:$0x1]
    %v3692 = vld [vmem:[%s1477 + $0x3c] sm:$0x1]
    %v3693 = vld [vmem:[%s1477 + $0x54] sm:$0x1]
    %v3694 = vld [vmem:[%s1477 + $0x5c] sm:$0x1]
    %v3695 = vld [vmem:[%s1477 + $0x64] sm:$0x1]
    %v3696 = vld [vmem:[%s1477 + $0x6c] sm:$0x1]
    %v3697 = vld [vmem:[%s1477 + $0x74] sm:$0x1]
    %v3698 = vld [vmem:[%s1477 + $0x7c] sm:$0x1]
    %v3699 = vld [vmem:[%s1477 + $0x84] sm:$0x1]
    %v3700 = vld [vmem:[%s1477 + $0x8c] sm:$0x1]
    %v3702 = vshrl.u32 %v3669, 16
    %v3704 = vrot.slane %v3702, 4
    %v3705 = vshll.u32 %v3669, 16
    %v3707 = vrot.slane %v3705, 5
    %v3708 = vor.u32 %v3704, %v3707
    %v3709 = vrot.slane %v3708, 4
    %v3711 = vshll.u32 %v3685, 16
    %v3713 = vrot.slane %v3711, 5
    %v3714 = vsel %vm769, %v3709, %v3713
    %v3716 = vshrl.u32 %v3670, 16
    %v3718 = vrot.slane %v3716, 4
    %v3719 = vshll.u32 %v3670, 16
    %v3721 = vrot.slane %v3719, 5
    %v3722 = vor.u32 %v3718, %v3721
    %v3723 = vrot.slane %v3722, 4
    %v3725 = vshll.u32 %v3686, 16
    %v3727 = vrot.slane %v3725, 5
    %v3728 = vsel %vm769, %v3723, %v3727
    %v3730 = vshrl.u32 %v3671, 16
    %v3732 = vrot.slane %v3730, 4
    %v3733 = vshll.u32 %v3671, 16
    %v3735 = vrot.slane %v3733, 5
    %v3736 = vor.u32 %v3732, %v3735
    %v3737 = vrot.slane %v3736, 4
    %v3739 = vshll.u32 %v3687, 16
    %v3741 = vrot.slane %v3739, 5
    %v3742 = vsel %vm769, %v3737, %v3741
    %v3744 = vshrl.u32 %v3672, 16
    %v3746 = vrot.slane %v3744, 4
    %v3747 = vshll.u32 %v3672, 16
    %v3749 = vrot.slane %v3747, 5
    %v3750 = vor.u32 %v3746, %v3749
    %v3751 = vrot.slane %v3750, 4
    %v3753 = vshll.u32 %v3688, 16
    %v3755 = vrot.slane %v3753, 5
    %v3756 = vsel %vm769, %v3751, %v3755
    %v3758 = vshrl.u32 %v3673, 16
    %v3760 = vrot.slane %v3758, 4
    %v3761 = vshll.u32 %v3673, 16
    %v3763 = vrot.slane %v3761, 5
    %v3764 = vor.u32 %v3760, %v3763
    %v3765 = vrot.slane %v3764, 4
    %v3767 = vshll.u32 %v3689, 16
    %v3769 = vrot.slane %v3767, 5
    %v3770 = vsel %vm769, %v3765, %v3769
    %v3772 = vshrl.u32 %v3674, 16
    %v3774 = vrot.slane %v3772, 4
    %v3775 = vshll.u32 %v3674, 16
    %v3777 = vrot.slane %v3775, 5
    %v3778 = vor.u32 %v3774, %v3777
    %v3779 = vrot.slane %v3778, 4
    %v3781 = vshll.u32 %v3690, 16
    %v3783 = vrot.slane %v3781, 5
    %v3784 = vsel %vm769, %v3779, %v3783
    %v3786 = vshrl.u32 %v3675, 16
    %v3788 = vrot.slane %v3786, 4
    %v3789 = vshll.u32 %v3675, 16
    %v3791 = vrot.slane %v3789, 5
    %v3792 = vor.u32 %v3788, %v3791
    %v3793 = vrot.slane %v3792, 4
    %v3795 = vshll.u32 %v3691, 16
    %v3797 = vrot.slane %v3795, 5
    %v3798 = vsel %vm769, %v3793, %v3797
    %v3800 = vshrl.u32 %v3676, 16
    %v3802 = vrot.slane %v3800, 4
    %v3803 = vshll.u32 %v3676, 16
    %v3805 = vrot.slane %v3803, 5
    %v3806 = vor.u32 %v3802, %v3805
    %v3807 = vrot.slane %v3806, 4
    %v3809 = vshll.u32 %v3692, 16
    %v3811 = vrot.slane %v3809, 5
    %v3812 = vsel %vm769, %v3807, %v3811
    %v3814 = vshrl.u32 %v3677, 16
    %v3816 = vrot.slane %v3814, 4
    %v3817 = vshll.u32 %v3677, 16
    %v3819 = vrot.slane %v3817, 5
    %v3820 = vor.u32 %v3816, %v3819
    %v3821 = vrot.slane %v3820, 4
    %v3823 = vshll.u32 %v3693, 16
    %v3825 = vrot.slane %v3823, 5
    %v3826 = vsel %vm769, %v3821, %v3825
    %v3828 = vshrl.u32 %v3678, 16
    %v3830 = vrot.slane %v3828, 4
    %v3831 = vshll.u32 %v3678, 16
    %v3833 = vrot.slane %v3831, 5
    %v3834 = vor.u32 %v3830, %v3833
    %v3835 = vrot.slane %v3834, 4
    %v3837 = vshll.u32 %v3694, 16
    %v3839 = vrot.slane %v3837, 5
    %v3840 = vsel %vm769, %v3835, %v3839
    %v3842 = vshrl.u32 %v3679, 16
    %v3844 = vrot.slane %v3842, 4
    %v3845 = vshll.u32 %v3679, 16
    %v3847 = vrot.slane %v3845, 5
    %v3848 = vor.u32 %v3844, %v3847
    %v3849 = vrot.slane %v3848, 4
    %v3851 = vshll.u32 %v3695, 16
    %v3853 = vrot.slane %v3851, 5
    %v3854 = vsel %vm769, %v3849, %v3853
    %v3856 = vshrl.u32 %v3680, 16
    %v3858 = vrot.slane %v3856, 4
    %v3859 = vshll.u32 %v3680, 16
    %v3861 = vrot.slane %v3859, 5
    %v3862 = vor.u32 %v3858, %v3861
    %v3863 = vrot.slane %v3862, 4
    %v3865 = vshll.u32 %v3696, 16
    %v3867 = vrot.slane %v3865, 5
    %v3868 = vsel %vm769, %v3863, %v3867
    %v3870 = vshrl.u32 %v3681, 16
    %v3872 = vrot.slane %v3870, 4
    %v3873 = vshll.u32 %v3681, 16
    %v3875 = vrot.slane %v3873, 5
    %v3876 = vor.u32 %v3872, %v3875
    %v3877 = vrot.slane %v3876, 4
    %v3879 = vshll.u32 %v3697, 16
    %v3881 = vrot.slane %v3879, 5
    %v3882 = vsel %vm769, %v3877, %v3881
    %v3884 = vshrl.u32 %v3682, 16
    %v3886 = vrot.slane %v3884, 4
    %v3887 = vshll.u32 %v3682, 16
    %v3889 = vrot.slane %v3887, 5
    %v3890 = vor.u32 %v3886, %v3889
    %v3891 = vrot.slane %v3890, 4
    %v3893 = vshll.u32 %v3698, 16
    %v3895 = vrot.slane %v3893, 5
    %v3896 = vsel %vm769, %v3891, %v3895
    %v3898 = vshrl.u32 %v3683, 16
    %v3900 = vrot.slane %v3898, 4
    %v3901 = vshll.u32 %v3683, 16
    %v3903 = vrot.slane %v3901, 5
    %v3904 = vor.u32 %v3900, %v3903
    %v3905 = vrot.slane %v3904, 4
    %v3907 = vshll.u32 %v3699, 16
    %v3909 = vrot.slane %v3907, 5
    %v3910 = vsel %vm769, %v3905, %v3909
    %v3912 = vshrl.u32 %v3684, 16
    %v3914 = vrot.slane %v3912, 4
    %v3915 = vshll.u32 %v3684, 16
    %v3917 = vrot.slane %v3915, 5
    %v3918 = vor.u32 %v3914, %v3917
    %v3919 = vrot.slane %v3918, 4
    %v3921 = vshll.u32 %v3700, 16
    %v3923 = vrot.slane %v3921, 5
    %v3924 = vsel %vm769, %v3919, %v3923
    %v3925 = vld [vmem:[%s1477] sm:$0xe]
    %v3926 = vld [vmem:[%s1477 + $0x8] sm:$0xe]
    %v3927 = vld [vmem:[%s1477 + $0x10] sm:$0xe]
    %v3928 = vld [vmem:[%s1477 + $0x18] sm:$0xe]
    %v3929 = vld [vmem:[%s1477 + $0x20] sm:$0xe]
    %v3930 = vld [vmem:[%s1477 + $0x28] sm:$0xe]
    %v3931 = vld [vmem:[%s1477 + $0x30] sm:$0xe]
    %v3932 = vld [vmem:[%s1477 + $0x38] sm:$0xe]
    %v3933 = vld [vmem:[%s1477 + $0x50] sm:$0xe]
    %v3934 = vld [vmem:[%s1477 + $0x58] sm:$0xe]
    %v3935 = vld [vmem:[%s1477 + $0x60] sm:$0xe]
    %v3936 = vld [vmem:[%s1477 + $0x68] sm:$0xe]
    %v3937 = vld [vmem:[%s1477 + $0x70] sm:$0xe]
    %v3938 = vld [vmem:[%s1477 + $0x78] sm:$0xe]
    %v3939 = vld [vmem:[%s1477 + $0x80] sm:$0xe]
    %v3940 = vld [vmem:[%s1477 + $0x88] sm:$0xe]
    %v3973 = vrot.slane %v3925, 5
    %v3974 = vrot.slane %v3973, 4
    %v3975 = vrot.slane %v3685, 5
    %v3976 = vsel %vm1044, %v3974, %v3975
    %v3977 = vrot.slane %v3926, 5
    %v3978 = vrot.slane %v3977, 4
    %v3979 = vrot.slane %v3686, 5
    %v3980 = vsel %vm1044, %v3978, %v3979
    %v3981 = vrot.slane %v3927, 5
    %v3982 = vrot.slane %v3981, 4
    %v3983 = vrot.slane %v3687, 5
    %v3984 = vsel %vm1044, %v3982, %v3983
    %v3985 = vrot.slane %v3928, 5
    %v3986 = vrot.slane %v3985, 4
    %v3987 = vrot.slane %v3688, 5
    %v3988 = vsel %vm1044, %v3986, %v3987
    %v3989 = vrot.slane %v3929, 5
    %v3990 = vrot.slane %v3989, 4
    %v3991 = vrot.slane %v3689, 5
    %v3992 = vsel %vm1044, %v3990, %v3991
    %v3993 = vrot.slane %v3930, 5
    %v3994 = vrot.slane %v3993, 4
    %v3995 = vrot.slane %v3690, 5
    %v3996 = vsel %vm1044, %v3994, %v3995
    %v3997 = vrot.slane %v3931, 5
    %v3998 = vrot.slane %v3997, 4
    %v3999 = vrot.slane %v3691, 5
    %v4000 = vsel %vm1044, %v3998, %v3999
    %v4001 = vrot.slane %v3932, 5
    %v4002 = vrot.slane %v4001, 4
    %v4003 = vrot.slane %v3692, 5
    %v4004 = vsel %vm1044, %v4002, %v4003
    %v4005 = vrot.slane %v3933, 5
    %v4006 = vrot.slane %v4005, 4
    %v4007 = vrot.slane %v3693, 5
    %v4008 = vsel %vm1044, %v4006, %v4007
    %v4009 = vrot.slane %v3934, 5
    %v4010 = vrot.slane %v4009, 4
    %v4011 = vrot.slane %v3694, 5
    %v4012 = vsel %vm1044, %v4010, %v4011
    %v4013 = vrot.slane %v3935, 5
    %v4014 = vrot.slane %v4013, 4
    %v4015 = vrot.slane %v3695, 5
    %v4016 = vsel %vm1044, %v4014, %v4015
    %v4017 = vrot.slane %v3936, 5
    %v4018 = vrot.slane %v4017, 4
    %v4019 = vrot.slane %v3696, 5
    %v4020 = vsel %vm1044, %v4018, %v4019
    %v4021 = vrot.slane %v3937, 5
    %v4022 = vrot.slane %v4021, 4
    %v4023 = vrot.slane %v3697, 5
    %v4024 = vsel %vm1044, %v4022, %v4023
    %v4025 = vrot.slane %v3938, 5
    %v4026 = vrot.slane %v4025, 4
    %v4027 = vrot.slane %v3698, 5
    %v4028 = vsel %vm1044, %v4026, %v4027
    %v4029 = vrot.slane %v3939, 5
    %v4030 = vrot.slane %v4029, 4
    %v4031 = vrot.slane %v3699, 5
    %v4032 = vsel %vm1044, %v4030, %v4031
    %v4033 = vrot.slane %v3940, 5
    %v4034 = vrot.slane %v4033, 4
    %v4035 = vrot.slane %v3700, 5
    %v4036 = vsel %vm1044, %v4034, %v4035
    %v4053 = vunpack.c.l.b16 %v2933
    %v4054 = vunpack.c.l.b16 %v2934
    %v4055 = vunpack.c.l.b16 %v2935
    %v4056 = vunpack.c.l.b16 %v2936
    %v4057 = vunpack.c.l.b16 %v2937
    %v4058 = vunpack.c.l.b16 %v2938
    %v4059 = vunpack.c.l.b16 %v2939
    %v4060 = vunpack.c.l.b16 %v2940
    %v4061 = vunpack.c.l.b16 %v2941
    %v4062 = vunpack.c.l.b16 %v2942
    %v4063 = vunpack.c.l.b16 %v2943
    %v4064 = vunpack.c.l.b16 %v2944
    %v4065 = vunpack.c.l.b16 %v2945
    %v4066 = vunpack.c.l.b16 %v2946
    %v4067 = vunpack.c.l.b16 %v2947
    %v4068 = vunpack.c.l.b16 %v2948
    %v4069 = vpack.c.b16 %v4054, %v4053
    %v4070 = vpack.c.b16 %v4056, %v4055
    %v4071 = vpack.c.b16 %v4058, %v4057
    %v4072 = vpack.c.b16 %v4060, %v4059
    %v4073 = vpack.c.b16 %v4062, %v4061
    %v4074 = vpack.c.b16 %v4064, %v4063
    %v4075 = vpack.c.b16 %v4066, %v4065
    %v4076 = vpack.c.b16 %v4068, %v4067
    %v4077 = vunpack.c.l.b16 %v2978
    %v4078 = vunpack.c.l.b16 %v2992
    %v4079 = vunpack.c.l.b16 %v3006
    %v4080 = vunpack.c.l.b16 %v3020
    %v4081 = vunpack.c.l.b16 %v3034
    %v4082 = vunpack.c.l.b16 %v3048
    %v4083 = vunpack.c.l.b16 %v3062
    %v4084 = vunpack.c.l.b16 %v3076
    %v4085 = vunpack.c.l.b16 %v3090
    %v4086 = vunpack.c.l.b16 %v3104
    %v4087 = vunpack.c.l.b16 %v3118
    %v4088 = vunpack.c.l.b16 %v3132
    %v4089 = vunpack.c.l.b16 %v3146
    %v4090 = vunpack.c.l.b16 %v3160
    %v4091 = vunpack.c.l.b16 %v3174
    %v4092 = vunpack.c.l.b16 %v3188
    %v4093 = vpack.c.b16 %v4078, %v4077
    %v4094 = vpack.c.b16 %v4080, %v4079
    %v4095 = vpack.c.b16 %v4082, %v4081
    %v4096 = vpack.c.b16 %v4084, %v4083
    %v4097 = vpack.c.b16 %v4086, %v4085
    %v4098 = vpack.c.b16 %v4088, %v4087
    %v4099 = vpack.c.b16 %v4090, %v4089
    %v4100 = vpack.c.b16 %v4092, %v4091
    %4101 = vrot.lane.b32.xlu0 %v4093, 8
    %v4102 = vpop.permute.xlu0 %4101
    %4103 = vrot.lane.b32.xlu0 %v4094, 8
    %v4104 = vpop.permute.xlu0 %4103
    %4105 = vrot.lane.b32.xlu0 %v4095, 8
    %v4106 = vpop.permute.xlu0 %4105
    %4107 = vrot.lane.b32.xlu0 %v4096, 8
    %v4108 = vpop.permute.xlu0 %4107
    %4109 = vrot.lane.b32.xlu0 %v4097, 8
    %v4110 = vpop.permute.xlu0 %4109
    %4111 = vrot.lane.b32.xlu0 %v4098, 8
    %v4112 = vpop.permute.xlu0 %4111
    %4113 = vrot.lane.b32.xlu0 %v4099, 8
    %v4114 = vpop.permute.xlu0 %4113
    %4115 = vrot.lane.b32.xlu0 %v4100, 8
    %v4116 = vpop.permute.xlu0 %4115
    %v4117 = vunpack.c.l.b16 %v3240
    %v4118 = vunpack.c.l.b16 %v3244
    %v4119 = vunpack.c.l.b16 %v3248
    %v4120 = vunpack.c.l.b16 %v3252
    %v4121 = vunpack.c.l.b16 %v3256
    %v4122 = vunpack.c.l.b16 %v3260
    %v4123 = vunpack.c.l.b16 %v3264
    %v4124 = vunpack.c.l.b16 %v3268
    %v4125 = vunpack.c.l.b16 %v3272
    %v4126 = vunpack.c.l.b16 %v3276
    %v4127 = vunpack.c.l.b16 %v3280
    %v4128 = vunpack.c.l.b16 %v3284
    %v4129 = vunpack.c.l.b16 %v3288
    %v4130 = vunpack.c.l.b16 %v3292
    %v4131 = vunpack.c.l.b16 %v3296
    %v4132 = vunpack.c.l.b16 %v3300
    %v4133 = vpack.c.b16 %v4118, %v4117
    %v4134 = vpack.c.b16 %v4120, %v4119
    %v4135 = vpack.c.b16 %v4122, %v4121
    %v4136 = vpack.c.b16 %v4124, %v4123
    %v4137 = vpack.c.b16 %v4126, %v4125
    %v4138 = vpack.c.b16 %v4128, %v4127
    %v4139 = vpack.c.b16 %v4130, %v4129
    %v4140 = vpack.c.b16 %v4132, %v4131
    %4141 = vrot.lane.b32.xlu0 %v4133, 16
    %v4142 = vpop.permute.xlu0 %4141
    %4143 = vrot.lane.b32.xlu0 %v4134, 16
    %v4144 = vpop.permute.xlu0 %4143
    %4145 = vrot.lane.b32.xlu0 %v4135, 16
    %v4146 = vpop.permute.xlu0 %4145
    %4147 = vrot.lane.b32.xlu0 %v4136, 16
    %v4148 = vpop.permute.xlu0 %4147
    %4149 = vrot.lane.b32.xlu0 %v4137, 16
    %v4150 = vpop.permute.xlu0 %4149
    %4151 = vrot.lane.b32.xlu0 %v4138, 16
    %v4152 = vpop.permute.xlu0 %4151
    %4153 = vrot.lane.b32.xlu0 %v4139, 16
    %v4154 = vpop.permute.xlu0 %4153
    %4155 = vrot.lane.b32.xlu0 %v4140, 16
    %v4156 = vpop.permute.xlu0 %4155
    %v4173 = vunpack.c.l.b16 %v3301
    %v4174 = vunpack.c.l.b16 %v3302
    %v4175 = vunpack.c.l.b16 %v3303
    %v4176 = vunpack.c.l.b16 %v3304
    %v4177 = vunpack.c.l.b16 %v3305
    %v4178 = vunpack.c.l.b16 %v3306
    %v4179 = vunpack.c.l.b16 %v3307
    %v4180 = vunpack.c.l.b16 %v3308
    %v4181 = vunpack.c.l.b16 %v3309
    %v4182 = vunpack.c.l.b16 %v3310
    %v4183 = vunpack.c.l.b16 %v3311
    %v4184 = vunpack.c.l.b16 %v3312
    %v4185 = vunpack.c.l.b16 %v3313
    %v4186 = vunpack.c.l.b16 %v3314
    %v4187 = vunpack.c.l.b16 %v3315
    %v4188 = vunpack.c.l.b16 %v3316
    %v4189 = vpack.c.b16 %v4174, %v4173
    %v4190 = vpack.c.b16 %v4176, %v4175
    %v4191 = vpack.c.b16 %v4178, %v4177
    %v4192 = vpack.c.b16 %v4180, %v4179
    %v4193 = vpack.c.b16 %v4182, %v4181
    %v4194 = vpack.c.b16 %v4184, %v4183
    %v4195 = vpack.c.b16 %v4186, %v4185
    %v4196 = vpack.c.b16 %v4188, %v4187
    %4197 = vrot.lane.b32.xlu0 %v4189, 24
    %v4198 = vpop.permute.xlu0 %4197
    %4199 = vrot.lane.b32.xlu0 %v4190, 24
    %v4200 = vpop.permute.xlu0 %4199
    %4201 = vrot.lane.b32.xlu0 %v4191, 24
    %v4202 = vpop.permute.xlu0 %4201
    %4203 = vrot.lane.b32.xlu0 %v4192, 24
    %v4204 = vpop.permute.xlu0 %4203
    %4205 = vrot.lane.b32.xlu0 %v4193, 24
    %v4206 = vpop.permute.xlu0 %4205
    %4207 = vrot.lane.b32.xlu0 %v4194, 24
    %v4208 = vpop.permute.xlu0 %4207
    %4209 = vrot.lane.b32.xlu0 %v4195, 24
    %v4210 = vpop.permute.xlu0 %4209
    %4211 = vrot.lane.b32.xlu0 %v4196, 24
    %v4212 = vpop.permute.xlu0 %4211
    %v4213 = vunpack.c.l.b16 %v3346
    %v4214 = vunpack.c.l.b16 %v3360
    %v4215 = vunpack.c.l.b16 %v3374
    %v4216 = vunpack.c.l.b16 %v3388
    %v4217 = vunpack.c.l.b16 %v3402
    %v4218 = vunpack.c.l.b16 %v3416
    %v4219 = vunpack.c.l.b16 %v3430
    %v4220 = vunpack.c.l.b16 %v3444
    %v4221 = vunpack.c.l.b16 %v3458
    %v4222 = vunpack.c.l.b16 %v3472
    %v4223 = vunpack.c.l.b16 %v3486
    %v4224 = vunpack.c.l.b16 %v3500
    %v4225 = vunpack.c.l.b16 %v3514
    %v4226 = vunpack.c.l.b16 %v3528
    %v4227 = vunpack.c.l.b16 %v3542
    %v4228 = vunpack.c.l.b16 %v3556
    %v4229 = vpack.c.b16 %v4214, %v4213
    %v4230 = vpack.c.b16 %v4216, %v4215
    %v4231 = vpack.c.b16 %v4218, %v4217
    %v4232 = vpack.c.b16 %v4220, %v4219
    %v4233 = vpack.c.b16 %v4222, %v4221
    %v4234 = vpack.c.b16 %v4224, %v4223
    %v4235 = vpack.c.b16 %v4226, %v4225
    %v4236 = vpack.c.b16 %v4228, %v4227
    %4237 = vrot.lane.b32.xlu0 %v4229, 32
    %v4238 = vpop.permute.xlu0 %4237
    %4239 = vrot.lane.b32.xlu0 %v4230, 32
    %v4240 = vpop.permute.xlu0 %4239
    %4241 = vrot.lane.b32.xlu0 %v4231, 32
    %v4242 = vpop.permute.xlu0 %4241
    %4243 = vrot.lane.b32.xlu0 %v4232, 32
    %v4244 = vpop.permute.xlu0 %4243
    %4245 = vrot.lane.b32.xlu0 %v4233, 32
    %v4246 = vpop.permute.xlu0 %4245
    %4247 = vrot.lane.b32.xlu0 %v4234, 32
    %v4248 = vpop.permute.xlu0 %4247
    %4249 = vrot.lane.b32.xlu0 %v4235, 32
    %v4250 = vpop.permute.xlu0 %4249
    %4251 = vrot.lane.b32.xlu0 %v4236, 32
    %v4252 = vpop.permute.xlu0 %4251
    %v4253 = vunpack.c.l.b16 %v3608
    %v4254 = vunpack.c.l.b16 %v3612
    %v4255 = vunpack.c.l.b16 %v3616
    %v4256 = vunpack.c.l.b16 %v3620
    %v4257 = vunpack.c.l.b16 %v3624
    %v4258 = vunpack.c.l.b16 %v3628
    %v4259 = vunpack.c.l.b16 %v3632
    %v4260 = vunpack.c.l.b16 %v3636
    %v4261 = vunpack.c.l.b16 %v3640
    %v4262 = vunpack.c.l.b16 %v3644
    %v4263 = vunpack.c.l.b16 %v3648
    %v4264 = vunpack.c.l.b16 %v3652
    %v4265 = vunpack.c.l.b16 %v3656
    %v4266 = vunpack.c.l.b16 %v3660
    %v4267 = vunpack.c.l.b16 %v3664
    %v4268 = vunpack.c.l.b16 %v3668
    %v4269 = vpack.c.b16 %v4254, %v4253
    %v4270 = vpack.c.b16 %v4256, %v4255
    %v4271 = vpack.c.b16 %v4258, %v4257
    %v4272 = vpack.c.b16 %v4260, %v4259
    %v4273 = vpack.c.b16 %v4262, %v4261
    %v4274 = vpack.c.b16 %v4264, %v4263
    %v4275 = vpack.c.b16 %v4266, %v4265
    %v4276 = vpack.c.b16 %v4268, %v4267
    %4277 = vrot.lane.b32.xlu0 %v4269, 40
    %v4278 = vpop.permute.xlu0 %4277
    %4279 = vrot.lane.b32.xlu0 %v4270, 40
    %v4280 = vpop.permute.xlu0 %4279
    %4281 = vrot.lane.b32.xlu0 %v4271, 40
    %v4282 = vpop.permute.xlu0 %4281
    %4283 = vrot.lane.b32.xlu0 %v4272, 40
    %v4284 = vpop.permute.xlu0 %4283
    %4285 = vrot.lane.b32.xlu0 %v4273, 40
    %v4286 = vpop.permute.xlu0 %4285
    %4287 = vrot.lane.b32.xlu0 %v4274, 40
    %v4288 = vpop.permute.xlu0 %4287
    %4289 = vrot.lane.b32.xlu0 %v4275, 40
    %v4290 = vpop.permute.xlu0 %4289
    %4291 = vrot.lane.b32.xlu0 %v4276, 40
    %v4292 = vpop.permute.xlu0 %4291
    %v4309 = vunpack.c.l.b16 %v3669
    %v4310 = vunpack.c.l.b16 %v3670
    %v4311 = vunpack.c.l.b16 %v3671
    %v4312 = vunpack.c.l.b16 %v3672
    %v4313 = vunpack.c.l.b16 %v3673
    %v4314 = vunpack.c.l.b16 %v3674
    %v4315 = vunpack.c.l.b16 %v3675
    %v4316 = vunpack.c.l.b16 %v3676
    %v4317 = vunpack.c.l.b16 %v3677
    %v4318 = vunpack.c.l.b16 %v3678
    %v4319 = vunpack.c.l.b16 %v3679
    %v4320 = vunpack.c.l.b16 %v3680
    %v4321 = vunpack.c.l.b16 %v3681
    %v4322 = vunpack.c.l.b16 %v3682
    %v4323 = vunpack.c.l.b16 %v3683
    %v4324 = vunpack.c.l.b16 %v3684
    %v4325 = vpack.c.b16 %v4310, %v4309
    %v4326 = vpack.c.b16 %v4312, %v4311
    %v4327 = vpack.c.b16 %v4314, %v4313
    %v4328 = vpack.c.b16 %v4316, %v4315
    %v4329 = vpack.c.b16 %v4318, %v4317
    %v4330 = vpack.c.b16 %v4320, %v4319
    %v4331 = vpack.c.b16 %v4322, %v4321
    %v4332 = vpack.c.b16 %v4324, %v4323
    %4333 = vrot.lane.b32.xlu0 %v4325, 48
    %v4334 = vpop.permute.xlu0 %4333
    %4335 = vrot.lane.b32.xlu0 %v4326, 48
    %v4336 = vpop.permute.xlu0 %4335
    %4337 = vrot.lane.b32.xlu0 %v4327, 48
    %v4338 = vpop.permute.xlu0 %4337
    %4339 = vrot.lane.b32.xlu0 %v4328, 48
    %v4340 = vpop.permute.xlu0 %4339
    %4341 = vrot.lane.b32.xlu0 %v4329, 48
    %v4342 = vpop.permute.xlu0 %4341
    %4343 = vrot.lane.b32.xlu0 %v4330, 48
    %v4344 = vpop.permute.xlu0 %4343
    %4345 = vrot.lane.b32.xlu0 %v4331, 48
    %v4346 = vpop.permute.xlu0 %4345
    %4347 = vrot.lane.b32.xlu0 %v4332, 48
    %v4348 = vpop.permute.xlu0 %4347
    %v4349 = vunpack.c.l.b16 %v3714
    %v4350 = vunpack.c.l.b16 %v3728
    %v4351 = vunpack.c.l.b16 %v3742
    %v4352 = vunpack.c.l.b16 %v3756
    %v4353 = vunpack.c.l.b16 %v3770
    %v4354 = vunpack.c.l.b16 %v3784
    %v4355 = vunpack.c.l.b16 %v3798
    %v4356 = vunpack.c.l.b16 %v3812
    %v4357 = vunpack.c.l.b16 %v3826
    %v4358 = vunpack.c.l.b16 %v3840
    %v4359 = vunpack.c.l.b16 %v3854
    %v4360 = vunpack.c.l.b16 %v3868
    %v4361 = vunpack.c.l.b16 %v3882
    %v4362 = vunpack.c.l.b16 %v3896
    %v4363 = vunpack.c.l.b16 %v3910
    %v4364 = vunpack.c.l.b16 %v3924
    %v4365 = vpack.c.b16 %v4350, %v4349
    %v4366 = vpack.c.b16 %v4352, %v4351
    %v4367 = vpack.c.b16 %v4354, %v4353
    %v4368 = vpack.c.b16 %v4356, %v4355
    %v4369 = vpack.c.b16 %v4358, %v4357
    %v4370 = vpack.c.b16 %v4360, %v4359
    %v4371 = vpack.c.b16 %v4362, %v4361
    %v4372 = vpack.c.b16 %v4364, %v4363
    %4373 = vrot.lane.b32.xlu0 %v4365, 56
    %v4374 = vpop.permute.xlu0 %4373
    %4375 = vrot.lane.b32.xlu0 %v4366, 56
    %v4376 = vpop.permute.xlu0 %4375
    %4377 = vrot.lane.b32.xlu0 %v4367, 56
    %v4378 = vpop.permute.xlu0 %4377
    %4379 = vrot.lane.b32.xlu0 %v4368, 56
    %v4380 = vpop.permute.xlu0 %4379
    %4381 = vrot.lane.b32.xlu0 %v4369, 56
    %v4382 = vpop.permute.xlu0 %4381
    %4383 = vrot.lane.b32.xlu0 %v4370, 56
    %v4384 = vpop.permute.xlu0 %4383
    %4385 = vrot.lane.b32.xlu0 %v4371, 56
    %v4386 = vpop.permute.xlu0 %4385
    %4387 = vrot.lane.b32.xlu0 %v4372, 56
    %v4388 = vpop.permute.xlu0 %4387
    %v4389 = vunpack.c.l.b16 %v3976
    %v4390 = vunpack.c.l.b16 %v3980
    %v4391 = vunpack.c.l.b16 %v3984
    %v4392 = vunpack.c.l.b16 %v3988
    %v4393 = vunpack.c.l.b16 %v3992
    %v4394 = vunpack.c.l.b16 %v3996
    %v4395 = vunpack.c.l.b16 %v4000
    %v4396 = vunpack.c.l.b16 %v4004
    %v4397 = vunpack.c.l.b16 %v4008
    %v4398 = vunpack.c.l.b16 %v4012
    %v4399 = vunpack.c.l.b16 %v4016
    %v4400 = vunpack.c.l.b16 %v4020
    %v4401 = vunpack.c.l.b16 %v4024
    %v4402 = vunpack.c.l.b16 %v4028
    %v4403 = vunpack.c.l.b16 %v4032
    %v4404 = vunpack.c.l.b16 %v4036
    %v4405 = vpack.c.b16 %v4390, %v4389
    %v4406 = vpack.c.b16 %v4392, %v4391
    %v4407 = vpack.c.b16 %v4394, %v4393
    %v4408 = vpack.c.b16 %v4396, %v4395
    %v4409 = vpack.c.b16 %v4398, %v4397
    %v4410 = vpack.c.b16 %v4400, %v4399
    %v4411 = vpack.c.b16 %v4402, %v4401
    %v4412 = vpack.c.b16 %v4404, %v4403
    %4413 = vrot.lane.b32.xlu0 %v4405, 64
    %v4414 = vpop.permute.xlu0 %4413
    %4415 = vrot.lane.b32.xlu0 %v4406, 64
    %v4416 = vpop.permute.xlu0 %4415
    %4417 = vrot.lane.b32.xlu0 %v4407, 64
    %v4418 = vpop.permute.xlu0 %4417
    %4419 = vrot.lane.b32.xlu0 %v4408, 64
    %v4420 = vpop.permute.xlu0 %4419
    %4421 = vrot.lane.b32.xlu0 %v4409, 64
    %v4422 = vpop.permute.xlu0 %4421
    %4423 = vrot.lane.b32.xlu0 %v4410, 64
    %v4424 = vpop.permute.xlu0 %4423
    %4425 = vrot.lane.b32.xlu0 %v4411, 64
    %v4426 = vpop.permute.xlu0 %4425
    %4427 = vrot.lane.b32.xlu0 %v4412, 64
    %v4428 = vpop.permute.xlu0 %4427
    %v4431 = vsel %vm2238, %v4069, %v4102
    %v4434 = vsel %vm2238, %v4070, %v4104
    %v4437 = vsel %vm2238, %v4071, %v4106
    %v4440 = vsel %vm2238, %v4072, %v4108
    %v4443 = vsel %vm2238, %v4073, %v4110
    %v4446 = vsel %vm2238, %v4074, %v4112
    %v4449 = vsel %vm2238, %v4075, %v4114
    %v4452 = vsel %vm2238, %v4076, %v4116
    %v4454 = vsel %vm2263, %v4431, %v4142
    %v4456 = vsel %vm2263, %v4434, %v4144
    %v4458 = vsel %vm2263, %v4437, %v4146
    %v4460 = vsel %vm2263, %v4440, %v4148
    %v4462 = vsel %vm2263, %v4443, %v4150
    %v4464 = vsel %vm2263, %v4446, %v4152
    %v4466 = vsel %vm2263, %v4449, %v4154
    %v4468 = vsel %vm2263, %v4452, %v4156
    %v4470 = vsel %vm2280, %v4454, %v4198
    %v4472 = vsel %vm2280, %v4456, %v4200
    %v4474 = vsel %vm2280, %v4458, %v4202
    %v4476 = vsel %vm2280, %v4460, %v4204
    %v4478 = vsel %vm2280, %v4462, %v4206
    %v4480 = vsel %vm2280, %v4464, %v4208
    %v4482 = vsel %vm2280, %v4466, %v4210
    %v4484 = vsel %vm2280, %v4468, %v4212
    %v4486 = vsel %vm2297, %v4470, %v4238
    %v4488 = vsel %vm2297, %v4472, %v4240
    %v4490 = vsel %vm2297, %v4474, %v4242
    %v4492 = vsel %vm2297, %v4476, %v4244
    %v4494 = vsel %vm2297, %v4478, %v4246
    %v4496 = vsel %vm2297, %v4480, %v4248
    %v4498 = vsel %vm2297, %v4482, %v4250
    %v4500 = vsel %vm2297, %v4484, %v4252
    %v4502 = vsel %vm2314, %v4486, %v4278
    %v4504 = vsel %vm2314, %v4488, %v4280
    %v4506 = vsel %vm2314, %v4490, %v4282
    %v4508 = vsel %vm2314, %v4492, %v4284
    %v4510 = vsel %vm2314, %v4494, %v4286
    %v4512 = vsel %vm2314, %v4496, %v4288
    %v4514 = vsel %vm2314, %v4498, %v4290
    %v4516 = vsel %vm2314, %v4500, %v4292
    %v4518 = vsel %vm2331, %v4502, %v4334
    %v4520 = vsel %vm2331, %v4504, %v4336
    %v4522 = vsel %vm2331, %v4506, %v4338
    %v4524 = vsel %vm2331, %v4508, %v4340
    %v4526 = vsel %vm2331, %v4510, %v4342
    %v4528 = vsel %vm2331, %v4512, %v4344
    %v4530 = vsel %vm2331, %v4514, %v4346
    %v4532 = vsel %vm2331, %v4516, %v4348
    %v4534 = vsel %vm2348, %v4518, %v4374
    %v4536 = vsel %vm2348, %v4520, %v4376
    %v4538 = vsel %vm2348, %v4522, %v4378
    %v4540 = vsel %vm2348, %v4524, %v4380
    %v4542 = vsel %vm2348, %v4526, %v4382
    %v4544 = vsel %vm2348, %v4528, %v4384
    %v4546 = vsel %vm2348, %v4530, %v4386
    %v4548 = vsel %vm2348, %v4532, %v4388
    %v4550 = vsel %vm2365, %v4534, %v4414
    %v4552 = vsel %vm2365, %v4536, %v4416
    %v4554 = vsel %vm2365, %v4538, %v4418
    %v4556 = vsel %vm2365, %v4540, %v4420
    %v4558 = vsel %vm2365, %v4542, %v4422
    %v4560 = vsel %vm2365, %v4544, %v4424
    %v4562 = vsel %vm2365, %v4546, %v4426
    %v4564 = vsel %vm2365, %v4548, %v4428
    %v4565 = vld [vmem:[%s4] sm:$0xf]
    %v4566 = vld [vmem:[%s4 + $0x4] sm:$0xf]
    %v4567 = vld [vmem:[%s4 + $0x8] sm:$0xf]
    %v4568 = vld [vmem:[%s4 + $0xc] sm:$0xf]
    %v4569 = vld [vmem:[%s4 + $0x10] sm:$0xf]
    %v4570 = vld [vmem:[%s4 + $0x14] sm:$0xf]
    %v4571 = vld [vmem:[%s4 + $0x18] sm:$0xf]
    %v4572 = vld [vmem:[%s4 + $0x1c] sm:$0xf]
    %v4573 = vld [vmem:[%s4 + $0x20] sm:$0xf]
    %v4583 = vunpack.c.l.b16 %v4565
    %v4584 = vunpack.c.l.b16 %v4566
    %v4585 = vunpack.c.l.b16 %v4567
    %v4586 = vunpack.c.l.b16 %v4568
    %v4587 = vunpack.c.l.b16 %v4569
    %v4588 = vunpack.c.l.b16 %v4570
    %v4589 = vunpack.c.l.b16 %v4571
    %v4590 = vunpack.c.l.b16 %v4572
    %v4591 = vunpack.c.l.b16 %v4573
    %v4592 = vpack.c.b16 %v4584, %v4583
    %v4593 = vpack.c.b16 %v4586, %v4585
    %v4594 = vpack.c.b16 %v4588, %v4587
    %v4595 = vpack.c.b16 %v4590, %v4589
    %v4596 = vpack.c.b16 %v4591, %v4591
    %v4601 = vsel %vm2418, %v4550, 0
    %v4603 = vsel %vm2418, %v4552, 0
    %v4605 = vsel %vm2418, %v4554, 0
    %v4607 = vsel %vm2418, %v4556, 0
    %v4609 = vsel %vm2418, %v4558, 0
    %v4611 = vsel %vm2418, %v4560, 0
    %v4613 = vsel %vm2418, %v4562, 0
    %v4615 = vsel %vm2418, %v4564, 0
    %v4618 = vsel %vm2435, %v4596, 0
    %4620 = vmatpush.bf16.msra.mxu0 0
    %4621 = vmatpush.bf16.msra.mxu0 0
    %4622 = vmatpush.bf16.msra.mxu0 0
    %4623 = vmatpush.bf16.msra.mxu0 %v4618
    %4624 = vmatpush.bf16.msra.mxu0 %v4595
    %4625 = vmatpush.bf16.msra.mxu0 %v4594
    %4626 = vmatpush.bf16.msra.mxu0 %v4593
    %4627 = vmatpush.bf16.msra.mxu0 %v4592
    %4628 = vmatmul.bf16.gmra.mxu0 %v4601
    %v4629 = vpop.f32.mrf.mxu0
    %v4630 = vadd.f32 0.0, %v4629
    %v4631 = vpop.f32.mrf.mxu0
    %v4632 = vadd.f32 0.0, %v4631
    %4633 = vmatmul.bf16.gmra.mxu0 %v4603
    %v4634 = vpop.f32.mrf.mxu0
    %v4635 = vadd.f32 0.0, %v4634
    %v4636 = vpop.f32.mrf.mxu0
    %v4637 = vadd.f32 0.0, %v4636
    %4638 = vmatmul.bf16.gmra.mxu0 %v4605
    %v4639 = vpop.f32.mrf.mxu0
    %v4640 = vadd.f32 0.0, %v4639
    %v4641 = vpop.f32.mrf.mxu0
    %v4642 = vadd.f32 0.0, %v4641
    %4643 = vmatmul.bf16.gmra.mxu0 %v4607
    %v4644 = vpop.f32.mrf.mxu0
    %v4645 = vadd.f32 0.0, %v4644
    %v4646 = vpop.f32.mrf.mxu0
    %v4647 = vadd.f32 0.0, %v4646
    %4648 = vmatmul.bf16.gmra.mxu0 %v4609
    %v4649 = vpop.f32.mrf.mxu0
    %v4650 = vadd.f32 0.0, %v4649
    %v4651 = vpop.f32.mrf.mxu0
    %v4652 = vadd.f32 0.0, %v4651
    %4653 = vmatmul.bf16.gmra.mxu0 %v4611
    %v4654 = vpop.f32.mrf.mxu0
    %v4655 = vadd.f32 0.0, %v4654
    %v4656 = vpop.f32.mrf.mxu0
    %v4657 = vadd.f32 0.0, %v4656
    %4658 = vmatmul.bf16.gmra.mxu0 %v4613
    %v4659 = vpop.f32.mrf.mxu0
    %v4660 = vadd.f32 0.0, %v4659
    %v4661 = vpop.f32.mrf.mxu0
    %v4662 = vadd.f32 0.0, %v4661
    %4663 = vmatmul.bf16.gmra.mxu0 %v4615
    %v4664 = vpop.f32.mrf.mxu0
    %v4665 = vadd.f32 0.0, %v4664
    %v4666 = vpop.f32.mrf.mxu0
    %v4667 = vadd.f32 0.0, %v4666
    %4668 = vdwg.mxu0
    %v4669 = vsel %vm2238, %v4630, 0.0
    %v4670 = vsel %vm2238, %v4632, 0.0
    %v4671 = vadd.f32 %v4669, %v4670
    %v4672 = vsel %vm2238, %v4635, 0.0
    %v4673 = vadd.f32 %v4671, %v4672
    %v4674 = vsel %vm2238, %v4637, 0.0
    %v4675 = vadd.f32 %v4673, %v4674
    %v4676 = vsel %vm2238, %v4640, 0.0
    %v4677 = vadd.f32 %v4675, %v4676
    %v4678 = vsel %vm2238, %v4642, 0.0
    %v4679 = vadd.f32 %v4677, %v4678
    %v4680 = vsel %vm2238, %v4645, 0.0
    %v4681 = vadd.f32 %v4679, %v4680
    %v4682 = vsel %vm2238, %v4647, 0.0
    %v4683 = vadd.f32 %v4681, %v4682
    %v4684 = vsel %vm2238, %v4650, 0.0
    %v4685 = vadd.f32 %v4683, %v4684
    %v4686 = vsel %vm2238, %v4652, 0.0
    %v4687 = vadd.f32 %v4685, %v4686
    %v4688 = vsel %vm2238, %v4655, 0.0
    %v4689 = vadd.f32 %v4687, %v4688
    %v4690 = vsel %vm2238, %v4657, 0.0
    %v4691 = vadd.f32 %v4689, %v4690
    %v4692 = vsel %vm2238, %v4660, 0.0
    %v4693 = vadd.f32 %v4691, %v4692
    %v4694 = vsel %vm2238, %v4662, 0.0
    %v4695 = vadd.f32 %v4693, %v4694
    %v4696 = vsel %vm2238, %v4665, 0.0
    %v4697 = vadd.f32 %v4695, %v4696
    %v4698 = vsel %vm2238, %v4667, 0.0
    %v4699 = vadd.f32 %v4697, %v4698
    %v4700 = vrot.slane %v4699, 4
    %v4701 = vadd.f32 %v4699, %v4700
    %v4702 = vrot.slane %v4701, 2
    %v4703 = vadd.f32 %v4701, %v4702
    %v4704 = vrot.slane %v4703, 1
    %v4705 = vadd.f32 %v4703, %v4704
    %v4706 = vmul.f32 %v4705, 0.0078125
    %v4707 = vsub.f32 %v4630, %v4706
    %v4708 = vsub.f32 %v4632, %v4706
    %v4709 = vsub.f32 %v4635, %v4706
    %v4710 = vsub.f32 %v4637, %v4706
    %v4711 = vsub.f32 %v4640, %v4706
    %v4712 = vsub.f32 %v4642, %v4706
    %v4713 = vsub.f32 %v4645, %v4706
    %v4714 = vsub.f32 %v4647, %v4706
    %v4715 = vsub.f32 %v4650, %v4706
    %v4716 = vsub.f32 %v4652, %v4706
    %v4717 = vsub.f32 %v4655, %v4706
    %v4718 = vsub.f32 %v4657, %v4706
    %v4719 = vsub.f32 %v4660, %v4706
    %v4720 = vsub.f32 %v4662, %v4706
    %v4721 = vsub.f32 %v4665, %v4706
    %v4722 = vsub.f32 %v4667, %v4706
    %v4723 = vmul.f32 %v4707, %v4707
    %v4724 = vmul.f32 %v4708, %v4708
    %v4725 = vmul.f32 %v4709, %v4709
    %v4726 = vmul.f32 %v4710, %v4710
    %v4727 = vmul.f32 %v4711, %v4711
    %v4728 = vmul.f32 %v4712, %v4712
    %v4729 = vmul.f32 %v4713, %v4713
    %v4730 = vmul.f32 %v4714, %v4714
    %v4731 = vmul.f32 %v4715, %v4715
    %v4732 = vmul.f32 %v4716, %v4716
    %v4733 = vmul.f32 %v4717, %v4717
    %v4734 = vmul.f32 %v4718, %v4718
    %v4735 = vmul.f32 %v4719, %v4719
    %v4736 = vmul.f32 %v4720, %v4720
    %v4737 = vmul.f32 %v4721, %v4721
    %v4738 = vmul.f32 %v4722, %v4722
    %v4739 = vsel %vm2238, %v4723, 0.0
    %v4740 = vsel %vm2238, %v4724, 0.0
    %v4741 = vadd.f32 %v4739, %v4740
    %v4742 = vsel %vm2238, %v4725, 0.0
    %v4743 = vadd.f32 %v4741, %v4742
    %v4744 = vsel %vm2238, %v4726, 0.0
    %v4745 = vadd.f32 %v4743, %v4744
    %v4746 = vsel %vm2238, %v4727, 0.0
    %v4747 = vadd.f32 %v4745, %v4746
    %v4748 = vsel %vm2238, %v4728, 0.0
    %v4749 = vadd.f32 %v4747, %v4748
    %v4750 = vsel %vm2238, %v4729, 0.0
    %v4751 = vadd.f32 %v4749, %v4750
    %v4752 = vsel %vm2238, %v4730, 0.0
    %v4753 = vadd.f32 %v4751, %v4752
    %v4754 = vsel %vm2238, %v4731, 0.0
    %v4755 = vadd.f32 %v4753, %v4754
    %v4756 = vsel %vm2238, %v4732, 0.0
    %v4757 = vadd.f32 %v4755, %v4756
    %v4758 = vsel %vm2238, %v4733, 0.0
    %v4759 = vadd.f32 %v4757, %v4758
    %v4760 = vsel %vm2238, %v4734, 0.0
    %v4761 = vadd.f32 %v4759, %v4760
    %v4762 = vsel %vm2238, %v4735, 0.0
    %v4763 = vadd.f32 %v4761, %v4762
    %v4764 = vsel %vm2238, %v4736, 0.0
    %v4765 = vadd.f32 %v4763, %v4764
    %v4766 = vsel %vm2238, %v4737, 0.0
    %v4767 = vadd.f32 %v4765, %v4766
    %v4768 = vsel %vm2238, %v4738, 0.0
    %v4769 = vadd.f32 %v4767, %v4768
    %v4770 = vrot.slane %v4769, 4
    %v4771 = vadd.f32 %v4769, %v4770
    %v4772 = vrot.slane %v4771, 2
    %v4773 = vadd.f32 %v4771, %v4772
    %v4774 = vrot.slane %v4773, 1
    %v4775 = vadd.f32 %v4773, %v4774
    %v4776 = vmul.f32 %v4775, 0.0078125
    %v4777 = vadd.f32 %v4776, 1e-05
    %v4778 = vrsqrt.pop %v4777
    %v4779 = vmul.f32 %v4778, %v4777
    %v4780 = vmul.f32 %v4779, %v4778
    %v4781 = vmul.f32 0.5, %v4780
    %v4782 = vsub.f32 1.5, %v4781
    %v4783 = vmul.f32 %v4778, %v4782
    %vm4784 = vweird.f32 %v4777
    %vm4785 = vweird.f32 %v4778
    %vm4786 = vmor %vm4784, %vm4785
    %v4787 = vsel %vm4786, %v4778, %v4783
    %v4788 = vld [vmem:[%s5] sm:$0x1]
    %v4789 = vmul.f32 %v4787, %v4788
    %v4790 = vperm.slane %v4789, 0
    %v4791 = vmul.f32 %v4707, %v4790
    %v4792 = vmul.f32 %v4708, %v4790
    %v4793 = vmul.f32 %v4709, %v4790
    %v4794 = vmul.f32 %v4710, %v4790
    %v4795 = vmul.f32 %v4711, %v4790
    %v4796 = vmul.f32 %v4712, %v4790
    %v4797 = vmul.f32 %v4713, %v4790
    %v4798 = vmul.f32 %v4714, %v4790
    %v4799 = vmul.f32 %v4715, %v4790
    %v4800 = vmul.f32 %v4716, %v4790
    %v4801 = vmul.f32 %v4717, %v4790
    %v4802 = vmul.f32 %v4718, %v4790
    %v4803 = vmul.f32 %v4719, %v4790
    %v4804 = vmul.f32 %v4720, %v4790
    %v4805 = vmul.f32 %v4721, %v4790
    %v4806 = vmul.f32 %v4722, %v4790
    %v4807 = vld [vmem:[%s6] sm:$0x1]
    %v4809 = vperm.slane %v4807, 0
    %v4811 = vadd.f32 %v4791, %v4809
    %v4812 = vadd.f32 %v4792, %v4809
    %v4813 = vadd.f32 %v4793, %v4809
    %v4814 = vadd.f32 %v4794, %v4809
    %v4815 = vadd.f32 %v4795, %v4809
    %v4816 = vadd.f32 %v4796, %v4809
    %v4817 = vadd.f32 %v4797, %v4809
    %v4818 = vadd.f32 %v4798, %v4809
    %v4819 = vadd.f32 %v4799, %v4809
    %v4820 = vadd.f32 %v4800, %v4809
    %v4821 = vadd.f32 %v4801, %v4809
    %v4822 = vadd.f32 %v4802, %v4809
    %v4823 = vadd.f32 %v4803, %v4809
    %v4824 = vadd.f32 %v4804, %v4809
    %v4825 = vadd.f32 %v4805, %v4809
    %v4826 = vadd.f32 %v4806, %v4809
    %v4827 = vmax.f32 %v4811, 0.0
    %v4828 = vmax.f32 %v4812, 0.0
    %v4829 = vmax.f32 %v4813, 0.0
    %v4830 = vmax.f32 %v4814, 0.0
    %v4831 = vmax.f32 %v4815, 0.0
    %v4832 = vmax.f32 %v4816, 0.0
    %v4833 = vmax.f32 %v4817, 0.0
    %v4834 = vmax.f32 %v4818, 0.0
    %v4835 = vmax.f32 %v4819, 0.0
    %v4836 = vmax.f32 %v4820, 0.0
    %v4837 = vmax.f32 %v4821, 0.0
    %v4838 = vmax.f32 %v4822, 0.0
    %v4839 = vmax.f32 %v4823, 0.0
    %v4840 = vmax.f32 %v4824, 0.0
    %v4841 = vmax.f32 %v4825, 0.0
    %v4842 = vmax.f32 %v4826, 0.0
    %4843 = vxpose.xlu0.b32.start [1/16] %v4827, 128
    %4844 = vxpose.xlu0.b32.cont [2/16] %v4828, 128
    %4845 = vxpose.xlu0.b32.cont [3/16] %v4829, 128
    %4846 = vxpose.xlu0.b32.cont [4/16] %v4830, 128
    %4847 = vxpose.xlu0.b32.cont [5/16] %v4831, 128
    %4848 = vxpose.xlu0.b32.cont [6/16] %v4832, 128
    %4849 = vxpose.xlu0.b32.cont [7/16] %v4833, 128
    %4850 = vxpose.xlu0.b32.cont [8/16] %v4834, 128
    %4851 = vxpose.xlu0.b32.cont [9/16] %v4835, 128
    %4852 = vxpose.xlu0.b32.cont [10/16] %v4836, 128
    %4853 = vxpose.xlu0.b32.cont [11/16] %v4837, 128
    %4854 = vxpose.xlu0.b32.cont [12/16] %v4838, 128
    %4855 = vxpose.xlu0.b32.cont [13/16] %v4839, 128
    %4856 = vxpose.xlu0.b32.cont [14/16] %v4840, 128
    %4857 = vxpose.xlu0.b32.cont [15/16] %v4841, 128
    %4858 = vxpose.xlu0.b32.end [16/16] %v4842, 128
    %v4859 = vpop.trf.xlu0
    %v4860 = vpop.trf.xlu0
    %v4861 = vpop.trf.xlu0
    %v4862 = vpop.trf.xlu0
    %v4863 = vpop.trf.xlu0
    %v4864 = vpop.trf.xlu0
    %v4865 = vpop.trf.xlu0
    %v4866 = vpop.trf.xlu0
    %v4867 = vpop.trf.xlu0
    %v4868 = vpop.trf.xlu0
    %v4869 = vpop.trf.xlu0
    %v4870 = vpop.trf.xlu0
    %v4871 = vpop.trf.xlu0
    %v4872 = vpop.trf.xlu0
    %v4873 = vpop.trf.xlu0
    %v4874 = vpop.trf.xlu0
    %4875 = vst [vmem:[#allocation6] sm:$0xff] %v4859
    // Predicated region
    $region34: #{tpu_custom_call.1} parent=1 // pred_check
      _
    $region35: #{tpu_custom_call.1} parent=1 // pred_check_branch
      %4877 = sbr.rel (0) target = $region37
    $region36: #{tpu_custom_call.1} parent=1 // pred_region
      %4879 = vsyncadd [#allocation5], 0
      %s4881 = sshll.u32 [#allocation6], 4
      %s4882 = int_to_ptr.vmem [resolvable:$true] %s4881
      %s4883 = sshll.u32 %s7, 4
      %s4884 = int_to_ptr.hbm [resolvable:$true] %s4883
      %4886 = dma.vmem_to_hbm [thread:$0]  %s4882, 128, %s4884, [#allocation5]
    $region37: #{tpu_custom_call.1} parent=1 // pred_fallthru
      _
    // Predicated region
    $region38: #{tpu_custom_call.1} parent=1 // pred_check
      _
    $region39: #{tpu_custom_call.1} parent=1 // pred_check_branch
      %4888 = sbr.rel (0) target = $region41
    $region40: #{tpu_custom_call.1} parent=1 // pred_region
      %4890 = dma.done [#allocation5], 128
    $region41: #{tpu_custom_call.1} parent=1 // pred_fallthru
      _
    %4891 = vsyncpa [#allocation4], 1
    %4892 = vsyncpa [#allocation5], 1

</llo_original>
